<compile_context>
chip_gen: v7x
topology: tpu7x:2x2x1
jax: 0.10.0
libtpu: 0.0.40
codegen_flags: <defaults>
</compile_context>

<pallas_src>
import jax
import jax.numpy as jnp
import numpy as np
from jax.experimental import pallas as pl
from jax.experimental.pallas import tpu as pltpu

LANE = 128           # lane width of one row half / one conv output row
PACKED = 2 * LANE    # even/odd image-row pair packed into one 256-lane row
TB = 8               # images per grid step (multiple of 8 keeps every slice tile-aligned)
KH = 5               # conv kernel size (both convs)
HP1 = 14             # pooled output rows of conv1 (= conv2 input rows)
HP2 = 5              # pooled output rows of conv2
H2 = 16              # packed row pairs of the 32-row input


# --------------------------------------------------------------------------- #
# Single fused kernel: conv1+pool -> conv2+pool -> fc1 -> fc2 -> fc3
# --------------------------------------------------------------------------- #
def _net_fused_kernel(x_ref, band1_ref, bias1_ref, band2_ref, bias2_ref,
                      w1_ref, b1_ref, w2_ref, b2_ref, w3_ref, b3_ref, o_ref):
    """One batch tile of TB images through the whole network.

    x_ref : (H2*TB, 256) bf16  -- row = r*TB + b ; lanes [0,128) = image row 2r,
                                  [128,256) = image row 2r+1, features w*Cin+ci.
    band* : (KH, 128, 256) bf16 -- banded conv weights, N = pw*128 + wp*Cout + co.
    bias* : (1, 128) f32        -- conv bias tiled over pooled output columns.
    w1    : (HP2, 128, 128) bf16 (flatten permutation folded in); w2, w3: (128,128) bf16.
    b1..b3: (1, 128) f32.
    o_ref : (TB, 128) f32       -- logits in lanes [0,10).
    """

    def conv_stage(slab, band_ref, bias_ref, m):
        """Banded conv + bias + ReLU + 2x2 max-pool.  Returns (m, 128) f32."""
        pooled = None
        for ph in range(2):                      # row parity of the pre-pool output
            acc = jnp.zeros((m, PACKED), jnp.float32)
            for i in range(KH):                  # conv kernel row
                acc = acc + jnp.dot(slab((i + ph) // 2, (i + ph) % 2), band_ref[i],
                                    preferred_element_type=jnp.float32)
            # column-parity max: the two pw halves are packed side by side along N
            m_ph = jnp.maximum(acc[:, :LANE], acc[:, LANE:])
            # running max over row parity -> at most 1.5 accumulators live
            pooled = m_ph if pooled is None else jnp.maximum(pooled, m_ph)
        # bias + ReLU commute with the max (per-channel constant bias, monotone ReLU)
        return jnp.maximum(pooled + bias_ref[...], 0.0)

    # ---- conv1 (+ReLU +pool): M = HP1*TB = 112 ------------------------------
    def slab1(off, half):
        # contiguous, tile-aligned sub-block of the batch-minor packed input
        return x_ref[off * TB:(off + HP1) * TB, half * LANE:(half + 1) * LANE]

    y1 = conv_stage(slab1, band1_ref, bias1_ref, HP1 * TB)      # (14*TB, 128) f32
    # per pooled-row chunks (each exactly one f32 vreg for TB=8)
    rows = [y1[r * TB:(r + 1) * TB, :] for r in range(HP1)]

    # ---- conv2 (+ReLU +pool): M = HP2*TB = 40 -------------------------------
    def slab2(off, half):
        # conv2 packed-input row (off+p, half) = conv1 pooled row 2*(off+p)+half
        sel = [rows[2 * off + half + 2 * p] for p in range(HP2)]
        return jnp.concatenate(sel, axis=0).astype(jnp.bfloat16)

    y2 = conv_stage(slab2, band2_ref, bias2_ref, HP2 * TB)      # (5*TB, 128) f32

    # ---- fc1 + ReLU + fc2 + ReLU + fc3 (flatten folded into w1) -------------
    h = jnp.zeros((TB, LANE), jnp.float32)
    for r in range(HP2):
        h = h + jnp.dot(y2[r * TB:(r + 1) * TB, :].astype(jnp.bfloat16), w1_ref[r],
                        preferred_element_type=jnp.float32)
    h = jnp.maximum(h + b1_ref[...], 0.0).astype(jnp.bfloat16)
    h = jnp.dot(h, w2_ref[...], preferred_element_type=jnp.float32)
    h = jnp.maximum(h + b2_ref[...], 0.0).astype(jnp.bfloat16)
    y = jnp.dot(h, w3_ref[...], preferred_element_type=jnp.float32)
    o_ref[...] = (y + b3_ref[...]).astype(o_ref.dtype)


# --------------------------------------------------------------------------- #
# Forward pass (mirrors Net.forward)
# --------------------------------------------------------------------------- #
def net_forward(kparams, x_nchw):
    B = x_nchw.shape[0]
    nb = -(-B // TB)          # >=2 grid steps (both v7x TensorCores) whenever B > TB
    Bp = nb * TB

    # Raw-input glue (only non-Pallas ops): NCHW -> packed row-pair, batch-minor layout.
    x = x_nchw
    if Bp != B:
        x = jnp.pad(x, ((0, Bp - B), (0, 0), (0, 0), (0, 0)))
    x = jnp.transpose(x, (0, 2, 3, 1)).reshape(Bp, 32, 32 * 3)          # NHWC row features
    x = jnp.pad(x.astype(jnp.bfloat16), ((0, 0), (0, 0), (0, LANE - 96)))
    x = x.reshape(Bp, H2, PACKED)                                       # row pairs -> 256 lanes
    x = x.reshape(nb, TB, H2, PACKED).transpose(0, 2, 1, 3)             # batch-minor per row
    x = x.reshape(nb, H2 * TB, PACKED)

    band1, bias1 = kparams["conv1"]
    band2, bias2 = kparams["conv2"]
    w1, b1, w2, b2, w3, b3 = kparams["fc"]

    out = pl.pallas_call(
        _net_fused_kernel,
        out_shape=jax.ShapeDtypeStruct((Bp, LANE), jnp.float32),
        grid=(nb,),
        in_specs=[
            pl.BlockSpec((None, H2 * TB, PACKED), lambda b: (b, 0, 0)),
            pl.BlockSpec(band1.shape, lambda b: (0, 0, 0)),
            pl.BlockSpec(bias1.shape, lambda b: (0, 0)),
            pl.BlockSpec(band2.shape, lambda b: (0, 0, 0)),
            pl.BlockSpec(bias2.shape, lambda b: (0, 0)),
            pl.BlockSpec(w1.shape, lambda b: (0, 0, 0)),
            pl.BlockSpec(b1.shape, lambda b: (0, 0)),
            pl.BlockSpec(w2.shape, lambda b: (0, 0)),
            pl.BlockSpec(b2.shape, lambda b: (0, 0)),
            pl.BlockSpec(w3.shape, lambda b: (0, 0)),
            pl.BlockSpec(b3.shape, lambda b: (0, 0)),
        ],
        out_specs=pl.BlockSpec((TB, LANE), lambda b: (b, 0)),
        compiler_params=pltpu.CompilerParams(
            dimension_semantics=("parallel",),       # megacore-shards batch tiles (v7x)
            vmem_limit_bytes=32 * 1024 * 1024),
    )(x, band1, bias1, band2, bias2, w1, b1, w2, b2, w3, b3)
    return out[:B, :10]


# --------------------------------------------------------------------------- #
# One-time parameter preparation (PyTorch layouts -> kernel-ready layouts)
# --------------------------------------------------------------------------- #
def _prep_conv(conv_params, W):
    wt, b = conv_params                                # (Cout, Cin, kh, kw), (Cout,)
    wt = np.asarray(wt, np.float32)
    b = np.asarray(b, np.float32)
    Cout, Cin, kh, kw = wt.shape
    Wp = (W - kw + 1) // 2
    assert kh == kw == KH and W * Cin <= LANE and Wp * Cout <= LANE
    wt_perm = np.transpose(wt, (2, 3, 1, 0))           # (kh, kw, Cin, Cout)
    # band[i, win*Cin+ci, pw*128 + wp*Cout+co] = wt[co, ci, i, win - (2wp+pw)]
    band = np.zeros((kh, LANE, 2, LANE), np.float32)
    for i in range(kh):
        for pw in range(2):
            for wp in range(Wp):
                w0 = 2 * wp + pw
                for j in range(kw):
                    r = (w0 + j) * Cin
                    band[i, r:r + Cin, pw, wp * Cout:(wp + 1) * Cout] = wt_perm[i, j]
    band = band.reshape(kh, LANE, PACKED)
    bias = np.zeros((1, LANE), np.float32)
    bias[0, :Wp * Cout] = np.tile(b, Wp)
    return jnp.asarray(band, jnp.bfloat16), jnp.asarray(bias, jnp.float32)


def _prep_fc(fc1, fc2, fc3):
    w1, b1 = (np.asarray(a, np.float32) for a in fc1)
    w2, b2 = (np.asarray(a, np.float32) for a in fc2)
    w3, b3 = (np.asarray(a, np.float32) for a in fc3)
    # conv2 output row-group h has lanes q = w*16 + c (q < 80); PyTorch's view(-1, 400)
    # expects feature index c*25 + h*5 + w.  Fold permutation + transpose + padding once.
    w1p = np.zeros((HP2, LANE, LANE), np.float32)
    for h in range(HP2):
        for q in range(5 * 16):
            w_idx, c_idx = q // 16, q % 16
            w1p[h, q, :120] = w1[:, c_idx * 25 + h * 5 + w_idx]
    b1p = np.zeros((1, LANE), np.float32); b1p[0, :120] = b1
    w2p = np.zeros((LANE, LANE), np.float32); w2p[:120, :84] = w2.T
    b2p = np.zeros((1, LANE), np.float32); b2p[0, :84] = b2
    w3p = np.zeros((LANE, LANE), np.float32); w3p[:84, :10] = w3.T
    b3p = np.zeros((1, LANE), np.float32); b3p[0, :10] = b3
    return (jnp.asarray(w1p, jnp.bfloat16), jnp.asarray(b1p),
            jnp.asarray(w2p, jnp.bfloat16), jnp.asarray(b2p),
            jnp.asarray(w3p, jnp.bfloat16), jnp.asarray(b3p))


def prepare_params(params):
    return {
        "conv1": _prep_conv(params["conv1"], W=32),
        "conv2": _prep_conv(params["conv2"], W=14),
        "fc": _prep_fc(params["fc1"], params["fc2"], params["fc3"]),
    }


# --------------------------------------------------------------------------- #
# Parameters (deterministic, PyTorch-default-style uniform init, PyTorch layout)
# --------------------------------------------------------------------------- #
def init_params(key):
    def conv_init(k, cout, cin, ksz):
        kw_, kb_ = jax.random.split(k)
        bound = 1.0 / (cin * ksz * ksz) ** 0.5
        w = jax.random.uniform(kw_, (cout, cin, ksz, ksz), jnp.float32, -bound, bound)
        b = jax.random.uniform(kb_, (cout,), jnp.float32, -bound, bound)
        return w, b

    def lin_init(k, fin, fout):
        kw_, kb_ = jax.random.split(k)
        bound = 1.0 / fin ** 0.5
        w = jax.random.uniform(kw_, (fout, fin), jnp.float32, -bound, bound)
        b = jax.random.uniform(kb_, (fout,), jnp.float32, -bound, bound)
        return w, b

    k = jax.random.split(key, 5)
    return {
        "conv1": conv_init(k[0], 6, 3, 5),
        "conv2": conv_init(k[1], 16, 6, 5),
        "fc1": lin_init(k[2], 16 * 5 * 5, 120),
        "fc2": lin_init(k[3], 120, 84),
        "fc3": lin_init(k[4], 84, 10),
    }


# --------------------------------------------------------------------------- #
# Pure-JAX f32 reference of Net.forward (validation only)
# --------------------------------------------------------------------------- #
def reference_forward(params, x):
    def conv(h, w, b):
        y = jax.lax.conv_general_dilated(
            h, w, window_strides=(1, 1), padding="VALID",
            dimension_numbers=("NCHW", "OIHW", "NCHW"))
        return jax.nn.relu(y + b[None, :, None, None])

    def pool(h):
        B, C, H, W = h.shape
        return h.reshape(B, C, H // 2, 2, W // 2, 2).max(axis=(3, 5))

    y = pool(conv(x, *params["conv1"]))
    y = pool(conv(y, *params["conv2"]))
    y = y.reshape(y.shape[0], 16 * 5 * 5)
    w, b = params["fc1"]; y = jax.nn.relu(y @ w.T + b)
    w, b = params["fc2"]; y = jax.nn.relu(y @ w.T + b)
    w, b = params["fc3"]; y = y @ w.T + b
    return y


if __name__ == "__main__":
    key = jax.random.PRNGKey(0)
    pkey, xkey = jax.random.split(key)
    params = init_params(pkey)          # PyTorch-layout parameters
    kparams = prepare_params(params)    # one-time conversion to kernel layout

    # CIFAR-10-shaped input (the view(-1, 16*5*5) requires 32x32 spatial).
    x = jax.random.normal(xkey, (2, 3, 32, 32), jnp.float32)

    out = jax.jit(net_forward)(kparams, x)
    out = jax.block_until_ready(out)

    assert out.shape == (2, 10) and out.dtype == jnp.float32
    assert bool(jnp.all(jnp.isfinite(out)))

    # Numerical check against a pure-JAX f32 reference of the PyTorch forward
    # (bf16 matmul operands => small, bounded deviation).
    ref = jax.jit(reference_forward)(params, x)
    err = float(jnp.max(jnp.abs(out - ref)))
    assert err < 0.1, f"kernel deviates from reference (max abs err {err})"
    print("KERNEL_OK")
</pallas_src>

<mosaic_0001>
module attributes {stable_mosaic.version = 11 : i64} {
  func.func @_net_fused_kernel(%arg0: i32, %arg1: memref<1x128x256xbf16, #tpu.memory_space<vmem>>, %arg2: memref<5x128x256xbf16, #tpu.memory_space<vmem>>, %arg3: memref<1x128xf32, #tpu.memory_space<vmem>>, %arg4: memref<5x128x256xbf16, #tpu.memory_space<vmem>>, %arg5: memref<1x128xf32, #tpu.memory_space<vmem>>, %arg6: memref<5x128x128xbf16, #tpu.memory_space<vmem>>, %arg7: memref<1x128xf32, #tpu.memory_space<vmem>>, %arg8: memref<128x128xbf16, #tpu.memory_space<vmem>>, %arg9: memref<1x128xf32, #tpu.memory_space<vmem>>, %arg10: memref<128x128xbf16, #tpu.memory_space<vmem>>, %arg11: memref<1x128xf32, #tpu.memory_space<vmem>>, %arg12: memref<8x128xf32, #tpu.memory_space<vmem>>) attributes {dimension_semantics = [#tpu.dimension_semantics<parallel>], iteration_bounds = array<i64: 1>, scalar_prefetch = 0 : i64, scratch_operands = 0 : i64, tpu.core_type = #tpu.core_type<tc>, window_params = [{transform_indices = @transform_0, window_bounds = array<i64: 1, 128, 256>}, {pipeline_mode = #tpu.pipeline_mode<synchronous>, transform_indices = @transform_1, window_bounds = array<i64: 5, 128, 256>}, {pipeline_mode = #tpu.pipeline_mode<synchronous>, transform_indices = @transform_2, window_bounds = array<i64: 1, 128>}, {pipeline_mode = #tpu.pipeline_mode<synchronous>, transform_indices = @transform_3, window_bounds = array<i64: 5, 128, 256>}, {pipeline_mode = #tpu.pipeline_mode<synchronous>, transform_indices = @transform_4, window_bounds = array<i64: 1, 128>}, {pipeline_mode = #tpu.pipeline_mode<synchronous>, transform_indices = @transform_5, window_bounds = array<i64: 5, 128, 128>}, {pipeline_mode = #tpu.pipeline_mode<synchronous>, transform_indices = @transform_6, window_bounds = array<i64: 1, 128>}, {pipeline_mode = #tpu.pipeline_mode<synchronous>, transform_indices = @transform_7, window_bounds = array<i64: 128, 128>}, {pipeline_mode = #tpu.pipeline_mode<synchronous>, transform_indices = @transform_8, window_bounds = array<i64: 1, 128>}, {pipeline_mode = #tpu.pipeline_mode<synchronous>, transform_indices = @transform_9, window_bounds = array<i64: 128, 128>}, {pipeline_mode = #tpu.pipeline_mode<synchronous>, transform_indices = @transform_10, window_bounds = array<i64: 1, 128>}, {transform_indices = @transform_11, window_bounds = array<i64: 8, 128>}]} {
    %cst = arith.constant 0.000000e+00 : f32
    %0 = vector.broadcast %cst : f32 to vector<112x256xf32>
    %c0 = arith.constant 0 : index
    %c0_0 = arith.constant 0 : index
    %c0_1 = arith.constant 0 : index
    %1 = vector.load %arg1[%c0, %c0_0, %c0_1] : memref<1x128x256xbf16, #tpu.memory_space<vmem>>, vector<1x112x128xbf16>
    %2 = vector.shape_cast %1 : vector<1x112x128xbf16> to vector<112x128xbf16>
    %c0_2 = arith.constant 0 : index
    %c0_3 = arith.constant 0 : index
    %c0_4 = arith.constant 0 : index
    %3 = vector.load %arg2[%c0_2, %c0_3, %c0_4] : memref<5x128x256xbf16, #tpu.memory_space<vmem>>, vector<1x128x256xbf16>
    %4 = vector.shape_cast %3 : vector<1x128x256xbf16> to vector<128x256xbf16>
    %cst_5 = arith.constant dense<0.000000e+00> : vector<112x256xf32>
    %5 = tpu.matmul %2, %4, %cst_5 {dimension_numbers = #tpu.dot_dimension_numbers<[1], [0], [0], [1], [0, 0, 1, 1], [], []>} : vector<112x128xbf16>, vector<128x256xbf16>, vector<112x256xf32> -> vector<112x256xf32>
    %6 = arith.addf %0, %5 : vector<112x256xf32>
    %c0_6 = arith.constant 0 : index
    %c0_7 = arith.constant 0 : index
    %c128 = arith.constant 128 : index
    %7 = vector.load %arg1[%c0_6, %c0_7, %c128] : memref<1x128x256xbf16, #tpu.memory_space<vmem>>, vector<1x112x128xbf16>
    %8 = vector.shape_cast %7 : vector<1x112x128xbf16> to vector<112x128xbf16>
    %c1 = arith.constant 1 : index
    %c0_8 = arith.constant 0 : index
    %c0_9 = arith.constant 0 : index
    %9 = vector.load %arg2[%c1, %c0_8, %c0_9] : memref<5x128x256xbf16, #tpu.memory_space<vmem>>, vector<1x128x256xbf16>
    %10 = vector.shape_cast %9 : vector<1x128x256xbf16> to vector<128x256xbf16>
    %cst_10 = arith.constant dense<0.000000e+00> : vector<112x256xf32>
    %11 = tpu.matmul %8, %10, %cst_10 {dimension_numbers = #tpu.dot_dimension_numbers<[1], [0], [0], [1], [0, 0, 1, 1], [], []>} : vector<112x128xbf16>, vector<128x256xbf16>, vector<112x256xf32> -> vector<112x256xf32>
    %12 = arith.addf %6, %11 : vector<112x256xf32>
    %c0_11 = arith.constant 0 : index
    %c8 = arith.constant 8 : index
    %c0_12 = arith.constant 0 : index
    %13 = vector.load %arg1[%c0_11, %c8, %c0_12] : memref<1x128x256xbf16, #tpu.memory_space<vmem>>, vector<1x112x128xbf16>
    %14 = vector.shape_cast %13 : vector<1x112x128xbf16> to vector<112x128xbf16>
    %c2 = arith.constant 2 : index
    %c0_13 = arith.constant 0 : index
    %c0_14 = arith.constant 0 : index
    %15 = vector.load %arg2[%c2, %c0_13, %c0_14] : memref<5x128x256xbf16, #tpu.memory_space<vmem>>, vector<1x128x256xbf16>
    %16 = vector.shape_cast %15 : vector<1x128x256xbf16> to vector<128x256xbf16>
    %cst_15 = arith.constant dense<0.000000e+00> : vector<112x256xf32>
    %17 = tpu.matmul %14, %16, %cst_15 {dimension_numbers = #tpu.dot_dimension_numbers<[1], [0], [0], [1], [0, 0, 1, 1], [], []>} : vector<112x128xbf16>, vector<128x256xbf16>, vector<112x256xf32> -> vector<112x256xf32>
    %18 = arith.addf %12, %17 : vector<112x256xf32>
    %c0_16 = arith.constant 0 : index
    %c8_17 = arith.constant 8 : index
    %c128_18 = arith.constant 128 : index
    %19 = vector.load %arg1[%c0_16, %c8_17, %c128_18] : memref<1x128x256xbf16, #tpu.memory_space<vmem>>, vector<1x112x128xbf16>
    %20 = vector.shape_cast %19 : vector<1x112x128xbf16> to vector<112x128xbf16>
    %c3 = arith.constant 3 : index
    %c0_19 = arith.constant 0 : index
    %c0_20 = arith.constant 0 : index
    %21 = vector.load %arg2[%c3, %c0_19, %c0_20] : memref<5x128x256xbf16, #tpu.memory_space<vmem>>, vector<1x128x256xbf16>
    %22 = vector.shape_cast %21 : vector<1x128x256xbf16> to vector<128x256xbf16>
    %cst_21 = arith.constant dense<0.000000e+00> : vector<112x256xf32>
    %23 = tpu.matmul %20, %22, %cst_21 {dimension_numbers = #tpu.dot_dimension_numbers<[1], [0], [0], [1], [0, 0, 1, 1], [], []>} : vector<112x128xbf16>, vector<128x256xbf16>, vector<112x256xf32> -> vector<112x256xf32>
    %24 = arith.addf %18, %23 : vector<112x256xf32>
    %c0_22 = arith.constant 0 : index
    %c16 = arith.constant 16 : index
    %c0_23 = arith.constant 0 : index
    %25 = vector.load %arg1[%c0_22, %c16, %c0_23] : memref<1x128x256xbf16, #tpu.memory_space<vmem>>, vector<1x112x128xbf16>
    %26 = vector.shape_cast %25 : vector<1x112x128xbf16> to vector<112x128xbf16>
    %c4 = arith.constant 4 : index
    %c0_24 = arith.constant 0 : index
    %c0_25 = arith.constant 0 : index
    %27 = vector.load %arg2[%c4, %c0_24, %c0_25] : memref<5x128x256xbf16, #tpu.memory_space<vmem>>, vector<1x128x256xbf16>
    %28 = vector.shape_cast %27 : vector<1x128x256xbf16> to vector<128x256xbf16>
    %cst_26 = arith.constant dense<0.000000e+00> : vector<112x256xf32>
    %29 = tpu.matmul %26, %28, %cst_26 {dimension_numbers = #tpu.dot_dimension_numbers<[1], [0], [0], [1], [0, 0, 1, 1], [], []>} : vector<112x128xbf16>, vector<128x256xbf16>, vector<112x256xf32> -> vector<112x256xf32>
    %30 = arith.addf %24, %29 : vector<112x256xf32>
    %31 = vector.extract_strided_slice %30 {offsets = [0, 0], sizes = [112, 128], strides = [1, 1]} : vector<112x256xf32> to vector<112x128xf32>
    %32 = vector.extract_strided_slice %30 {offsets = [0, 128], sizes = [112, 128], strides = [1, 1]} : vector<112x256xf32> to vector<112x128xf32>
    %33 = arith.maximumf %31, %32 : vector<112x128xf32>
    %cst_27 = arith.constant 0.000000e+00 : f32
    %34 = vector.broadcast %cst_27 : f32 to vector<112x256xf32>
    %c0_28 = arith.constant 0 : index
    %c0_29 = arith.constant 0 : index
    %c128_30 = arith.constant 128 : index
    %35 = vector.load %arg1[%c0_28, %c0_29, %c128_30] : memref<1x128x256xbf16, #tpu.memory_space<vmem>>, vector<1x112x128xbf16>
    %36 = vector.shape_cast %35 : vector<1x112x128xbf16> to vector<112x128xbf16>
    %c0_31 = arith.constant 0 : index
    %c0_32 = arith.constant 0 : index
    %c0_33 = arith.constant 0 : index
    %37 = vector.load %arg2[%c0_31, %c0_32, %c0_33] : memref<5x128x256xbf16, #tpu.memory_space<vmem>>, vector<1x128x256xbf16>
    %38 = vector.shape_cast %37 : vector<1x128x256xbf16> to vector<128x256xbf16>
    %cst_34 = arith.constant dense<0.000000e+00> : vector<112x256xf32>
    %39 = tpu.matmul %36, %38, %cst_34 {dimension_numbers = #tpu.dot_dimension_numbers<[1], [0], [0], [1], [0, 0, 1, 1], [], []>} : vector<112x128xbf16>, vector<128x256xbf16>, vector<112x256xf32> -> vector<112x256xf32>
    %40 = arith.addf %34, %39 : vector<112x256xf32>
    %c0_35 = arith.constant 0 : index
    %c8_36 = arith.constant 8 : index
    %c0_37 = arith.constant 0 : index
    %41 = vector.load %arg1[%c0_35, %c8_36, %c0_37] : memref<1x128x256xbf16, #tpu.memory_space<vmem>>, vector<1x112x128xbf16>
    %42 = vector.shape_cast %41 : vector<1x112x128xbf16> to vector<112x128xbf16>
    %c1_38 = arith.constant 1 : index
    %c0_39 = arith.constant 0 : index
    %c0_40 = arith.constant 0 : index
    %43 = vector.load %arg2[%c1_38, %c0_39, %c0_40] : memref<5x128x256xbf16, #tpu.memory_space<vmem>>, vector<1x128x256xbf16>
    %44 = vector.shape_cast %43 : vector<1x128x256xbf16> to vector<128x256xbf16>
    %cst_41 = arith.constant dense<0.000000e+00> : vector<112x256xf32>
    %45 = tpu.matmul %42, %44, %cst_41 {dimension_numbers = #tpu.dot_dimension_numbers<[1], [0], [0], [1], [0, 0, 1, 1], [], []>} : vector<112x128xbf16>, vector<128x256xbf16>, vector<112x256xf32> -> vector<112x256xf32>
    %46 = arith.addf %40, %45 : vector<112x256xf32>
    %c0_42 = arith.constant 0 : index
    %c8_43 = arith.constant 8 : index
    %c128_44 = arith.constant 128 : index
    %47 = vector.load %arg1[%c0_42, %c8_43, %c128_44] : memref<1x128x256xbf16, #tpu.memory_space<vmem>>, vector<1x112x128xbf16>
    %48 = vector.shape_cast %47 : vector<1x112x128xbf16> to vector<112x128xbf16>
    %c2_45 = arith.constant 2 : index
    %c0_46 = arith.constant 0 : index
    %c0_47 = arith.constant 0 : index
    %49 = vector.load %arg2[%c2_45, %c0_46, %c0_47] : memref<5x128x256xbf16, #tpu.memory_space<vmem>>, vector<1x128x256xbf16>
    %50 = vector.shape_cast %49 : vector<1x128x256xbf16> to vector<128x256xbf16>
    %cst_48 = arith.constant dense<0.000000e+00> : vector<112x256xf32>
    %51 = tpu.matmul %48, %50, %cst_48 {dimension_numbers = #tpu.dot_dimension_numbers<[1], [0], [0], [1], [0, 0, 1, 1], [], []>} : vector<112x128xbf16>, vector<128x256xbf16>, vector<112x256xf32> -> vector<112x256xf32>
    %52 = arith.addf %46, %51 : vector<112x256xf32>
    %c0_49 = arith.constant 0 : index
    %c16_50 = arith.constant 16 : index
    %c0_51 = arith.constant 0 : index
    %53 = vector.load %arg1[%c0_49, %c16_50, %c0_51] : memref<1x128x256xbf16, #tpu.memory_space<vmem>>, vector<1x112x128xbf16>
    %54 = vector.shape_cast %53 : vector<1x112x128xbf16> to vector<112x128xbf16>
    %c3_52 = arith.constant 3 : index
    %c0_53 = arith.constant 0 : index
    %c0_54 = arith.constant 0 : index
    %55 = vector.load %arg2[%c3_52, %c0_53, %c0_54] : memref<5x128x256xbf16, #tpu.memory_space<vmem>>, vector<1x128x256xbf16>
    %56 = vector.shape_cast %55 : vector<1x128x256xbf16> to vector<128x256xbf16>
    %cst_55 = arith.constant dense<0.000000e+00> : vector<112x256xf32>
    %57 = tpu.matmul %54, %56, %cst_55 {dimension_numbers = #tpu.dot_dimension_numbers<[1], [0], [0], [1], [0, 0, 1, 1], [], []>} : vector<112x128xbf16>, vector<128x256xbf16>, vector<112x256xf32> -> vector<112x256xf32>
    %58 = arith.addf %52, %57 : vector<112x256xf32>
    %c0_56 = arith.constant 0 : index
    %c16_57 = arith.constant 16 : index
    %c128_58 = arith.constant 128 : index
    %59 = vector.load %arg1[%c0_56, %c16_57, %c128_58] : memref<1x128x256xbf16, #tpu.memory_space<vmem>>, vector<1x112x128xbf16>
    %60 = vector.shape_cast %59 : vector<1x112x128xbf16> to vector<112x128xbf16>
    %c4_59 = arith.constant 4 : index
    %c0_60 = arith.constant 0 : index
    %c0_61 = arith.constant 0 : index
    %61 = vector.load %arg2[%c4_59, %c0_60, %c0_61] : memref<5x128x256xbf16, #tpu.memory_space<vmem>>, vector<1x128x256xbf16>
    %62 = vector.shape_cast %61 : vector<1x128x256xbf16> to vector<128x256xbf16>
    %cst_62 = arith.constant dense<0.000000e+00> : vector<112x256xf32>
    %63 = tpu.matmul %60, %62, %cst_62 {dimension_numbers = #tpu.dot_dimension_numbers<[1], [0], [0], [1], [0, 0, 1, 1], [], []>} : vector<112x128xbf16>, vector<128x256xbf16>, vector<112x256xf32> -> vector<112x256xf32>
    %64 = arith.addf %58, %63 : vector<112x256xf32>
    %65 = vector.extract_strided_slice %64 {offsets = [0, 0], sizes = [112, 128], strides = [1, 1]} : vector<112x256xf32> to vector<112x128xf32>
    %66 = vector.extract_strided_slice %64 {offsets = [0, 128], sizes = [112, 128], strides = [1, 1]} : vector<112x256xf32> to vector<112x128xf32>
    %67 = arith.maximumf %65, %66 : vector<112x128xf32>
    %68 = arith.maximumf %33, %67 : vector<112x128xf32>
    %c0_63 = arith.constant 0 : index
    %c0_64 = arith.constant 0 : index
    %69 = vector.load %arg3[%c0_63, %c0_64] : memref<1x128xf32, #tpu.memory_space<vmem>>, vector<1x128xf32>
    %70 = vector.broadcast %69 : vector<1x128xf32> to vector<112x128xf32>
    %71 = arith.addf %68, %70 : vector<112x128xf32>
    %cst_65 = arith.constant 0.000000e+00 : f32
    %72 = vector.broadcast %cst_65 : f32 to vector<112x128xf32>
    %73 = arith.maximumf %71, %72 : vector<112x128xf32>
    %74 = vector.extract_strided_slice %73 {offsets = [0, 0], sizes = [8, 128], strides = [1, 1]} : vector<112x128xf32> to vector<8x128xf32>
    %75 = vector.extract_strided_slice %73 {offsets = [8, 0], sizes = [8, 128], strides = [1, 1]} : vector<112x128xf32> to vector<8x128xf32>
    %76 = vector.extract_strided_slice %73 {offsets = [16, 0], sizes = [8, 128], strides = [1, 1]} : vector<112x128xf32> to vector<8x128xf32>
    %77 = vector.extract_strided_slice %73 {offsets = [24, 0], sizes = [8, 128], strides = [1, 1]} : vector<112x128xf32> to vector<8x128xf32>
    %78 = vector.extract_strided_slice %73 {offsets = [32, 0], sizes = [8, 128], strides = [1, 1]} : vector<112x128xf32> to vector<8x128xf32>
    %79 = vector.extract_strided_slice %73 {offsets = [40, 0], sizes = [8, 128], strides = [1, 1]} : vector<112x128xf32> to vector<8x128xf32>
    %80 = vector.extract_strided_slice %73 {offsets = [48, 0], sizes = [8, 128], strides = [1, 1]} : vector<112x128xf32> to vector<8x128xf32>
    %81 = vector.extract_strided_slice %73 {offsets = [56, 0], sizes = [8, 128], strides = [1, 1]} : vector<112x128xf32> to vector<8x128xf32>
    %82 = vector.extract_strided_slice %73 {offsets = [64, 0], sizes = [8, 128], strides = [1, 1]} : vector<112x128xf32> to vector<8x128xf32>
    %83 = vector.extract_strided_slice %73 {offsets = [72, 0], sizes = [8, 128], strides = [1, 1]} : vector<112x128xf32> to vector<8x128xf32>
    %84 = vector.extract_strided_slice %73 {offsets = [80, 0], sizes = [8, 128], strides = [1, 1]} : vector<112x128xf32> to vector<8x128xf32>
    %85 = vector.extract_strided_slice %73 {offsets = [88, 0], sizes = [8, 128], strides = [1, 1]} : vector<112x128xf32> to vector<8x128xf32>
    %86 = vector.extract_strided_slice %73 {offsets = [96, 0], sizes = [8, 128], strides = [1, 1]} : vector<112x128xf32> to vector<8x128xf32>
    %87 = vector.extract_strided_slice %73 {offsets = [104, 0], sizes = [8, 128], strides = [1, 1]} : vector<112x128xf32> to vector<8x128xf32>
    %cst_66 = arith.constant 0.000000e+00 : f32
    %88 = vector.broadcast %cst_66 : f32 to vector<40x256xf32>
    %89 = tpu.concatenate %74, %76, %78, %80, %82 in 0 : vector<8x128xf32>, vector<8x128xf32>, vector<8x128xf32>, vector<8x128xf32>, vector<8x128xf32> -> vector<40x128xf32>
    %90 = arith.truncf %89 : vector<40x128xf32> to vector<40x128xbf16>
    %c0_67 = arith.constant 0 : index
    %c0_68 = arith.constant 0 : index
    %c0_69 = arith.constant 0 : index
    %91 = vector.load %arg4[%c0_67, %c0_68, %c0_69] : memref<5x128x256xbf16, #tpu.memory_space<vmem>>, vector<1x128x256xbf16>
    %92 = vector.shape_cast %91 : vector<1x128x256xbf16> to vector<128x256xbf16>
    %cst_70 = arith.constant dense<0.000000e+00> : vector<40x256xf32>
    %93 = tpu.matmul %90, %92, %cst_70 {dimension_numbers = #tpu.dot_dimension_numbers<[1], [0], [0], [1], [0, 0, 1, 1], [], []>} : vector<40x128xbf16>, vector<128x256xbf16>, vector<40x256xf32> -> vector<40x256xf32>
    %94 = arith.addf %88, %93 : vector<40x256xf32>
    %95 = tpu.concatenate %75, %77, %79, %81, %83 in 0 : vector<8x128xf32>, vector<8x128xf32>, vector<8x128xf32>, vector<8x128xf32>, vector<8x128xf32> -> vector<40x128xf32>
    %96 = arith.truncf %95 : vector<40x128xf32> to vector<40x128xbf16>
    %c1_71 = arith.constant 1 : index
    %c0_72 = arith.constant 0 : index
    %c0_73 = arith.constant 0 : index
    %97 = vector.load %arg4[%c1_71, %c0_72, %c0_73] : memref<5x128x256xbf16, #tpu.memory_space<vmem>>, vector<1x128x256xbf16>
    %98 = vector.shape_cast %97 : vector<1x128x256xbf16> to vector<128x256xbf16>
    %cst_74 = arith.constant dense<0.000000e+00> : vector<40x256xf32>
    %99 = tpu.matmul %96, %98, %cst_74 {dimension_numbers = #tpu.dot_dimension_numbers<[1], [0], [0], [1], [0, 0, 1, 1], [], []>} : vector<40x128xbf16>, vector<128x256xbf16>, vector<40x256xf32> -> vector<40x256xf32>
    %100 = arith.addf %94, %99 : vector<40x256xf32>
    %101 = tpu.concatenate %76, %78, %80, %82, %84 in 0 : vector<8x128xf32>, vector<8x128xf32>, vector<8x128xf32>, vector<8x128xf32>, vector<8x128xf32> -> vector<40x128xf32>
    %102 = arith.truncf %101 : vector<40x128xf32> to vector<40x128xbf16>
    %c2_75 = arith.constant 2 : index
    %c0_76 = arith.constant 0 : index
    %c0_77 = arith.constant 0 : index
    %103 = vector.load %arg4[%c2_75, %c0_76, %c0_77] : memref<5x128x256xbf16, #tpu.memory_space<vmem>>, vector<1x128x256xbf16>
    %104 = vector.shape_cast %103 : vector<1x128x256xbf16> to vector<128x256xbf16>
    %cst_78 = arith.constant dense<0.000000e+00> : vector<40x256xf32>
    %105 = tpu.matmul %102, %104, %cst_78 {dimension_numbers = #tpu.dot_dimension_numbers<[1], [0], [0], [1], [0, 0, 1, 1], [], []>} : vector<40x128xbf16>, vector<128x256xbf16>, vector<40x256xf32> -> vector<40x256xf32>
    %106 = arith.addf %100, %105 : vector<40x256xf32>
    %107 = tpu.concatenate %77, %79, %81, %83, %85 in 0 : vector<8x128xf32>, vector<8x128xf32>, vector<8x128xf32>, vector<8x128xf32>, vector<8x128xf32> -> vector<40x128xf32>
    %108 = arith.truncf %107 : vector<40x128xf32> to vector<40x128xbf16>
    %c3_79 = arith.constant 3 : index
    %c0_80 = arith.constant 0 : index
    %c0_81 = arith.constant 0 : index
    %109 = vector.load %arg4[%c3_79, %c0_80, %c0_81] : memref<5x128x256xbf16, #tpu.memory_space<vmem>>, vector<1x128x256xbf16>
    %110 = vector.shape_cast %109 : vector<1x128x256xbf16> to vector<128x256xbf16>
    %cst_82 = arith.constant dense<0.000000e+00> : vector<40x256xf32>
    %111 = tpu.matmul %108, %110, %cst_82 {dimension_numbers = #tpu.dot_dimension_numbers<[1], [0], [0], [1], [0, 0, 1, 1], [], []>} : vector<40x128xbf16>, vector<128x256xbf16>, vector<40x256xf32> -> vector<40x256xf32>
    %112 = arith.addf %106, %111 : vector<40x256xf32>
    %113 = tpu.concatenate %78, %80, %82, %84, %86 in 0 : vector<8x128xf32>, vector<8x128xf32>, vector<8x128xf32>, vector<8x128xf32>, vector<8x128xf32> -> vector<40x128xf32>
    %114 = arith.truncf %113 : vector<40x128xf32> to vector<40x128xbf16>
    %c4_83 = arith.constant 4 : index
    %c0_84 = arith.constant 0 : index
    %c0_85 = arith.constant 0 : index
    %115 = vector.load %arg4[%c4_83, %c0_84, %c0_85] : memref<5x128x256xbf16, #tpu.memory_space<vmem>>, vector<1x128x256xbf16>
    %116 = vector.shape_cast %115 : vector<1x128x256xbf16> to vector<128x256xbf16>
    %cst_86 = arith.constant dense<0.000000e+00> : vector<40x256xf32>
    %117 = tpu.matmul %114, %116, %cst_86 {dimension_numbers = #tpu.dot_dimension_numbers<[1], [0], [0], [1], [0, 0, 1, 1], [], []>} : vector<40x128xbf16>, vector<128x256xbf16>, vector<40x256xf32> -> vector<40x256xf32>
    %118 = arith.addf %112, %117 : vector<40x256xf32>
    %119 = vector.extract_strided_slice %118 {offsets = [0, 0], sizes = [40, 128], strides = [1, 1]} : vector<40x256xf32> to vector<40x128xf32>
    %120 = vector.extract_strided_slice %118 {offsets = [0, 128], sizes = [40, 128], strides = [1, 1]} : vector<40x256xf32> to vector<40x128xf32>
    %121 = arith.maximumf %119, %120 : vector<40x128xf32>
    %cst_87 = arith.constant 0.000000e+00 : f32
    %122 = vector.broadcast %cst_87 : f32 to vector<40x256xf32>
    %123 = tpu.concatenate %75, %77, %79, %81, %83 in 0 : vector<8x128xf32>, vector<8x128xf32>, vector<8x128xf32>, vector<8x128xf32>, vector<8x128xf32> -> vector<40x128xf32>
    %124 = arith.truncf %123 : vector<40x128xf32> to vector<40x128xbf16>
    %c0_88 = arith.constant 0 : index
    %c0_89 = arith.constant 0 : index
    %c0_90 = arith.constant 0 : index
    %125 = vector.load %arg4[%c0_88, %c0_89, %c0_90] : memref<5x128x256xbf16, #tpu.memory_space<vmem>>, vector<1x128x256xbf16>
    %126 = vector.shape_cast %125 : vector<1x128x256xbf16> to vector<128x256xbf16>
    %cst_91 = arith.constant dense<0.000000e+00> : vector<40x256xf32>
    %127 = tpu.matmul %124, %126, %cst_91 {dimension_numbers = #tpu.dot_dimension_numbers<[1], [0], [0], [1], [0, 0, 1, 1], [], []>} : vector<40x128xbf16>, vector<128x256xbf16>, vector<40x256xf32> -> vector<40x256xf32>
    %128 = arith.addf %122, %127 : vector<40x256xf32>
    %129 = tpu.concatenate %76, %78, %80, %82, %84 in 0 : vector<8x128xf32>, vector<8x128xf32>, vector<8x128xf32>, vector<8x128xf32>, vector<8x128xf32> -> vector<40x128xf32>
    %130 = arith.truncf %129 : vector<40x128xf32> to vector<40x128xbf16>
    %c1_92 = arith.constant 1 : index
    %c0_93 = arith.constant 0 : index
    %c0_94 = arith.constant 0 : index
    %131 = vector.load %arg4[%c1_92, %c0_93, %c0_94] : memref<5x128x256xbf16, #tpu.memory_space<vmem>>, vector<1x128x256xbf16>
    %132 = vector.shape_cast %131 : vector<1x128x256xbf16> to vector<128x256xbf16>
    %cst_95 = arith.constant dense<0.000000e+00> : vector<40x256xf32>
    %133 = tpu.matmul %130, %132, %cst_95 {dimension_numbers = #tpu.dot_dimension_numbers<[1], [0], [0], [1], [0, 0, 1, 1], [], []>} : vector<40x128xbf16>, vector<128x256xbf16>, vector<40x256xf32> -> vector<40x256xf32>
    %134 = arith.addf %128, %133 : vector<40x256xf32>
    %135 = tpu.concatenate %77, %79, %81, %83, %85 in 0 : vector<8x128xf32>, vector<8x128xf32>, vector<8x128xf32>, vector<8x128xf32>, vector<8x128xf32> -> vector<40x128xf32>
    %136 = arith.truncf %135 : vector<40x128xf32> to vector<40x128xbf16>
    %c2_96 = arith.constant 2 : index
    %c0_97 = arith.constant 0 : index
    %c0_98 = arith.constant 0 : index
    %137 = vector.load %arg4[%c2_96, %c0_97, %c0_98] : memref<5x128x256xbf16, #tpu.memory_space<vmem>>, vector<1x128x256xbf16>
    %138 = vector.shape_cast %137 : vector<1x128x256xbf16> to vector<128x256xbf16>
    %cst_99 = arith.constant dense<0.000000e+00> : vector<40x256xf32>
    %139 = tpu.matmul %136, %138, %cst_99 {dimension_numbers = #tpu.dot_dimension_numbers<[1], [0], [0], [1], [0, 0, 1, 1], [], []>} : vector<40x128xbf16>, vector<128x256xbf16>, vector<40x256xf32> -> vector<40x256xf32>
    %140 = arith.addf %134, %139 : vector<40x256xf32>
    %141 = tpu.concatenate %78, %80, %82, %84, %86 in 0 : vector<8x128xf32>, vector<8x128xf32>, vector<8x128xf32>, vector<8x128xf32>, vector<8x128xf32> -> vector<40x128xf32>
    %142 = arith.truncf %141 : vector<40x128xf32> to vector<40x128xbf16>
    %c3_100 = arith.constant 3 : index
    %c0_101 = arith.constant 0 : index
    %c0_102 = arith.constant 0 : index
    %143 = vector.load %arg4[%c3_100, %c0_101, %c0_102] : memref<5x128x256xbf16, #tpu.memory_space<vmem>>, vector<1x128x256xbf16>
    %144 = vector.shape_cast %143 : vector<1x128x256xbf16> to vector<128x256xbf16>
    %cst_103 = arith.constant dense<0.000000e+00> : vector<40x256xf32>
    %145 = tpu.matmul %142, %144, %cst_103 {dimension_numbers = #tpu.dot_dimension_numbers<[1], [0], [0], [1], [0, 0, 1, 1], [], []>} : vector<40x128xbf16>, vector<128x256xbf16>, vector<40x256xf32> -> vector<40x256xf32>
    %146 = arith.addf %140, %145 : vector<40x256xf32>
    %147 = tpu.concatenate %79, %81, %83, %85, %87 in 0 : vector<8x128xf32>, vector<8x128xf32>, vector<8x128xf32>, vector<8x128xf32>, vector<8x128xf32> -> vector<40x128xf32>
    %148 = arith.truncf %147 : vector<40x128xf32> to vector<40x128xbf16>
    %c4_104 = arith.constant 4 : index
    %c0_105 = arith.constant 0 : index
    %c0_106 = arith.constant 0 : index
    %149 = vector.load %arg4[%c4_104, %c0_105, %c0_106] : memref<5x128x256xbf16, #tpu.memory_space<vmem>>, vector<1x128x256xbf16>
    %150 = vector.shape_cast %149 : vector<1x128x256xbf16> to vector<128x256xbf16>
    %cst_107 = arith.constant dense<0.000000e+00> : vector<40x256xf32>
    %151 = tpu.matmul %148, %150, %cst_107 {dimension_numbers = #tpu.dot_dimension_numbers<[1], [0], [0], [1], [0, 0, 1, 1], [], []>} : vector<40x128xbf16>, vector<128x256xbf16>, vector<40x256xf32> -> vector<40x256xf32>
    %152 = arith.addf %146, %151 : vector<40x256xf32>
    %153 = vector.extract_strided_slice %152 {offsets = [0, 0], sizes = [40, 128], strides = [1, 1]} : vector<40x256xf32> to vector<40x128xf32>
    %154 = vector.extract_strided_slice %152 {offsets = [0, 128], sizes = [40, 128], strides = [1, 1]} : vector<40x256xf32> to vector<40x128xf32>
    %155 = arith.maximumf %153, %154 : vector<40x128xf32>
    %156 = arith.maximumf %121, %155 : vector<40x128xf32>
    %c0_108 = arith.constant 0 : index
    %c0_109 = arith.constant 0 : index
    %157 = vector.load %arg5[%c0_108, %c0_109] : memref<1x128xf32, #tpu.memory_space<vmem>>, vector<1x128xf32>
    %158 = vector.broadcast %157 : vector<1x128xf32> to vector<40x128xf32>
    %159 = arith.addf %156, %158 : vector<40x128xf32>
    %cst_110 = arith.constant 0.000000e+00 : f32
    %160 = vector.broadcast %cst_110 : f32 to vector<40x128xf32>
    %161 = arith.maximumf %159, %160 : vector<40x128xf32>
    %cst_111 = arith.constant 0.000000e+00 : f32
    %162 = vector.broadcast %cst_111 : f32 to vector<8x128xf32>
    %163 = vector.extract_strided_slice %161 {offsets = [0, 0], sizes = [8, 128], strides = [1, 1]} : vector<40x128xf32> to vector<8x128xf32>
    %164 = arith.truncf %163 : vector<8x128xf32> to vector<8x128xbf16>
    %c0_112 = arith.constant 0 : index
    %c0_113 = arith.constant 0 : index
    %c0_114 = arith.constant 0 : index
    %165 = vector.load %arg6[%c0_112, %c0_113, %c0_114] : memref<5x128x128xbf16, #tpu.memory_space<vmem>>, vector<1x128x128xbf16>
    %166 = vector.shape_cast %165 : vector<1x128x128xbf16> to vector<128x128xbf16>
    %cst_115 = arith.constant dense<0.000000e+00> : vector<8x128xf32>
    %167 = tpu.matmul %164, %166, %cst_115 {dimension_numbers = #tpu.dot_dimension_numbers<[1], [0], [0], [1], [0, 0, 1, 1], [], []>} : vector<8x128xbf16>, vector<128x128xbf16>, vector<8x128xf32> -> vector<8x128xf32>
    %168 = arith.addf %162, %167 : vector<8x128xf32>
    %169 = vector.extract_strided_slice %161 {offsets = [8, 0], sizes = [8, 128], strides = [1, 1]} : vector<40x128xf32> to vector<8x128xf32>
    %170 = arith.truncf %169 : vector<8x128xf32> to vector<8x128xbf16>
    %c1_116 = arith.constant 1 : index
    %c0_117 = arith.constant 0 : index
    %c0_118 = arith.constant 0 : index
    %171 = vector.load %arg6[%c1_116, %c0_117, %c0_118] : memref<5x128x128xbf16, #tpu.memory_space<vmem>>, vector<1x128x128xbf16>
    %172 = vector.shape_cast %171 : vector<1x128x128xbf16> to vector<128x128xbf16>
    %cst_119 = arith.constant dense<0.000000e+00> : vector<8x128xf32>
    %173 = tpu.matmul %170, %172, %cst_119 {dimension_numbers = #tpu.dot_dimension_numbers<[1], [0], [0], [1], [0, 0, 1, 1], [], []>} : vector<8x128xbf16>, vector<128x128xbf16>, vector<8x128xf32> -> vector<8x128xf32>
    %174 = arith.addf %168, %173 : vector<8x128xf32>
    %175 = vector.extract_strided_slice %161 {offsets = [16, 0], sizes = [8, 128], strides = [1, 1]} : vector<40x128xf32> to vector<8x128xf32>
    %176 = arith.truncf %175 : vector<8x128xf32> to vector<8x128xbf16>
    %c2_120 = arith.constant 2 : index
    %c0_121 = arith.constant 0 : index
    %c0_122 = arith.constant 0 : index
    %177 = vector.load %arg6[%c2_120, %c0_121, %c0_122] : memref<5x128x128xbf16, #tpu.memory_space<vmem>>, vector<1x128x128xbf16>
    %178 = vector.shape_cast %177 : vector<1x128x128xbf16> to vector<128x128xbf16>
    %cst_123 = arith.constant dense<0.000000e+00> : vector<8x128xf32>
    %179 = tpu.matmul %176, %178, %cst_123 {dimension_numbers = #tpu.dot_dimension_numbers<[1], [0], [0], [1], [0, 0, 1, 1], [], []>} : vector<8x128xbf16>, vector<128x128xbf16>, vector<8x128xf32> -> vector<8x128xf32>
    %180 = arith.addf %174, %179 : vector<8x128xf32>
    %181 = vector.extract_strided_slice %161 {offsets = [24, 0], sizes = [8, 128], strides = [1, 1]} : vector<40x128xf32> to vector<8x128xf32>
    %182 = arith.truncf %181 : vector<8x128xf32> to vector<8x128xbf16>
    %c3_124 = arith.constant 3 : index
    %c0_125 = arith.constant 0 : index
    %c0_126 = arith.constant 0 : index
    %183 = vector.load %arg6[%c3_124, %c0_125, %c0_126] : memref<5x128x128xbf16, #tpu.memory_space<vmem>>, vector<1x128x128xbf16>
    %184 = vector.shape_cast %183 : vector<1x128x128xbf16> to vector<128x128xbf16>
    %cst_127 = arith.constant dense<0.000000e+00> : vector<8x128xf32>
    %185 = tpu.matmul %182, %184, %cst_127 {dimension_numbers = #tpu.dot_dimension_numbers<[1], [0], [0], [1], [0, 0, 1, 1], [], []>} : vector<8x128xbf16>, vector<128x128xbf16>, vector<8x128xf32> -> vector<8x128xf32>
    %186 = arith.addf %180, %185 : vector<8x128xf32>
    %187 = vector.extract_strided_slice %161 {offsets = [32, 0], sizes = [8, 128], strides = [1, 1]} : vector<40x128xf32> to vector<8x128xf32>
    %188 = arith.truncf %187 : vector<8x128xf32> to vector<8x128xbf16>
    %c4_128 = arith.constant 4 : index
    %c0_129 = arith.constant 0 : index
    %c0_130 = arith.constant 0 : index
    %189 = vector.load %arg6[%c4_128, %c0_129, %c0_130] : memref<5x128x128xbf16, #tpu.memory_space<vmem>>, vector<1x128x128xbf16>
    %190 = vector.shape_cast %189 : vector<1x128x128xbf16> to vector<128x128xbf16>
    %cst_131 = arith.constant dense<0.000000e+00> : vector<8x128xf32>
    %191 = tpu.matmul %188, %190, %cst_131 {dimension_numbers = #tpu.dot_dimension_numbers<[1], [0], [0], [1], [0, 0, 1, 1], [], []>} : vector<8x128xbf16>, vector<128x128xbf16>, vector<8x128xf32> -> vector<8x128xf32>
    %192 = arith.addf %186, %191 : vector<8x128xf32>
    %c0_132 = arith.constant 0 : index
    %c0_133 = arith.constant 0 : index
    %193 = vector.load %arg7[%c0_132, %c0_133] : memref<1x128xf32, #tpu.memory_space<vmem>>, vector<1x128xf32>
    %194 = vector.broadcast %193 : vector<1x128xf32> to vector<8x128xf32>
    %195 = arith.addf %192, %194 : vector<8x128xf32>
    %cst_134 = arith.constant 0.000000e+00 : f32
    %196 = vector.broadcast %cst_134 : f32 to vector<8x128xf32>
    %197 = arith.maximumf %195, %196 : vector<8x128xf32>
    %198 = arith.truncf %197 : vector<8x128xf32> to vector<8x128xbf16>
    %c0_135 = arith.constant 0 : index
    %c0_136 = arith.constant 0 : index
    %199 = vector.load %arg8[%c0_135, %c0_136] : memref<128x128xbf16, #tpu.memory_space<vmem>>, vector<128x128xbf16>
    %cst_137 = arith.constant dense<0.000000e+00> : vector<8x128xf32>
    %200 = tpu.matmul %198, %199, %cst_137 {dimension_numbers = #tpu.dot_dimension_numbers<[1], [0], [0], [1], [0, 0, 1, 1], [], []>} : vector<8x128xbf16>, vector<128x128xbf16>, vector<8x128xf32> -> vector<8x128xf32>
    %c0_138 = arith.constant 0 : index
    %c0_139 = arith.constant 0 : index
    %201 = vector.load %arg9[%c0_138, %c0_139] : memref<1x128xf32, #tpu.memory_space<vmem>>, vector<1x128xf32>
    %202 = vector.broadcast %201 : vector<1x128xf32> to vector<8x128xf32>
    %203 = arith.addf %200, %202 : vector<8x128xf32>
    %cst_140 = arith.constant 0.000000e+00 : f32
    %204 = vector.broadcast %cst_140 : f32 to vector<8x128xf32>
    %205 = arith.maximumf %203, %204 : vector<8x128xf32>
    %206 = arith.truncf %205 : vector<8x128xf32> to vector<8x128xbf16>
    %c0_141 = arith.constant 0 : index
    %c0_142 = arith.constant 0 : index
    %207 = vector.load %arg10[%c0_141, %c0_142] : memref<128x128xbf16, #tpu.memory_space<vmem>>, vector<128x128xbf16>
    %cst_143 = arith.constant dense<0.000000e+00> : vector<8x128xf32>
    %208 = tpu.matmul %206, %207, %cst_143 {dimension_numbers = #tpu.dot_dimension_numbers<[1], [0], [0], [1], [0, 0, 1, 1], [], []>} : vector<8x128xbf16>, vector<128x128xbf16>, vector<8x128xf32> -> vector<8x128xf32>
    %c0_144 = arith.constant 0 : index
    %c0_145 = arith.constant 0 : index
    %209 = vector.load %arg11[%c0_144, %c0_145] : memref<1x128xf32, #tpu.memory_space<vmem>>, vector<1x128xf32>
    %210 = vector.broadcast %209 : vector<1x128xf32> to vector<8x128xf32>
    %211 = arith.addf %208, %210 : vector<8x128xf32>
    %c0_146 = arith.constant 0 : index
    %c0_147 = arith.constant 0 : index
    %212 = vector.load %arg12[%c0_146, %c0_147] : memref<8x128xf32, #tpu.memory_space<vmem>>, vector<8x128xf32>
    tpu.vector_store %arg12[%c0_146, %c0_147], %211 {strides = array<i32>} : memref<8x128xf32, #tpu.memory_space<vmem>>, vector<8x128xf32>,
    return
  }
  func.func @transform_0(%arg0: i32) -> (i32, i32, i32) {
    %c0_i32 = arith.constant 0 : i32
    %c0_i32_0 = arith.constant 0 : i32
    %c0_i32_1 = arith.constant 0 : i32
    return %arg0, %c0_i32, %c0_i32_0 : i32, i32, i32
  }
  func.func @transform_1(%arg0: i32) -> (i32, i32, i32) {
    %c0_i32 = arith.constant 0 : i32
    %c0_i32_0 = arith.constant 0 : i32
    %c0_i32_1 = arith.constant 0 : i32
    %c0_i32_2 = arith.constant 0 : i32
    return %c0_i32, %c0_i32_0, %c0_i32_1 : i32, i32, i32
  }
  func.func @transform_2(%arg0: i32) -> (i32, i32) {
    %c0_i32 = arith.constant 0 : i32
    %c0_i32_0 = arith.constant 0 : i32
    %c0_i32_1 = arith.constant 0 : i32
    return %c0_i32, %c0_i32_0 : i32, i32
  }
  func.func @transform_3(%arg0: i32) -> (i32, i32, i32) {
    %c0_i32 = arith.constant 0 : i32
    %c0_i32_0 = arith.constant 0 : i32
    %c0_i32_1 = arith.constant 0 : i32
    %c0_i32_2 = arith.constant 0 : i32
    return %c0_i32, %c0_i32_0, %c0_i32_1 : i32, i32, i32
  }
  func.func @transform_4(%arg0: i32) -> (i32, i32) {
    %c0_i32 = arith.constant 0 : i32
    %c0_i32_0 = arith.constant 0 : i32
    %c0_i32_1 = arith.constant 0 : i32
    return %c0_i32, %c0_i32_0 : i32, i32
  }
  func.func @transform_5(%arg0: i32) -> (i32, i32, i32) {
    %c0_i32 = arith.constant 0 : i32
    %c0_i32_0 = arith.constant 0 : i32
    %c0_i32_1 = arith.constant 0 : i32
    %c0_i32_2 = arith.constant 0 : i32
    return %c0_i32, %c0_i32_0, %c0_i32_1 : i32, i32, i32
  }
  func.func @transform_6(%arg0: i32) -> (i32, i32) {
    %c0_i32 = arith.constant 0 : i32
    %c0_i32_0 = arith.constant 0 : i32
    %c0_i32_1 = arith.constant 0 : i32
    return %c0_i32, %c0_i32_0 : i32, i32
  }
  func.func @transform_7(%arg0: i32) -> (i32, i32) {
    %c0_i32 = arith.constant 0 : i32
    %c0_i32_0 = arith.constant 0 : i32
    %c0_i32_1 = arith.constant 0 : i32
    return %c0_i32, %c0_i32_0 : i32, i32
  }
  func.func @transform_8(%arg0: i32) -> (i32, i32) {
    %c0_i32 = arith.constant 0 : i32
    %c0_i32_0 = arith.constant 0 : i32
    %c0_i32_1 = arith.constant 0 : i32
    return %c0_i32, %c0_i32_0 : i32, i32
  }
  func.func @transform_9(%arg0: i32) -> (i32, i32) {
    %c0_i32 = arith.constant 0 : i32
    %c0_i32_0 = arith.constant 0 : i32
    %c0_i32_1 = arith.constant 0 : i32
    return %c0_i32, %c0_i32_0 : i32, i32
  }
  func.func @transform_10(%arg0: i32) -> (i32, i32) {
    %c0_i32 = arith.constant 0 : i32
    %c0_i32_0 = arith.constant 0 : i32
    %c0_i32_1 = arith.constant 0 : i32
    return %c0_i32, %c0_i32_0 : i32, i32
  }
  func.func @transform_11(%arg0: i32) -> (i32, i32) {
    %c0_i32 = arith.constant 0 : i32
    %c0_i32_0 = arith.constant 0 : i32
    return %arg0, %c0_i32 : i32, i32
  }
}

</mosaic_0001>

<llo_original>
// kernel: net_forward.1
$region0: #{net_forward.1}
  #allocation0 [shape = 'u32[]', space=smem, size = 0x4, offset = 0x4, fixed_abs, tag = 'smem constant byte address 0x4 - core index']
  #allocation1 [shape = 'u32[144,128]{1,0:T(1,128)}', space=vmem, size = 0x12000, scoped, tag = 'internal scratch']
  %s0 = inlined_call_operand.vmem [shape: bf16[1,128,256], index: 0, kind: input, shape index: {}]
  %s1 = inlined_call_operand.vmem [shape: bf16[5,128,256], index: 1, kind: input, shape index: {}]
  %s2 = inlined_call_operand.vmem [shape: f32[1,128], index: 2, kind: input, shape index: {}]
  %s3 = inlined_call_operand.vmem [shape: bf16[5,128,256], index: 3, kind: input, shape index: {}]
  %s4 = inlined_call_operand.vmem [shape: f32[1,128], index: 4, kind: input, shape index: {}]
  %s5 = inlined_call_operand.vmem [shape: bf16[5,128,128], index: 5, kind: input, shape index: {}]
  %s6 = inlined_call_operand.vmem [shape: f32[1,128], index: 6, kind: input, shape index: {}]
  %s7 = inlined_call_operand.vmem [shape: bf16[128,128], index: 7, kind: input, shape index: {}]
  %s8 = inlined_call_operand.vmem [shape: f32[1,128], index: 8, kind: input, shape index: {}]
  %s9 = inlined_call_operand.vmem [shape: bf16[128,128], index: 9, kind: input, shape index: {}]
  %s10 = inlined_call_operand.vmem [shape: f32[1,128], index: 10, kind: input, shape index: {}]
  %s11 = inlined_call_operand.vmem [shape: f32[8,128], index: 11, kind: output, shape index: {}]
  %s12 = sld [smem:[#allocation0]]
  $region54: #{net_forward.1} parent=0
    _
  %s14 = ssub.s32 1, %s12
  %s15 = scalar_select 0, %s14, %s12
  // Predicated region
  $region2: #{net_forward.1} parent=0 // pred_check
    _
  $region3: #{net_forward.1} parent=0 // pred_check_branch
    %17 = sbr.rel (0) target = $region5
  $region4: #{net_forward.1} parent=0 // pred_region
    _
  $region5: #{net_forward.1} parent=0 // pred_fallthru
    _
  // Predicated region
  $region6: #{net_forward.1} parent=0 // pred_check
    _
  $region7: #{net_forward.1} parent=0 // pred_check_branch
    %19 = sbr.rel (0) target = $region9
  $region8: #{net_forward.1} parent=0 // pred_region
    _
  $region9: #{net_forward.1} parent=0 // pred_fallthru
    _
  // Predicated region
  $region10: #{net_forward.1} parent=0 // pred_check
    _
  $region11: #{net_forward.1} parent=0 // pred_check_branch
    %21 = sbr.rel (0) target = $region13
  $region12: #{net_forward.1} parent=0 // pred_region
    _
  $region13: #{net_forward.1} parent=0 // pred_fallthru
    _
  // Predicated region
  $region14: #{net_forward.1} parent=0 // pred_check
    _
  $region15: #{net_forward.1} parent=0 // pred_check_branch
    %23 = sbr.rel (0) target = $region17
  $region16: #{net_forward.1} parent=0 // pred_region
    _
  $region17: #{net_forward.1} parent=0 // pred_fallthru
    _
  // Predicated region
  $region18: #{net_forward.1} parent=0 // pred_check
    _
  $region19: #{net_forward.1} parent=0 // pred_check_branch
    %25 = sbr.rel (0) target = $region21
  $region20: #{net_forward.1} parent=0 // pred_region
    _
  $region21: #{net_forward.1} parent=0 // pred_fallthru
    _
  // Predicated region
  $region22: #{net_forward.1} parent=0 // pred_check
    _
  $region23: #{net_forward.1} parent=0 // pred_check_branch
    %27 = sbr.rel (0) target = $region25
  $region24: #{net_forward.1} parent=0 // pred_region
    _
  $region25: #{net_forward.1} parent=0 // pred_fallthru
    _
  // Predicated region
  $region26: #{net_forward.1} parent=0 // pred_check
    _
  $region27: #{net_forward.1} parent=0 // pred_check_branch
    %29 = sbr.rel (0) target = $region29
  $region28: #{net_forward.1} parent=0 // pred_region
    _
  $region29: #{net_forward.1} parent=0 // pred_fallthru
    _
  // Predicated region
  $region30: #{net_forward.1} parent=0 // pred_check
    _
  $region31: #{net_forward.1} parent=0 // pred_check_branch
    %31 = sbr.rel (0) target = $region33
  $region32: #{net_forward.1} parent=0 // pred_region
    _
  $region33: #{net_forward.1} parent=0 // pred_fallthru
    _
  // Predicated region
  $region34: #{net_forward.1} parent=0 // pred_check
    _
  $region35: #{net_forward.1} parent=0 // pred_check_branch
    %33 = sbr.rel (0) target = $region37
  $region36: #{net_forward.1} parent=0 // pred_region
    _
  $region37: #{net_forward.1} parent=0 // pred_fallthru
    _
  // Predicated region
  $region38: #{net_forward.1} parent=0 // pred_check
    _
  $region39: #{net_forward.1} parent=0 // pred_check_branch
    %35 = sbr.rel (0) target = $region41
  $region40: #{net_forward.1} parent=0 // pred_region
    _
  $region41: #{net_forward.1} parent=0 // pred_fallthru
    _
  // Predicated region
  $region42: #{net_forward.1} parent=0 // pred_check
    _
  $region43: #{net_forward.1} parent=0 // pred_check_branch
    %37 = sbr.rel (0) target = $region45
  $region44: #{net_forward.1} parent=0 // pred_region
    _
  $region45: #{net_forward.1} parent=0 // pred_fallthru
    _
  %v39 = vld [vmem:[%s0] sm:$0xf]
  %v40 = vld [vmem:[%s0 + $0x8] sm:$0xf]
  %v41 = vld [vmem:[%s0 + $0x10] sm:$0xf]
  %v42 = vld [vmem:[%s0 + $0x18] sm:$0xf]
  %v43 = vld [vmem:[%s0 + $0x20] sm:$0xf]
  %v44 = vld [vmem:[%s0 + $0x28] sm:$0xf]
  %v45 = vld [vmem:[%s0 + $0x30] sm:$0xf]
  %v46 = vld [vmem:[%s0 + $0x38] sm:$0xf]
  %v47 = vld [vmem:[%s0 + $0x40] sm:$0xf]
  %v48 = vld [vmem:[%s0 + $0x48] sm:$0xf]
  %v49 = vld [vmem:[%s0 + $0x50] sm:$0xf]
  %v50 = vld [vmem:[%s0 + $0x58] sm:$0xf]
  %v51 = vld [vmem:[%s0 + $0x60] sm:$0xf]
  %v52 = vld [vmem:[%s0 + $0x68] sm:$0xf]
  %v53 = vld [vmem:[%s1] sm:$0xff]
  %v54 = vld [vmem:[%s1 + $0x8] sm:$0xff]
  %v55 = vld [vmem:[%s1 + $0x10] sm:$0xff]
  %v56 = vld [vmem:[%s1 + $0x18] sm:$0xff]
  %v57 = vld [vmem:[%s1 + $0x20] sm:$0xff]
  %v58 = vld [vmem:[%s1 + $0x28] sm:$0xff]
  %v59 = vld [vmem:[%s1 + $0x30] sm:$0xff]
  %v60 = vld [vmem:[%s1 + $0x38] sm:$0xff]
  %v61 = vld [vmem:[%s1 + $0x40] sm:$0xff]
  %v62 = vld [vmem:[%s1 + $0x48] sm:$0xff]
  %v63 = vld [vmem:[%s1 + $0x50] sm:$0xff]
  %v64 = vld [vmem:[%s1 + $0x58] sm:$0xff]
  %v65 = vld [vmem:[%s1 + $0x60] sm:$0xff]
  %v66 = vld [vmem:[%s1 + $0x68] sm:$0xff]
  %v67 = vld [vmem:[%s1 + $0x70] sm:$0xff]
  %v68 = vld [vmem:[%s1 + $0x78] sm:$0xff]
  %v69 = vld [vmem:[%s0 + $0x4] sm:$0xf]
  %v70 = vld [vmem:[%s0 + $0xc] sm:$0xf]
  %v71 = vld [vmem:[%s0 + $0x14] sm:$0xf]
  %v72 = vld [vmem:[%s0 + $0x1c] sm:$0xf]
  %v73 = vld [vmem:[%s0 + $0x24] sm:$0xf]
  %v74 = vld [vmem:[%s0 + $0x2c] sm:$0xf]
  %v75 = vld [vmem:[%s0 + $0x34] sm:$0xf]
  %v76 = vld [vmem:[%s0 + $0x3c] sm:$0xf]
  %v77 = vld [vmem:[%s0 + $0x44] sm:$0xf]
  %v78 = vld [vmem:[%s0 + $0x4c] sm:$0xf]
  %v79 = vld [vmem:[%s0 + $0x54] sm:$0xf]
  %v80 = vld [vmem:[%s0 + $0x5c] sm:$0xf]
  %v81 = vld [vmem:[%s0 + $0x64] sm:$0xf]
  %v82 = vld [vmem:[%s0 + $0x6c] sm:$0xf]
  %s83 = scalar_lea.vmem %s1, 128
  %v84 = vld [vmem:[%s83] sm:$0xff]
  %v85 = vld [vmem:[%s83 + $0x8] sm:$0xff]
  %v86 = vld [vmem:[%s83 + $0x10] sm:$0xff]
  %v87 = vld [vmem:[%s83 + $0x18] sm:$0xff]
  %v88 = vld [vmem:[%s83 + $0x20] sm:$0xff]
  %v89 = vld [vmem:[%s83 + $0x28] sm:$0xff]
  %v90 = vld [vmem:[%s83 + $0x30] sm:$0xff]
  %v91 = vld [vmem:[%s83 + $0x38] sm:$0xff]
  %v92 = vld [vmem:[%s83 + $0x40] sm:$0xff]
  %v93 = vld [vmem:[%s83 + $0x48] sm:$0xff]
  %v94 = vld [vmem:[%s83 + $0x50] sm:$0xff]
  %v95 = vld [vmem:[%s83 + $0x58] sm:$0xff]
  %v96 = vld [vmem:[%s83 + $0x60] sm:$0xff]
  %v97 = vld [vmem:[%s83 + $0x68] sm:$0xff]
  %v98 = vld [vmem:[%s83 + $0x70] sm:$0xff]
  %v99 = vld [vmem:[%s83 + $0x78] sm:$0xff]
  %v114 = vunpack.c.l.b16 %v69
  %v115 = vunpack.c.l.b16 %v70
  %v116 = vunpack.c.l.b16 %v71
  %v117 = vunpack.c.l.b16 %v72
  %v118 = vunpack.c.l.b16 %v73
  %v119 = vunpack.c.l.b16 %v74
  %v120 = vunpack.c.l.b16 %v75
  %v121 = vunpack.c.l.b16 %v76
  %v122 = vunpack.c.l.b16 %v77
  %v123 = vunpack.c.l.b16 %v78
  %v124 = vunpack.c.l.b16 %v79
  %v125 = vunpack.c.l.b16 %v80
  %v126 = vunpack.c.l.b16 %v81
  %v127 = vunpack.c.l.b16 %v82
  %v128 = vpack.c.b16 %v115, %v114
  %v129 = vpack.c.b16 %v117, %v116
  %v130 = vpack.c.b16 %v119, %v118
  %v131 = vpack.c.b16 %v121, %v120
  %v132 = vpack.c.b16 %v123, %v122
  %v133 = vpack.c.b16 %v125, %v124
  %v134 = vpack.c.b16 %v127, %v126
  %v158 = vunpack.c.l.b16 %v84
  %v159 = vunpack.c.h.b16 %v84
  %v160 = vunpack.c.l.b16 %v85
  %v161 = vunpack.c.h.b16 %v85
  %v162 = vunpack.c.l.b16 %v86
  %v163 = vunpack.c.h.b16 %v86
  %v164 = vunpack.c.l.b16 %v87
  %v165 = vunpack.c.h.b16 %v87
  %v166 = vunpack.c.l.b16 %v88
  %v167 = vunpack.c.h.b16 %v88
  %v168 = vunpack.c.l.b16 %v89
  %v169 = vunpack.c.h.b16 %v89
  %v170 = vunpack.c.l.b16 %v90
  %v171 = vunpack.c.h.b16 %v90
  %v172 = vunpack.c.l.b16 %v91
  %v173 = vunpack.c.h.b16 %v91
  %v174 = vunpack.c.l.b16 %v92
  %v175 = vunpack.c.h.b16 %v92
  %v176 = vunpack.c.l.b16 %v93
  %v177 = vunpack.c.h.b16 %v93
  %v178 = vunpack.c.l.b16 %v94
  %v179 = vunpack.c.h.b16 %v94
  %v180 = vunpack.c.l.b16 %v95
  %v181 = vunpack.c.h.b16 %v95
  %v182 = vunpack.c.l.b16 %v96
  %v183 = vunpack.c.h.b16 %v96
  %v184 = vunpack.c.l.b16 %v97
  %v185 = vunpack.c.h.b16 %v97
  %v186 = vunpack.c.l.b16 %v98
  %v187 = vunpack.c.h.b16 %v98
  %v188 = vunpack.c.l.b16 %v99
  %v189 = vunpack.c.h.b16 %v99
  %v190 = vpack.c.b16 %v160, %v158
  %v191 = vpack.c.b16 %v161, %v159
  %v192 = vpack.c.b16 %v164, %v162
  %v193 = vpack.c.b16 %v165, %v163
  %v194 = vpack.c.b16 %v168, %v166
  %v195 = vpack.c.b16 %v169, %v167
  %v196 = vpack.c.b16 %v172, %v170
  %v197 = vpack.c.b16 %v173, %v171
  %v198 = vpack.c.b16 %v176, %v174
  %v199 = vpack.c.b16 %v177, %v175
  %v200 = vpack.c.b16 %v180, %v178
  %v201 = vpack.c.b16 %v181, %v179
  %v202 = vpack.c.b16 %v184, %v182
  %v203 = vpack.c.b16 %v185, %v183
  %v204 = vpack.c.b16 %v188, %v186
  %v205 = vpack.c.b16 %v189, %v187
  %222 = vmatprep.subr.bf16.mxu0 %v191
  %223 = vmatpush1.bf16.msra.mxu0 %v190
  %224 = vmatprep.subr.bf16.mxu0 %v193
  %225 = vmatpush1.bf16.msra.mxu0 %v192
  %226 = vmatprep.subr.bf16.mxu0 %v195
  %227 = vmatpush1.bf16.msra.mxu0 %v194
  %228 = vmatprep.subr.bf16.mxu0 %v197
  %229 = vmatpush1.bf16.msra.mxu0 %v196
  %230 = vmatprep.subr.bf16.mxu0 %v199
  %231 = vmatpush1.bf16.msra.mxu0 %v198
  %232 = vmatprep.subr.bf16.mxu0 %v201
  %233 = vmatpush1.bf16.msra.mxu0 %v200
  %234 = vmatprep.subr.bf16.mxu0 %v203
  %235 = vmatpush1.bf16.msra.mxu0 %v202
  %236 = vmatprep.subr.bf16.mxu0 %v205
  %237 = vmatpush1.bf16.msra.mxu0 %v204
  %238 = vmatprep.subr.bf16.mxu0 0
  %239 = vmatpush1.bf16.msra.mxu0 0
  %240 = vmatprep.subr.bf16.mxu0 0
  %241 = vmatpush1.bf16.msra.mxu0 0
  %242 = vmatprep.subr.bf16.mxu0 0
  %243 = vmatpush1.bf16.msra.mxu0 0
  %244 = vmatprep.subr.bf16.mxu0 0
  %245 = vmatpush1.bf16.msra.mxu0 0
  %246 = vmatprep.subr.bf16.mxu0 0
  %247 = vmatpush1.bf16.msra.mxu0 0
  %248 = vmatprep.subr.bf16.mxu0 0
  %249 = vmatpush1.bf16.msra.mxu0 0
  %250 = vmatprep.subr.bf16.mxu0 0
  %251 = vmatpush1.bf16.msra.mxu0 0
  %252 = vmatprep.subr.bf16.mxu0 0
  %253 = vmatpush1.bf16.msra.mxu0 0
  %254 = vmatprep.mubr.bf16.mxu0 0
  %255 = vmatmul.mubr.bf16.gmra.mrb[0].mxu0 %v128
  %v256 = vpop.f32.mrb[0].mxu0
  %v257 = vadd.f32 0.0, %v256
  %v258 = vpop.f32.mrb[0].mxu0
  %v259 = vadd.f32 0.0, %v258
  %v260 = vpop.f32.mrb[0].mxu0
  %v261 = vadd.f32 0.0, %v260
  %v262 = vpop.f32.mrb[0].mxu0
  %v263 = vadd.f32 0.0, %v262
  %264 = vmatprep.mubr.bf16.mxu0 0
  %265 = vmatmul.mubr.bf16.gmra.mrb[0].mxu0 %v129
  %v266 = vpop.f32.mrb[0].mxu0
  %v267 = vadd.f32 0.0, %v266
  %v268 = vpop.f32.mrb[0].mxu0
  %v269 = vadd.f32 0.0, %v268
  %v270 = vpop.f32.mrb[0].mxu0
  %v271 = vadd.f32 0.0, %v270
  %v272 = vpop.f32.mrb[0].mxu0
  %v273 = vadd.f32 0.0, %v272
  %274 = vmatprep.mubr.bf16.mxu0 0
  %275 = vmatmul.mubr.bf16.gmra.mrb[0].mxu0 %v130
  %v276 = vpop.f32.mrb[0].mxu0
  %v277 = vadd.f32 0.0, %v276
  %v278 = vpop.f32.mrb[0].mxu0
  %v279 = vadd.f32 0.0, %v278
  %v280 = vpop.f32.mrb[0].mxu0
  %v281 = vadd.f32 0.0, %v280
  %v282 = vpop.f32.mrb[0].mxu0
  %v283 = vadd.f32 0.0, %v282
  %284 = vmatprep.mubr.bf16.mxu0 0
  %285 = vmatmul.mubr.bf16.gmra.mrb[0].mxu0 %v131
  %v286 = vpop.f32.mrb[0].mxu0
  %v287 = vadd.f32 0.0, %v286
  %v288 = vpop.f32.mrb[0].mxu0
  %v289 = vadd.f32 0.0, %v288
  %v290 = vpop.f32.mrb[0].mxu0
  %v291 = vadd.f32 0.0, %v290
  %v292 = vpop.f32.mrb[0].mxu0
  %v293 = vadd.f32 0.0, %v292
  %294 = vmatprep.mubr.bf16.mxu0 0
  %295 = vmatmul.mubr.bf16.gmra.mrb[0].mxu0 %v132
  %v296 = vpop.f32.mrb[0].mxu0
  %v297 = vadd.f32 0.0, %v296
  %v298 = vpop.f32.mrb[0].mxu0
  %v299 = vadd.f32 0.0, %v298
  %v300 = vpop.f32.mrb[0].mxu0
  %v301 = vadd.f32 0.0, %v300
  %v302 = vpop.f32.mrb[0].mxu0
  %v303 = vadd.f32 0.0, %v302
  %304 = vmatprep.mubr.bf16.mxu0 0
  %305 = vmatmul.mubr.bf16.gmra.mrb[0].mxu0 %v133
  %v306 = vpop.f32.mrb[0].mxu0
  %v307 = vadd.f32 0.0, %v306
  %v308 = vpop.f32.mrb[0].mxu0
  %v309 = vadd.f32 0.0, %v308
  %v310 = vpop.f32.mrb[0].mxu0
  %v311 = vadd.f32 0.0, %v310
  %v312 = vpop.f32.mrb[0].mxu0
  %v313 = vadd.f32 0.0, %v312
  %314 = vmatprep.mubr.bf16.mxu0 0
  %315 = vmatmul.mubr.bf16.gmra.mrb[0].mxu0 %v134
  %v316 = vpop.f32.mrb[0].mxu0
  %v317 = vadd.f32 0.0, %v316
  %v318 = vpop.f32.mrb[0].mxu0
  %v319 = vadd.f32 0.0, %v318
  %v320 = vpop.f32.mrb[0].mxu0
  %v321 = vadd.f32 0.0, %v320
  %v322 = vpop.f32.mrb[0].mxu0
  %v323 = vadd.f32 0.0, %v322
  %324 = vdwg.mxu0
  %v339 = vunpack.c.l.b16 %v39
  %v340 = vunpack.c.l.b16 %v40
  %v341 = vunpack.c.l.b16 %v41
  %v342 = vunpack.c.l.b16 %v42
  %v343 = vunpack.c.l.b16 %v43
  %v344 = vunpack.c.l.b16 %v44
  %v345 = vunpack.c.l.b16 %v45
  %v346 = vunpack.c.l.b16 %v46
  %v347 = vunpack.c.l.b16 %v47
  %v348 = vunpack.c.l.b16 %v48
  %v349 = vunpack.c.l.b16 %v49
  %v350 = vunpack.c.l.b16 %v50
  %v351 = vunpack.c.l.b16 %v51
  %v352 = vunpack.c.l.b16 %v52
  %v353 = vpack.c.b16 %v340, %v339
  %v354 = vpack.c.b16 %v342, %v341
  %v355 = vpack.c.b16 %v344, %v343
  %v356 = vpack.c.b16 %v346, %v345
  %v357 = vpack.c.b16 %v348, %v347
  %v358 = vpack.c.b16 %v350, %v349
  %v359 = vpack.c.b16 %v352, %v351
  %v383 = vunpack.c.l.b16 %v53
  %v384 = vunpack.c.h.b16 %v53
  %v385 = vunpack.c.l.b16 %v54
  %v386 = vunpack.c.h.b16 %v54
  %v387 = vunpack.c.l.b16 %v55
  %v388 = vunpack.c.h.b16 %v55
  %v389 = vunpack.c.l.b16 %v56
  %v390 = vunpack.c.h.b16 %v56
  %v391 = vunpack.c.l.b16 %v57
  %v392 = vunpack.c.h.b16 %v57
  %v393 = vunpack.c.l.b16 %v58
  %v394 = vunpack.c.h.b16 %v58
  %v395 = vunpack.c.l.b16 %v59
  %v396 = vunpack.c.h.b16 %v59
  %v397 = vunpack.c.l.b16 %v60
  %v398 = vunpack.c.h.b16 %v60
  %v399 = vunpack.c.l.b16 %v61
  %v400 = vunpack.c.h.b16 %v61
  %v401 = vunpack.c.l.b16 %v62
  %v402 = vunpack.c.h.b16 %v62
  %v403 = vunpack.c.l.b16 %v63
  %v404 = vunpack.c.h.b16 %v63
  %v405 = vunpack.c.l.b16 %v64
  %v406 = vunpack.c.h.b16 %v64
  %v407 = vunpack.c.l.b16 %v65
  %v408 = vunpack.c.h.b16 %v65
  %v409 = vunpack.c.l.b16 %v66
  %v410 = vunpack.c.h.b16 %v66
  %v411 = vunpack.c.l.b16 %v67
  %v412 = vunpack.c.h.b16 %v67
  %v413 = vunpack.c.l.b16 %v68
  %v414 = vunpack.c.h.b16 %v68
  %v415 = vpack.c.b16 %v385, %v383
  %v416 = vpack.c.b16 %v386, %v384
  %v417 = vpack.c.b16 %v389, %v387
  %v418 = vpack.c.b16 %v390, %v388
  %v419 = vpack.c.b16 %v393, %v391
  %v420 = vpack.c.b16 %v394, %v392
  %v421 = vpack.c.b16 %v397, %v395
  %v422 = vpack.c.b16 %v398, %v396
  %v423 = vpack.c.b16 %v401, %v399
  %v424 = vpack.c.b16 %v402, %v400
  %v425 = vpack.c.b16 %v405, %v403
  %v426 = vpack.c.b16 %v406, %v404
  %v427 = vpack.c.b16 %v409, %v407
  %v428 = vpack.c.b16 %v410, %v408
  %v429 = vpack.c.b16 %v413, %v411
  %v430 = vpack.c.b16 %v414, %v412
  %447 = vmatprep.subr.bf16.mxu0 %v416
  %448 = vmatpush1.bf16.msra.mxu0 %v415
  %449 = vmatprep.subr.bf16.mxu0 %v418
  %450 = vmatpush1.bf16.msra.mxu0 %v417
  %451 = vmatprep.subr.bf16.mxu0 %v420
  %452 = vmatpush1.bf16.msra.mxu0 %v419
  %453 = vmatprep.subr.bf16.mxu0 %v422
  %454 = vmatpush1.bf16.msra.mxu0 %v421
  %455 = vmatprep.subr.bf16.mxu0 %v424
  %456 = vmatpush1.bf16.msra.mxu0 %v423
  %457 = vmatprep.subr.bf16.mxu0 %v426
  %458 = vmatpush1.bf16.msra.mxu0 %v425
  %459 = vmatprep.subr.bf16.mxu0 %v428
  %460 = vmatpush1.bf16.msra.mxu0 %v427
  %461 = vmatprep.subr.bf16.mxu0 %v430
  %462 = vmatpush1.bf16.msra.mxu0 %v429
  %463 = vmatprep.subr.bf16.mxu0 0
  %464 = vmatpush1.bf16.msra.mxu0 0
  %465 = vmatprep.subr.bf16.mxu0 0
  %466 = vmatpush1.bf16.msra.mxu0 0
  %467 = vmatprep.subr.bf16.mxu0 0
  %468 = vmatpush1.bf16.msra.mxu0 0
  %469 = vmatprep.subr.bf16.mxu0 0
  %470 = vmatpush1.bf16.msra.mxu0 0
  %471 = vmatprep.subr.bf16.mxu0 0
  %472 = vmatpush1.bf16.msra.mxu0 0
  %473 = vmatprep.subr.bf16.mxu0 0
  %474 = vmatpush1.bf16.msra.mxu0 0
  %475 = vmatprep.subr.bf16.mxu0 0
  %476 = vmatpush1.bf16.msra.mxu0 0
  %477 = vmatprep.subr.bf16.mxu0 0
  %478 = vmatpush1.bf16.msra.mxu0 0
  %479 = vmatprep.mubr.bf16.mxu0 0
  %480 = vmatmul.mubr.bf16.gmra.mrb[0].mxu0 %v353
  %v481 = vpop.f32.mrb[0].mxu0
  %v482 = vadd.f32 %v257, %v481
  %v483 = vpop.f32.mrb[0].mxu0
  %v484 = vadd.f32 %v259, %v483
  %v485 = vpop.f32.mrb[0].mxu0
  %v486 = vadd.f32 %v261, %v485
  %v487 = vpop.f32.mrb[0].mxu0
  %v488 = vadd.f32 %v263, %v487
  %489 = vmatprep.mubr.bf16.mxu0 0
  %490 = vmatmul.mubr.bf16.gmra.mrb[0].mxu0 %v354
  %v491 = vpop.f32.mrb[0].mxu0
  %v492 = vadd.f32 %v267, %v491
  %v493 = vpop.f32.mrb[0].mxu0
  %v494 = vadd.f32 %v269, %v493
  %v495 = vpop.f32.mrb[0].mxu0
  %v496 = vadd.f32 %v271, %v495
  %v497 = vpop.f32.mrb[0].mxu0
  %v498 = vadd.f32 %v273, %v497
  %499 = vmatprep.mubr.bf16.mxu0 0
  %500 = vmatmul.mubr.bf16.gmra.mrb[0].mxu0 %v355
  %v501 = vpop.f32.mrb[0].mxu0
  %v502 = vadd.f32 %v277, %v501
  %v503 = vpop.f32.mrb[0].mxu0
  %v504 = vadd.f32 %v279, %v503
  %v505 = vpop.f32.mrb[0].mxu0
  %v506 = vadd.f32 %v281, %v505
  %v507 = vpop.f32.mrb[0].mxu0
  %v508 = vadd.f32 %v283, %v507
  %509 = vmatprep.mubr.bf16.mxu0 0
  %510 = vmatmul.mubr.bf16.gmra.mrb[0].mxu0 %v356
  %v511 = vpop.f32.mrb[0].mxu0
  %v512 = vadd.f32 %v287, %v511
  %v513 = vpop.f32.mrb[0].mxu0
  %v514 = vadd.f32 %v289, %v513
  %v515 = vpop.f32.mrb[0].mxu0
  %v516 = vadd.f32 %v291, %v515
  %v517 = vpop.f32.mrb[0].mxu0
  %v518 = vadd.f32 %v293, %v517
  %519 = vmatprep.mubr.bf16.mxu0 0
  %520 = vmatmul.mubr.bf16.gmra.mrb[0].mxu0 %v357
  %v521 = vpop.f32.mrb[0].mxu0
  %v522 = vadd.f32 %v297, %v521
  %v523 = vpop.f32.mrb[0].mxu0
  %v524 = vadd.f32 %v299, %v523
  %v525 = vpop.f32.mrb[0].mxu0
  %v526 = vadd.f32 %v301, %v525
  %v527 = vpop.f32.mrb[0].mxu0
  %v528 = vadd.f32 %v303, %v527
  %529 = vmatprep.mubr.bf16.mxu0 0
  %530 = vmatmul.mubr.bf16.gmra.mrb[0].mxu0 %v358
  %v531 = vpop.f32.mrb[0].mxu0
  %v532 = vadd.f32 %v307, %v531
  %v533 = vpop.f32.mrb[0].mxu0
  %v534 = vadd.f32 %v309, %v533
  %v535 = vpop.f32.mrb[0].mxu0
  %v536 = vadd.f32 %v311, %v535
  %v537 = vpop.f32.mrb[0].mxu0
  %v538 = vadd.f32 %v313, %v537
  %539 = vmatprep.mubr.bf16.mxu0 0
  %540 = vmatmul.mubr.bf16.gmra.mrb[0].mxu0 %v359
  %v541 = vpop.f32.mrb[0].mxu0
  %v542 = vadd.f32 %v317, %v541
  %v543 = vpop.f32.mrb[0].mxu0
  %v544 = vadd.f32 %v319, %v543
  %v545 = vpop.f32.mrb[0].mxu0
  %v546 = vadd.f32 %v321, %v545
  %v547 = vpop.f32.mrb[0].mxu0
  %v548 = vadd.f32 %v323, %v547
  %549 = vdwg.mxu0
  %v550 = vld [vmem:[%s0 + $0x8] sm:$0xf]
  %v551 = vld [vmem:[%s0 + $0x10] sm:$0xf]
  %v552 = vld [vmem:[%s0 + $0x18] sm:$0xf]
  %v553 = vld [vmem:[%s0 + $0x20] sm:$0xf]
  %v554 = vld [vmem:[%s0 + $0x28] sm:$0xf]
  %v555 = vld [vmem:[%s0 + $0x30] sm:$0xf]
  %v556 = vld [vmem:[%s0 + $0x38] sm:$0xf]
  %v557 = vld [vmem:[%s0 + $0x40] sm:$0xf]
  %v558 = vld [vmem:[%s0 + $0x48] sm:$0xf]
  %v559 = vld [vmem:[%s0 + $0x50] sm:$0xf]
  %v560 = vld [vmem:[%s0 + $0x58] sm:$0xf]
  %v561 = vld [vmem:[%s0 + $0x60] sm:$0xf]
  %v562 = vld [vmem:[%s0 + $0x68] sm:$0xf]
  %v563 = vld [vmem:[%s0 + $0x70] sm:$0xf]
  %s564 = scalar_lea.vmem %s1, 256
  %v565 = vld [vmem:[%s564] sm:$0xff]
  %v566 = vld [vmem:[%s564 + $0x8] sm:$0xff]
  %v567 = vld [vmem:[%s564 + $0x10] sm:$0xff]
  %v568 = vld [vmem:[%s564 + $0x18] sm:$0xff]
  %v569 = vld [vmem:[%s564 + $0x20] sm:$0xff]
  %v570 = vld [vmem:[%s564 + $0x28] sm:$0xff]
  %v571 = vld [vmem:[%s564 + $0x30] sm:$0xff]
  %v572 = vld [vmem:[%s564 + $0x38] sm:$0xff]
  %v573 = vld [vmem:[%s564 + $0x40] sm:$0xff]
  %v574 = vld [vmem:[%s564 + $0x48] sm:$0xff]
  %v575 = vld [vmem:[%s564 + $0x50] sm:$0xff]
  %v576 = vld [vmem:[%s564 + $0x58] sm:$0xff]
  %v577 = vld [vmem:[%s564 + $0x60] sm:$0xff]
  %v578 = vld [vmem:[%s564 + $0x68] sm:$0xff]
  %v579 = vld [vmem:[%s564 + $0x70] sm:$0xff]
  %v580 = vld [vmem:[%s564 + $0x78] sm:$0xff]
  %v595 = vunpack.c.l.b16 %v550
  %v596 = vunpack.c.l.b16 %v551
  %v597 = vunpack.c.l.b16 %v552
  %v598 = vunpack.c.l.b16 %v553
  %v599 = vunpack.c.l.b16 %v554
  %v600 = vunpack.c.l.b16 %v555
  %v601 = vunpack.c.l.b16 %v556
  %v602 = vunpack.c.l.b16 %v557
  %v603 = vunpack.c.l.b16 %v558
  %v604 = vunpack.c.l.b16 %v559
  %v605 = vunpack.c.l.b16 %v560
  %v606 = vunpack.c.l.b16 %v561
  %v607 = vunpack.c.l.b16 %v562
  %v608 = vunpack.c.l.b16 %v563
  %v609 = vpack.c.b16 %v596, %v595
  %v610 = vpack.c.b16 %v598, %v597
  %v611 = vpack.c.b16 %v600, %v599
  %v612 = vpack.c.b16 %v602, %v601
  %v613 = vpack.c.b16 %v604, %v603
  %v614 = vpack.c.b16 %v606, %v605
  %v615 = vpack.c.b16 %v608, %v607
  %v639 = vunpack.c.l.b16 %v565
  %v640 = vunpack.c.h.b16 %v565
  %v641 = vunpack.c.l.b16 %v566
  %v642 = vunpack.c.h.b16 %v566
  %v643 = vunpack.c.l.b16 %v567
  %v644 = vunpack.c.h.b16 %v567
  %v645 = vunpack.c.l.b16 %v568
  %v646 = vunpack.c.h.b16 %v568
  %v647 = vunpack.c.l.b16 %v569
  %v648 = vunpack.c.h.b16 %v569
  %v649 = vunpack.c.l.b16 %v570
  %v650 = vunpack.c.h.b16 %v570
  %v651 = vunpack.c.l.b16 %v571
  %v652 = vunpack.c.h.b16 %v571
  %v653 = vunpack.c.l.b16 %v572
  %v654 = vunpack.c.h.b16 %v572
  %v655 = vunpack.c.l.b16 %v573
  %v656 = vunpack.c.h.b16 %v573
  %v657 = vunpack.c.l.b16 %v574
  %v658 = vunpack.c.h.b16 %v574
  %v659 = vunpack.c.l.b16 %v575
  %v660 = vunpack.c.h.b16 %v575
  %v661 = vunpack.c.l.b16 %v576
  %v662 = vunpack.c.h.b16 %v576
  %v663 = vunpack.c.l.b16 %v577
  %v664 = vunpack.c.h.b16 %v577
  %v665 = vunpack.c.l.b16 %v578
  %v666 = vunpack.c.h.b16 %v578
  %v667 = vunpack.c.l.b16 %v579
  %v668 = vunpack.c.h.b16 %v579
  %v669 = vunpack.c.l.b16 %v580
  %v670 = vunpack.c.h.b16 %v580
  %v671 = vpack.c.b16 %v641, %v639
  %v672 = vpack.c.b16 %v642, %v640
  %v673 = vpack.c.b16 %v645, %v643
  %v674 = vpack.c.b16 %v646, %v644
  %v675 = vpack.c.b16 %v649, %v647
  %v676 = vpack.c.b16 %v650, %v648
  %v677 = vpack.c.b16 %v653, %v651
  %v678 = vpack.c.b16 %v654, %v652
  %v679 = vpack.c.b16 %v657, %v655
  %v680 = vpack.c.b16 %v658, %v656
  %v681 = vpack.c.b16 %v661, %v659
  %v682 = vpack.c.b16 %v662, %v660
  %v683 = vpack.c.b16 %v665, %v663
  %v684 = vpack.c.b16 %v666, %v664
  %v685 = vpack.c.b16 %v669, %v667
  %v686 = vpack.c.b16 %v670, %v668
  %703 = vmatprep.subr.bf16.mxu0 %v672
  %704 = vmatpush1.bf16.msra.mxu0 %v671
  %705 = vmatprep.subr.bf16.mxu0 %v674
  %706 = vmatpush1.bf16.msra.mxu0 %v673
  %707 = vmatprep.subr.bf16.mxu0 %v676
  %708 = vmatpush1.bf16.msra.mxu0 %v675
  %709 = vmatprep.subr.bf16.mxu0 %v678
  %710 = vmatpush1.bf16.msra.mxu0 %v677
  %711 = vmatprep.subr.bf16.mxu0 %v680
  %712 = vmatpush1.bf16.msra.mxu0 %v679
  %713 = vmatprep.subr.bf16.mxu0 %v682
  %714 = vmatpush1.bf16.msra.mxu0 %v681
  %715 = vmatprep.subr.bf16.mxu0 %v684
  %716 = vmatpush1.bf16.msra.mxu0 %v683
  %717 = vmatprep.subr.bf16.mxu0 %v686
  %718 = vmatpush1.bf16.msra.mxu0 %v685
  %719 = vmatprep.subr.bf16.mxu0 0
  %720 = vmatpush1.bf16.msra.mxu0 0
  %721 = vmatprep.subr.bf16.mxu0 0
  %722 = vmatpush1.bf16.msra.mxu0 0
  %723 = vmatprep.subr.bf16.mxu0 0
  %724 = vmatpush1.bf16.msra.mxu0 0
  %725 = vmatprep.subr.bf16.mxu0 0
  %726 = vmatpush1.bf16.msra.mxu0 0
  %727 = vmatprep.subr.bf16.mxu0 0
  %728 = vmatpush1.bf16.msra.mxu0 0
  %729 = vmatprep.subr.bf16.mxu0 0
  %730 = vmatpush1.bf16.msra.mxu0 0
  %731 = vmatprep.subr.bf16.mxu0 0
  %732 = vmatpush1.bf16.msra.mxu0 0
  %733 = vmatprep.subr.bf16.mxu0 0
  %734 = vmatpush1.bf16.msra.mxu0 0
  %735 = vmatprep.mubr.bf16.mxu0 0
  %736 = vmatmul.mubr.bf16.gmra.mrb[0].mxu0 %v609
  %v737 = vpop.f32.mrb[0].mxu0
  %v738 = vadd.f32 0.0, %v737
  %v739 = vpop.f32.mrb[0].mxu0
  %v740 = vadd.f32 0.0, %v739
  %v741 = vpop.f32.mrb[0].mxu0
  %v742 = vadd.f32 0.0, %v741
  %v743 = vpop.f32.mrb[0].mxu0
  %v744 = vadd.f32 0.0, %v743
  %745 = vmatprep.mubr.bf16.mxu0 0
  %746 = vmatmul.mubr.bf16.gmra.mrb[0].mxu0 %v610
  %v747 = vpop.f32.mrb[0].mxu0
  %v748 = vadd.f32 0.0, %v747
  %v749 = vpop.f32.mrb[0].mxu0
  %v750 = vadd.f32 0.0, %v749
  %v751 = vpop.f32.mrb[0].mxu0
  %v752 = vadd.f32 0.0, %v751
  %v753 = vpop.f32.mrb[0].mxu0
  %v754 = vadd.f32 0.0, %v753
  %755 = vmatprep.mubr.bf16.mxu0 0
  %756 = vmatmul.mubr.bf16.gmra.mrb[0].mxu0 %v611
  %v757 = vpop.f32.mrb[0].mxu0
  %v758 = vadd.f32 0.0, %v757
  %v759 = vpop.f32.mrb[0].mxu0
  %v760 = vadd.f32 0.0, %v759
  %v761 = vpop.f32.mrb[0].mxu0
  %v762 = vadd.f32 0.0, %v761
  %v763 = vpop.f32.mrb[0].mxu0
  %v764 = vadd.f32 0.0, %v763
  %765 = vmatprep.mubr.bf16.mxu0 0
  %766 = vmatmul.mubr.bf16.gmra.mrb[0].mxu0 %v612
  %v767 = vpop.f32.mrb[0].mxu0
  %v768 = vadd.f32 0.0, %v767
  %v769 = vpop.f32.mrb[0].mxu0
  %v770 = vadd.f32 0.0, %v769
  %v771 = vpop.f32.mrb[0].mxu0
  %v772 = vadd.f32 0.0, %v771
  %v773 = vpop.f32.mrb[0].mxu0
  %v774 = vadd.f32 0.0, %v773
  %775 = vmatprep.mubr.bf16.mxu0 0
  %776 = vmatmul.mubr.bf16.gmra.mrb[0].mxu0 %v613
  %v777 = vpop.f32.mrb[0].mxu0
  %v778 = vadd.f32 0.0, %v777
  %v779 = vpop.f32.mrb[0].mxu0
  %v780 = vadd.f32 0.0, %v779
  %v781 = vpop.f32.mrb[0].mxu0
  %v782 = vadd.f32 0.0, %v781
  %v783 = vpop.f32.mrb[0].mxu0
  %v784 = vadd.f32 0.0, %v783
  %785 = vmatprep.mubr.bf16.mxu0 0
  %786 = vmatmul.mubr.bf16.gmra.mrb[0].mxu0 %v614
  %v787 = vpop.f32.mrb[0].mxu0
  %v788 = vadd.f32 0.0, %v787
  %v789 = vpop.f32.mrb[0].mxu0
  %v790 = vadd.f32 0.0, %v789
  %v791 = vpop.f32.mrb[0].mxu0
  %v792 = vadd.f32 0.0, %v791
  %v793 = vpop.f32.mrb[0].mxu0
  %v794 = vadd.f32 0.0, %v793
  %795 = vmatprep.mubr.bf16.mxu0 0
  %796 = vmatmul.mubr.bf16.gmra.mrb[0].mxu0 %v615
  %v797 = vpop.f32.mrb[0].mxu0
  %v798 = vadd.f32 0.0, %v797
  %v799 = vpop.f32.mrb[0].mxu0
  %v800 = vadd.f32 0.0, %v799
  %v801 = vpop.f32.mrb[0].mxu0
  %v802 = vadd.f32 0.0, %v801
  %v803 = vpop.f32.mrb[0].mxu0
  %v804 = vadd.f32 0.0, %v803
  %805 = vdwg.mxu0
  %v806 = vadd.f32 %v482, %v738
  %v807 = vadd.f32 %v484, %v740
  %v808 = vadd.f32 %v486, %v742
  %v809 = vadd.f32 %v488, %v744
  %v810 = vadd.f32 %v492, %v748
  %v811 = vadd.f32 %v494, %v750
  %v812 = vadd.f32 %v496, %v752
  %v813 = vadd.f32 %v498, %v754
  %v814 = vadd.f32 %v502, %v758
  %v815 = vadd.f32 %v504, %v760
  %v816 = vadd.f32 %v506, %v762
  %v817 = vadd.f32 %v508, %v764
  %v818 = vadd.f32 %v512, %v768
  %v819 = vadd.f32 %v514, %v770
  %v820 = vadd.f32 %v516, %v772
  %v821 = vadd.f32 %v518, %v774
  %v822 = vadd.f32 %v522, %v778
  %v823 = vadd.f32 %v524, %v780
  %v824 = vadd.f32 %v526, %v782
  %v825 = vadd.f32 %v528, %v784
  %v826 = vadd.f32 %v532, %v788
  %v827 = vadd.f32 %v534, %v790
  %v828 = vadd.f32 %v536, %v792
  %v829 = vadd.f32 %v538, %v794
  %v830 = vadd.f32 %v542, %v798
  %v831 = vadd.f32 %v544, %v800
  %v832 = vadd.f32 %v546, %v802
  %v833 = vadd.f32 %v548, %v804
  %v834 = vld [vmem:[%s0 + $0xc] sm:$0xf]
  %v835 = vld [vmem:[%s0 + $0x14] sm:$0xf]
  %v836 = vld [vmem:[%s0 + $0x1c] sm:$0xf]
  %v837 = vld [vmem:[%s0 + $0x24] sm:$0xf]
  %v838 = vld [vmem:[%s0 + $0x2c] sm:$0xf]
  %v839 = vld [vmem:[%s0 + $0x34] sm:$0xf]
  %v840 = vld [vmem:[%s0 + $0x3c] sm:$0xf]
  %v841 = vld [vmem:[%s0 + $0x44] sm:$0xf]
  %v842 = vld [vmem:[%s0 + $0x4c] sm:$0xf]
  %v843 = vld [vmem:[%s0 + $0x54] sm:$0xf]
  %v844 = vld [vmem:[%s0 + $0x5c] sm:$0xf]
  %v845 = vld [vmem:[%s0 + $0x64] sm:$0xf]
  %v846 = vld [vmem:[%s0 + $0x6c] sm:$0xf]
  %v847 = vld [vmem:[%s0 + $0x74] sm:$0xf]
  %s848 = scalar_lea.vmem %s1, 384
  %v849 = vld [vmem:[%s848] sm:$0xff]
  %v850 = vld [vmem:[%s848 + $0x8] sm:$0xff]
  %v851 = vld [vmem:[%s848 + $0x10] sm:$0xff]
  %v852 = vld [vmem:[%s848 + $0x18] sm:$0xff]
  %v853 = vld [vmem:[%s848 + $0x20] sm:$0xff]
  %v854 = vld [vmem:[%s848 + $0x28] sm:$0xff]
  %v855 = vld [vmem:[%s848 + $0x30] sm:$0xff]
  %v856 = vld [vmem:[%s848 + $0x38] sm:$0xff]
  %v857 = vld [vmem:[%s848 + $0x40] sm:$0xff]
  %v858 = vld [vmem:[%s848 + $0x48] sm:$0xff]
  %v859 = vld [vmem:[%s848 + $0x50] sm:$0xff]
  %v860 = vld [vmem:[%s848 + $0x58] sm:$0xff]
  %v861 = vld [vmem:[%s848 + $0x60] sm:$0xff]
  %v862 = vld [vmem:[%s848 + $0x68] sm:$0xff]
  %v863 = vld [vmem:[%s848 + $0x70] sm:$0xff]
  %v864 = vld [vmem:[%s848 + $0x78] sm:$0xff]
  %v879 = vunpack.c.l.b16 %v834
  %v880 = vunpack.c.l.b16 %v835
  %v881 = vunpack.c.l.b16 %v836
  %v882 = vunpack.c.l.b16 %v837
  %v883 = vunpack.c.l.b16 %v838
  %v884 = vunpack.c.l.b16 %v839
  %v885 = vunpack.c.l.b16 %v840
  %v886 = vunpack.c.l.b16 %v841
  %v887 = vunpack.c.l.b16 %v842
  %v888 = vunpack.c.l.b16 %v843
  %v889 = vunpack.c.l.b16 %v844
  %v890 = vunpack.c.l.b16 %v845
  %v891 = vunpack.c.l.b16 %v846
  %v892 = vunpack.c.l.b16 %v847
  %v893 = vpack.c.b16 %v880, %v879
  %v894 = vpack.c.b16 %v882, %v881
  %v895 = vpack.c.b16 %v884, %v883
  %v896 = vpack.c.b16 %v886, %v885
  %v897 = vpack.c.b16 %v888, %v887
  %v898 = vpack.c.b16 %v890, %v889
  %v899 = vpack.c.b16 %v892, %v891
  %v923 = vunpack.c.l.b16 %v849
  %v924 = vunpack.c.h.b16 %v849
  %v925 = vunpack.c.l.b16 %v850
  %v926 = vunpack.c.h.b16 %v850
  %v927 = vunpack.c.l.b16 %v851
  %v928 = vunpack.c.h.b16 %v851
  %v929 = vunpack.c.l.b16 %v852
  %v930 = vunpack.c.h.b16 %v852
  %v931 = vunpack.c.l.b16 %v853
  %v932 = vunpack.c.h.b16 %v853
  %v933 = vunpack.c.l.b16 %v854
  %v934 = vunpack.c.h.b16 %v854
  %v935 = vunpack.c.l.b16 %v855
  %v936 = vunpack.c.h.b16 %v855
  %v937 = vunpack.c.l.b16 %v856
  %v938 = vunpack.c.h.b16 %v856
  %v939 = vunpack.c.l.b16 %v857
  %v940 = vunpack.c.h.b16 %v857
  %v941 = vunpack.c.l.b16 %v858
  %v942 = vunpack.c.h.b16 %v858
  %v943 = vunpack.c.l.b16 %v859
  %v944 = vunpack.c.h.b16 %v859
  %v945 = vunpack.c.l.b16 %v860
  %v946 = vunpack.c.h.b16 %v860
  %v947 = vunpack.c.l.b16 %v861
  %v948 = vunpack.c.h.b16 %v861
  %v949 = vunpack.c.l.b16 %v862
  %v950 = vunpack.c.h.b16 %v862
  %v951 = vunpack.c.l.b16 %v863
  %v952 = vunpack.c.h.b16 %v863
  %v953 = vunpack.c.l.b16 %v864
  %v954 = vunpack.c.h.b16 %v864
  %v955 = vpack.c.b16 %v925, %v923
  %v956 = vpack.c.b16 %v926, %v924
  %v957 = vpack.c.b16 %v929, %v927
  %v958 = vpack.c.b16 %v930, %v928
  %v959 = vpack.c.b16 %v933, %v931
  %v960 = vpack.c.b16 %v934, %v932
  %v961 = vpack.c.b16 %v937, %v935
  %v962 = vpack.c.b16 %v938, %v936
  %v963 = vpack.c.b16 %v941, %v939
  %v964 = vpack.c.b16 %v942, %v940
  %v965 = vpack.c.b16 %v945, %v943
  %v966 = vpack.c.b16 %v946, %v944
  %v967 = vpack.c.b16 %v949, %v947
  %v968 = vpack.c.b16 %v950, %v948
  %v969 = vpack.c.b16 %v953, %v951
  %v970 = vpack.c.b16 %v954, %v952
  %987 = vmatprep.subr.bf16.mxu0 %v956
  %988 = vmatpush1.bf16.msra.mxu0 %v955
  %989 = vmatprep.subr.bf16.mxu0 %v958
  %990 = vmatpush1.bf16.msra.mxu0 %v957
  %991 = vmatprep.subr.bf16.mxu0 %v960
  %992 = vmatpush1.bf16.msra.mxu0 %v959
  %993 = vmatprep.subr.bf16.mxu0 %v962
  %994 = vmatpush1.bf16.msra.mxu0 %v961
  %995 = vmatprep.subr.bf16.mxu0 %v964
  %996 = vmatpush1.bf16.msra.mxu0 %v963
  %997 = vmatprep.subr.bf16.mxu0 %v966
  %998 = vmatpush1.bf16.msra.mxu0 %v965
  %999 = vmatprep.subr.bf16.mxu0 %v968
  %1000 = vmatpush1.bf16.msra.mxu0 %v967
  %1001 = vmatprep.subr.bf16.mxu0 %v970
  %1002 = vmatpush1.bf16.msra.mxu0 %v969
  %1003 = vmatprep.subr.bf16.mxu0 0
  %1004 = vmatpush1.bf16.msra.mxu0 0
  %1005 = vmatprep.subr.bf16.mxu0 0
  %1006 = vmatpush1.bf16.msra.mxu0 0
  %1007 = vmatprep.subr.bf16.mxu0 0
  %1008 = vmatpush1.bf16.msra.mxu0 0
  %1009 = vmatprep.subr.bf16.mxu0 0
  %1010 = vmatpush1.bf16.msra.mxu0 0
  %1011 = vmatprep.subr.bf16.mxu0 0
  %1012 = vmatpush1.bf16.msra.mxu0 0
  %1013 = vmatprep.subr.bf16.mxu0 0
  %1014 = vmatpush1.bf16.msra.mxu0 0
  %1015 = vmatprep.subr.bf16.mxu0 0
  %1016 = vmatpush1.bf16.msra.mxu0 0
  %1017 = vmatprep.subr.bf16.mxu0 0
  %1018 = vmatpush1.bf16.msra.mxu0 0
  %1019 = vmatprep.mubr.bf16.mxu0 0
  %1020 = vmatmul.mubr.bf16.gmra.mrb[0].mxu0 %v893
  %v1021 = vpop.f32.mrb[0].mxu0
  %v1022 = vadd.f32 0.0, %v1021
  %v1023 = vpop.f32.mrb[0].mxu0
  %v1024 = vadd.f32 0.0, %v1023
  %v1025 = vpop.f32.mrb[0].mxu0
  %v1026 = vadd.f32 0.0, %v1025
  %v1027 = vpop.f32.mrb[0].mxu0
  %v1028 = vadd.f32 0.0, %v1027
  %1029 = vmatprep.mubr.bf16.mxu0 0
  %1030 = vmatmul.mubr.bf16.gmra.mrb[0].mxu0 %v894
  %v1031 = vpop.f32.mrb[0].mxu0
  %v1032 = vadd.f32 0.0, %v1031
  %v1033 = vpop.f32.mrb[0].mxu0
  %v1034 = vadd.f32 0.0, %v1033
  %v1035 = vpop.f32.mrb[0].mxu0
  %v1036 = vadd.f32 0.0, %v1035
  %v1037 = vpop.f32.mrb[0].mxu0
  %v1038 = vadd.f32 0.0, %v1037
  %1039 = vmatprep.mubr.bf16.mxu0 0
  %1040 = vmatmul.mubr.bf16.gmra.mrb[0].mxu0 %v895
  %v1041 = vpop.f32.mrb[0].mxu0
  %v1042 = vadd.f32 0.0, %v1041
  %v1043 = vpop.f32.mrb[0].mxu0
  %v1044 = vadd.f32 0.0, %v1043
  %v1045 = vpop.f32.mrb[0].mxu0
  %v1046 = vadd.f32 0.0, %v1045
  %v1047 = vpop.f32.mrb[0].mxu0
  %v1048 = vadd.f32 0.0, %v1047
  %1049 = vmatprep.mubr.bf16.mxu0 0
  %1050 = vmatmul.mubr.bf16.gmra.mrb[0].mxu0 %v896
  %v1051 = vpop.f32.mrb[0].mxu0
  %v1052 = vadd.f32 0.0, %v1051
  %v1053 = vpop.f32.mrb[0].mxu0
  %v1054 = vadd.f32 0.0, %v1053
  %v1055 = vpop.f32.mrb[0].mxu0
  %v1056 = vadd.f32 0.0, %v1055
  %v1057 = vpop.f32.mrb[0].mxu0
  %v1058 = vadd.f32 0.0, %v1057
  %1059 = vmatprep.mubr.bf16.mxu0 0
  %1060 = vmatmul.mubr.bf16.gmra.mrb[0].mxu0 %v897
  %v1061 = vpop.f32.mrb[0].mxu0
  %v1062 = vadd.f32 0.0, %v1061
  %v1063 = vpop.f32.mrb[0].mxu0
  %v1064 = vadd.f32 0.0, %v1063
  %v1065 = vpop.f32.mrb[0].mxu0
  %v1066 = vadd.f32 0.0, %v1065
  %v1067 = vpop.f32.mrb[0].mxu0
  %v1068 = vadd.f32 0.0, %v1067
  %1069 = vmatprep.mubr.bf16.mxu0 0
  %1070 = vmatmul.mubr.bf16.gmra.mrb[0].mxu0 %v898
  %v1071 = vpop.f32.mrb[0].mxu0
  %v1072 = vadd.f32 0.0, %v1071
  %v1073 = vpop.f32.mrb[0].mxu0
  %v1074 = vadd.f32 0.0, %v1073
  %v1075 = vpop.f32.mrb[0].mxu0
  %v1076 = vadd.f32 0.0, %v1075
  %v1077 = vpop.f32.mrb[0].mxu0
  %v1078 = vadd.f32 0.0, %v1077
  %1079 = vmatprep.mubr.bf16.mxu0 0
  %1080 = vmatmul.mubr.bf16.gmra.mrb[0].mxu0 %v899
  %v1081 = vpop.f32.mrb[0].mxu0
  %v1082 = vadd.f32 0.0, %v1081
  %v1083 = vpop.f32.mrb[0].mxu0
  %v1084 = vadd.f32 0.0, %v1083
  %v1085 = vpop.f32.mrb[0].mxu0
  %v1086 = vadd.f32 0.0, %v1085
  %v1087 = vpop.f32.mrb[0].mxu0
  %v1088 = vadd.f32 0.0, %v1087
  %1089 = vdwg.mxu0
  %v1090 = vadd.f32 %v806, %v1022
  %v1091 = vadd.f32 %v807, %v1024
  %v1092 = vadd.f32 %v808, %v1026
  %v1093 = vadd.f32 %v809, %v1028
  %v1094 = vadd.f32 %v810, %v1032
  %v1095 = vadd.f32 %v811, %v1034
  %v1096 = vadd.f32 %v812, %v1036
  %v1097 = vadd.f32 %v813, %v1038
  %v1098 = vadd.f32 %v814, %v1042
  %v1099 = vadd.f32 %v815, %v1044
  %v1100 = vadd.f32 %v816, %v1046
  %v1101 = vadd.f32 %v817, %v1048
  %v1102 = vadd.f32 %v818, %v1052
  %v1103 = vadd.f32 %v819, %v1054
  %v1104 = vadd.f32 %v820, %v1056
  %v1105 = vadd.f32 %v821, %v1058
  %v1106 = vadd.f32 %v822, %v1062
  %v1107 = vadd.f32 %v823, %v1064
  %v1108 = vadd.f32 %v824, %v1066
  %v1109 = vadd.f32 %v825, %v1068
  %v1110 = vadd.f32 %v826, %v1072
  %v1111 = vadd.f32 %v827, %v1074
  %v1112 = vadd.f32 %v828, %v1076
  %v1113 = vadd.f32 %v829, %v1078
  %v1114 = vadd.f32 %v830, %v1082
  %v1115 = vadd.f32 %v831, %v1084
  %v1116 = vadd.f32 %v832, %v1086
  %v1117 = vadd.f32 %v833, %v1088
  %v1118 = vld [vmem:[%s0 + $0x10] sm:$0xf]
  %v1119 = vld [vmem:[%s0 + $0x18] sm:$0xf]
  %v1120 = vld [vmem:[%s0 + $0x20] sm:$0xf]
  %v1121 = vld [vmem:[%s0 + $0x28] sm:$0xf]
  %v1122 = vld [vmem:[%s0 + $0x30] sm:$0xf]
  %v1123 = vld [vmem:[%s0 + $0x38] sm:$0xf]
  %v1124 = vld [vmem:[%s0 + $0x40] sm:$0xf]
  %v1125 = vld [vmem:[%s0 + $0x48] sm:$0xf]
  %v1126 = vld [vmem:[%s0 + $0x50] sm:$0xf]
  %v1127 = vld [vmem:[%s0 + $0x58] sm:$0xf]
  %v1128 = vld [vmem:[%s0 + $0x60] sm:$0xf]
  %v1129 = vld [vmem:[%s0 + $0x68] sm:$0xf]
  %v1130 = vld [vmem:[%s0 + $0x70] sm:$0xf]
  %v1131 = vld [vmem:[%s0 + $0x78] sm:$0xf]
  %s1132 = scalar_lea.vmem %s1, 512
  %v1133 = vld [vmem:[%s1132] sm:$0xff]
  %v1134 = vld [vmem:[%s1132 + $0x8] sm:$0xff]
  %v1135 = vld [vmem:[%s1132 + $0x10] sm:$0xff]
  %v1136 = vld [vmem:[%s1132 + $0x18] sm:$0xff]
  %v1137 = vld [vmem:[%s1132 + $0x20] sm:$0xff]
  %v1138 = vld [vmem:[%s1132 + $0x28] sm:$0xff]
  %v1139 = vld [vmem:[%s1132 + $0x30] sm:$0xff]
  %v1140 = vld [vmem:[%s1132 + $0x38] sm:$0xff]
  %v1141 = vld [vmem:[%s1132 + $0x40] sm:$0xff]
  %v1142 = vld [vmem:[%s1132 + $0x48] sm:$0xff]
  %v1143 = vld [vmem:[%s1132 + $0x50] sm:$0xff]
  %v1144 = vld [vmem:[%s1132 + $0x58] sm:$0xff]
  %v1145 = vld [vmem:[%s1132 + $0x60] sm:$0xff]
  %v1146 = vld [vmem:[%s1132 + $0x68] sm:$0xff]
  %v1147 = vld [vmem:[%s1132 + $0x70] sm:$0xff]
  %v1148 = vld [vmem:[%s1132 + $0x78] sm:$0xff]
  %v1163 = vunpack.c.l.b16 %v1118
  %v1164 = vunpack.c.l.b16 %v1119
  %v1165 = vunpack.c.l.b16 %v1120
  %v1166 = vunpack.c.l.b16 %v1121
  %v1167 = vunpack.c.l.b16 %v1122
  %v1168 = vunpack.c.l.b16 %v1123
  %v1169 = vunpack.c.l.b16 %v1124
  %v1170 = vunpack.c.l.b16 %v1125
  %v1171 = vunpack.c.l.b16 %v1126
  %v1172 = vunpack.c.l.b16 %v1127
  %v1173 = vunpack.c.l.b16 %v1128
  %v1174 = vunpack.c.l.b16 %v1129
  %v1175 = vunpack.c.l.b16 %v1130
  %v1176 = vunpack.c.l.b16 %v1131
  %v1177 = vpack.c.b16 %v1164, %v1163
  %v1178 = vpack.c.b16 %v1166, %v1165
  %v1179 = vpack.c.b16 %v1168, %v1167
  %v1180 = vpack.c.b16 %v1170, %v1169
  %v1181 = vpack.c.b16 %v1172, %v1171
  %v1182 = vpack.c.b16 %v1174, %v1173
  %v1183 = vpack.c.b16 %v1176, %v1175
  %v1207 = vunpack.c.l.b16 %v1133
  %v1208 = vunpack.c.h.b16 %v1133
  %v1209 = vunpack.c.l.b16 %v1134
  %v1210 = vunpack.c.h.b16 %v1134
  %v1211 = vunpack.c.l.b16 %v1135
  %v1212 = vunpack.c.h.b16 %v1135
  %v1213 = vunpack.c.l.b16 %v1136
  %v1214 = vunpack.c.h.b16 %v1136
  %v1215 = vunpack.c.l.b16 %v1137
  %v1216 = vunpack.c.h.b16 %v1137
  %v1217 = vunpack.c.l.b16 %v1138
  %v1218 = vunpack.c.h.b16 %v1138
  %v1219 = vunpack.c.l.b16 %v1139
  %v1220 = vunpack.c.h.b16 %v1139
  %v1221 = vunpack.c.l.b16 %v1140
  %v1222 = vunpack.c.h.b16 %v1140
  %v1223 = vunpack.c.l.b16 %v1141
  %v1224 = vunpack.c.h.b16 %v1141
  %v1225 = vunpack.c.l.b16 %v1142
  %v1226 = vunpack.c.h.b16 %v1142
  %v1227 = vunpack.c.l.b16 %v1143
  %v1228 = vunpack.c.h.b16 %v1143
  %v1229 = vunpack.c.l.b16 %v1144
  %v1230 = vunpack.c.h.b16 %v1144
  %v1231 = vunpack.c.l.b16 %v1145
  %v1232 = vunpack.c.h.b16 %v1145
  %v1233 = vunpack.c.l.b16 %v1146
  %v1234 = vunpack.c.h.b16 %v1146
  %v1235 = vunpack.c.l.b16 %v1147
  %v1236 = vunpack.c.h.b16 %v1147
  %v1237 = vunpack.c.l.b16 %v1148
  %v1238 = vunpack.c.h.b16 %v1148
  %v1239 = vpack.c.b16 %v1209, %v1207
  %v1240 = vpack.c.b16 %v1210, %v1208
  %v1241 = vpack.c.b16 %v1213, %v1211
  %v1242 = vpack.c.b16 %v1214, %v1212
  %v1243 = vpack.c.b16 %v1217, %v1215
  %v1244 = vpack.c.b16 %v1218, %v1216
  %v1245 = vpack.c.b16 %v1221, %v1219
  %v1246 = vpack.c.b16 %v1222, %v1220
  %v1247 = vpack.c.b16 %v1225, %v1223
  %v1248 = vpack.c.b16 %v1226, %v1224
  %v1249 = vpack.c.b16 %v1229, %v1227
  %v1250 = vpack.c.b16 %v1230, %v1228
  %v1251 = vpack.c.b16 %v1233, %v1231
  %v1252 = vpack.c.b16 %v1234, %v1232
  %v1253 = vpack.c.b16 %v1237, %v1235
  %v1254 = vpack.c.b16 %v1238, %v1236
  %1271 = vmatprep.subr.bf16.mxu0 %v1240
  %1272 = vmatpush1.bf16.msra.mxu0 %v1239
  %1273 = vmatprep.subr.bf16.mxu0 %v1242
  %1274 = vmatpush1.bf16.msra.mxu0 %v1241
  %1275 = vmatprep.subr.bf16.mxu0 %v1244
  %1276 = vmatpush1.bf16.msra.mxu0 %v1243
  %1277 = vmatprep.subr.bf16.mxu0 %v1246
  %1278 = vmatpush1.bf16.msra.mxu0 %v1245
  %1279 = vmatprep.subr.bf16.mxu0 %v1248
  %1280 = vmatpush1.bf16.msra.mxu0 %v1247
  %1281 = vmatprep.subr.bf16.mxu0 %v1250
  %1282 = vmatpush1.bf16.msra.mxu0 %v1249
  %1283 = vmatprep.subr.bf16.mxu0 %v1252
  %1284 = vmatpush1.bf16.msra.mxu0 %v1251
  %1285 = vmatprep.subr.bf16.mxu0 %v1254
  %1286 = vmatpush1.bf16.msra.mxu0 %v1253
  %1287 = vmatprep.subr.bf16.mxu0 0
  %1288 = vmatpush1.bf16.msra.mxu0 0
  %1289 = vmatprep.subr.bf16.mxu0 0
  %1290 = vmatpush1.bf16.msra.mxu0 0
  %1291 = vmatprep.subr.bf16.mxu0 0
  %1292 = vmatpush1.bf16.msra.mxu0 0
  %1293 = vmatprep.subr.bf16.mxu0 0
  %1294 = vmatpush1.bf16.msra.mxu0 0
  %1295 = vmatprep.subr.bf16.mxu0 0
  %1296 = vmatpush1.bf16.msra.mxu0 0
  %1297 = vmatprep.subr.bf16.mxu0 0
  %1298 = vmatpush1.bf16.msra.mxu0 0
  %1299 = vmatprep.subr.bf16.mxu0 0
  %1300 = vmatpush1.bf16.msra.mxu0 0
  %1301 = vmatprep.subr.bf16.mxu0 0
  %1302 = vmatpush1.bf16.msra.mxu0 0
  %1303 = vmatprep.mubr.bf16.mxu0 0
  %1304 = vmatmul.mubr.bf16.gmra.mrb[0].mxu0 %v1177
  %v1305 = vpop.f32.mrb[0].mxu0
  %v1306 = vadd.f32 0.0, %v1305
  %v1307 = vpop.f32.mrb[0].mxu0
  %v1308 = vadd.f32 0.0, %v1307
  %v1309 = vpop.f32.mrb[0].mxu0
  %v1310 = vadd.f32 0.0, %v1309
  %v1311 = vpop.f32.mrb[0].mxu0
  %v1312 = vadd.f32 0.0, %v1311
  %1313 = vmatprep.mubr.bf16.mxu0 0
  %1314 = vmatmul.mubr.bf16.gmra.mrb[0].mxu0 %v1178
  %v1315 = vpop.f32.mrb[0].mxu0
  %v1316 = vadd.f32 0.0, %v1315
  %v1317 = vpop.f32.mrb[0].mxu0
  %v1318 = vadd.f32 0.0, %v1317
  %v1319 = vpop.f32.mrb[0].mxu0
  %v1320 = vadd.f32 0.0, %v1319
  %v1321 = vpop.f32.mrb[0].mxu0
  %v1322 = vadd.f32 0.0, %v1321
  %1323 = vmatprep.mubr.bf16.mxu0 0
  %1324 = vmatmul.mubr.bf16.gmra.mrb[0].mxu0 %v1179
  %v1325 = vpop.f32.mrb[0].mxu0
  %v1326 = vadd.f32 0.0, %v1325
  %v1327 = vpop.f32.mrb[0].mxu0
  %v1328 = vadd.f32 0.0, %v1327
  %v1329 = vpop.f32.mrb[0].mxu0
  %v1330 = vadd.f32 0.0, %v1329
  %v1331 = vpop.f32.mrb[0].mxu0
  %v1332 = vadd.f32 0.0, %v1331
  %1333 = vmatprep.mubr.bf16.mxu0 0
  %1334 = vmatmul.mubr.bf16.gmra.mrb[0].mxu0 %v1180
  %v1335 = vpop.f32.mrb[0].mxu0
  %v1336 = vadd.f32 0.0, %v1335
  %v1337 = vpop.f32.mrb[0].mxu0
  %v1338 = vadd.f32 0.0, %v1337
  %v1339 = vpop.f32.mrb[0].mxu0
  %v1340 = vadd.f32 0.0, %v1339
  %v1341 = vpop.f32.mrb[0].mxu0
  %v1342 = vadd.f32 0.0, %v1341
  %1343 = vmatprep.mubr.bf16.mxu0 0
  %1344 = vmatmul.mubr.bf16.gmra.mrb[0].mxu0 %v1181
  %v1345 = vpop.f32.mrb[0].mxu0
  %v1346 = vadd.f32 0.0, %v1345
  %v1347 = vpop.f32.mrb[0].mxu0
  %v1348 = vadd.f32 0.0, %v1347
  %v1349 = vpop.f32.mrb[0].mxu0
  %v1350 = vadd.f32 0.0, %v1349
  %v1351 = vpop.f32.mrb[0].mxu0
  %v1352 = vadd.f32 0.0, %v1351
  %1353 = vmatprep.mubr.bf16.mxu0 0
  %1354 = vmatmul.mubr.bf16.gmra.mrb[0].mxu0 %v1182
  %v1355 = vpop.f32.mrb[0].mxu0
  %v1356 = vadd.f32 0.0, %v1355
  %v1357 = vpop.f32.mrb[0].mxu0
  %v1358 = vadd.f32 0.0, %v1357
  %v1359 = vpop.f32.mrb[0].mxu0
  %v1360 = vadd.f32 0.0, %v1359
  %v1361 = vpop.f32.mrb[0].mxu0
  %v1362 = vadd.f32 0.0, %v1361
  %1363 = vmatprep.mubr.bf16.mxu0 0
  %1364 = vmatmul.mubr.bf16.gmra.mrb[0].mxu0 %v1183
  %v1365 = vpop.f32.mrb[0].mxu0
  %v1366 = vadd.f32 0.0, %v1365
  %v1367 = vpop.f32.mrb[0].mxu0
  %v1368 = vadd.f32 0.0, %v1367
  %v1369 = vpop.f32.mrb[0].mxu0
  %v1370 = vadd.f32 0.0, %v1369
  %v1371 = vpop.f32.mrb[0].mxu0
  %v1372 = vadd.f32 0.0, %v1371
  %1373 = vdwg.mxu0
  %v1374 = vadd.f32 %v1090, %v1306
  %v1375 = vadd.f32 %v1091, %v1308
  %v1376 = vadd.f32 %v1092, %v1310
  %v1377 = vadd.f32 %v1093, %v1312
  %v1378 = vadd.f32 %v1094, %v1316
  %v1379 = vadd.f32 %v1095, %v1318
  %v1380 = vadd.f32 %v1096, %v1320
  %v1381 = vadd.f32 %v1097, %v1322
  %v1382 = vadd.f32 %v1098, %v1326
  %v1383 = vadd.f32 %v1099, %v1328
  %v1384 = vadd.f32 %v1100, %v1330
  %v1385 = vadd.f32 %v1101, %v1332
  %v1386 = vadd.f32 %v1102, %v1336
  %v1387 = vadd.f32 %v1103, %v1338
  %v1388 = vadd.f32 %v1104, %v1340
  %v1389 = vadd.f32 %v1105, %v1342
  %v1390 = vadd.f32 %v1106, %v1346
  %v1391 = vadd.f32 %v1107, %v1348
  %v1392 = vadd.f32 %v1108, %v1350
  %v1393 = vadd.f32 %v1109, %v1352
  %v1394 = vadd.f32 %v1110, %v1356
  %v1395 = vadd.f32 %v1111, %v1358
  %v1396 = vadd.f32 %v1112, %v1360
  %v1397 = vadd.f32 %v1113, %v1362
  %v1398 = vadd.f32 %v1114, %v1366
  %v1399 = vadd.f32 %v1115, %v1368
  %v1400 = vadd.f32 %v1116, %v1370
  %v1401 = vadd.f32 %v1117, %v1372
  %v1402 = vmax.f32 %v1374, %v1375
  %v1403 = vmax.f32 %v1376, %v1377
  %v1404 = vmax.f32 %v1378, %v1379
  %v1405 = vmax.f32 %v1380, %v1381
  %v1406 = vmax.f32 %v1382, %v1383
  %v1407 = vmax.f32 %v1384, %v1385
  %v1408 = vmax.f32 %v1386, %v1387
  %v1409 = vmax.f32 %v1388, %v1389
  %v1410 = vmax.f32 %v1390, %v1391
  %v1411 = vmax.f32 %v1392, %v1393
  %v1412 = vmax.f32 %v1394, %v1395
  %v1413 = vmax.f32 %v1396, %v1397
  %v1414 = vmax.f32 %v1398, %v1399
  %v1415 = vmax.f32 %v1400, %v1401
  %1416 = vmatprep.subr.bf16.mxu0 %v191
  %1417 = vmatpush1.bf16.msra.mxu0 %v190
  %1418 = vmatprep.subr.bf16.mxu0 %v193
  %1419 = vmatpush1.bf16.msra.mxu0 %v192
  %1420 = vmatprep.subr.bf16.mxu0 %v195
  %1421 = vmatpush1.bf16.msra.mxu0 %v194
  %1422 = vmatprep.subr.bf16.mxu0 %v197
  %1423 = vmatpush1.bf16.msra.mxu0 %v196
  %1424 = vmatprep.subr.bf16.mxu0 %v199
  %1425 = vmatpush1.bf16.msra.mxu0 %v198
  %1426 = vmatprep.subr.bf16.mxu0 %v201
  %1427 = vmatpush1.bf16.msra.mxu0 %v200
  %1428 = vmatprep.subr.bf16.mxu0 %v203
  %1429 = vmatpush1.bf16.msra.mxu0 %v202
  %1430 = vmatprep.subr.bf16.mxu0 %v205
  %1431 = vmatpush1.bf16.msra.mxu0 %v204
  %1432 = vmatprep.subr.bf16.mxu0 0
  %1433 = vmatpush1.bf16.msra.mxu0 0
  %1434 = vmatprep.subr.bf16.mxu0 0
  %1435 = vmatpush1.bf16.msra.mxu0 0
  %1436 = vmatprep.subr.bf16.mxu0 0
  %1437 = vmatpush1.bf16.msra.mxu0 0
  %1438 = vmatprep.subr.bf16.mxu0 0
  %1439 = vmatpush1.bf16.msra.mxu0 0
  %1440 = vmatprep.subr.bf16.mxu0 0
  %1441 = vmatpush1.bf16.msra.mxu0 0
  %1442 = vmatprep.subr.bf16.mxu0 0
  %1443 = vmatpush1.bf16.msra.mxu0 0
  %1444 = vmatprep.subr.bf16.mxu0 0
  %1445 = vmatpush1.bf16.msra.mxu0 0
  %1446 = vmatprep.subr.bf16.mxu0 0
  %1447 = vmatpush1.bf16.msra.mxu0 0
  %1448 = vmatprep.mubr.bf16.mxu0 0
  %1449 = vmatmul.mubr.bf16.gmra.mrb[0].mxu0 %v609
  %v1450 = vpop.f32.mrb[0].mxu0
  %v1451 = vadd.f32 0.0, %v1450
  %v1452 = vpop.f32.mrb[0].mxu0
  %v1453 = vadd.f32 0.0, %v1452
  %v1454 = vpop.f32.mrb[0].mxu0
  %v1455 = vadd.f32 0.0, %v1454
  %v1456 = vpop.f32.mrb[0].mxu0
  %v1457 = vadd.f32 0.0, %v1456
  %1458 = vmatprep.mubr.bf16.mxu0 0
  %1459 = vmatmul.mubr.bf16.gmra.mrb[0].mxu0 %v610
  %v1460 = vpop.f32.mrb[0].mxu0
  %v1461 = vadd.f32 0.0, %v1460
  %v1462 = vpop.f32.mrb[0].mxu0
  %v1463 = vadd.f32 0.0, %v1462
  %v1464 = vpop.f32.mrb[0].mxu0
  %v1465 = vadd.f32 0.0, %v1464
  %v1466 = vpop.f32.mrb[0].mxu0
  %v1467 = vadd.f32 0.0, %v1466
  %1468 = vmatprep.mubr.bf16.mxu0 0
  %1469 = vmatmul.mubr.bf16.gmra.mrb[0].mxu0 %v611
  %v1470 = vpop.f32.mrb[0].mxu0
  %v1471 = vadd.f32 0.0, %v1470
  %v1472 = vpop.f32.mrb[0].mxu0
  %v1473 = vadd.f32 0.0, %v1472
  %v1474 = vpop.f32.mrb[0].mxu0
  %v1475 = vadd.f32 0.0, %v1474
  %v1476 = vpop.f32.mrb[0].mxu0
  %v1477 = vadd.f32 0.0, %v1476
  %1478 = vmatprep.mubr.bf16.mxu0 0
  %1479 = vmatmul.mubr.bf16.gmra.mrb[0].mxu0 %v612
  %v1480 = vpop.f32.mrb[0].mxu0
  %v1481 = vadd.f32 0.0, %v1480
  %v1482 = vpop.f32.mrb[0].mxu0
  %v1483 = vadd.f32 0.0, %v1482
  %v1484 = vpop.f32.mrb[0].mxu0
  %v1485 = vadd.f32 0.0, %v1484
  %v1486 = vpop.f32.mrb[0].mxu0
  %v1487 = vadd.f32 0.0, %v1486
  %1488 = vmatprep.mubr.bf16.mxu0 0
  %1489 = vmatmul.mubr.bf16.gmra.mrb[0].mxu0 %v613
  %v1490 = vpop.f32.mrb[0].mxu0
  %v1491 = vadd.f32 0.0, %v1490
  %v1492 = vpop.f32.mrb[0].mxu0
  %v1493 = vadd.f32 0.0, %v1492
  %v1494 = vpop.f32.mrb[0].mxu0
  %v1495 = vadd.f32 0.0, %v1494
  %v1496 = vpop.f32.mrb[0].mxu0
  %v1497 = vadd.f32 0.0, %v1496
  %1498 = vmatprep.mubr.bf16.mxu0 0
  %1499 = vmatmul.mubr.bf16.gmra.mrb[0].mxu0 %v614
  %v1500 = vpop.f32.mrb[0].mxu0
  %v1501 = vadd.f32 0.0, %v1500
  %v1502 = vpop.f32.mrb[0].mxu0
  %v1503 = vadd.f32 0.0, %v1502
  %v1504 = vpop.f32.mrb[0].mxu0
  %v1505 = vadd.f32 0.0, %v1504
  %v1506 = vpop.f32.mrb[0].mxu0
  %v1507 = vadd.f32 0.0, %v1506
  %1508 = vmatprep.mubr.bf16.mxu0 0
  %1509 = vmatmul.mubr.bf16.gmra.mrb[0].mxu0 %v615
  %v1510 = vpop.f32.mrb[0].mxu0
  %v1511 = vadd.f32 0.0, %v1510
  %v1512 = vpop.f32.mrb[0].mxu0
  %v1513 = vadd.f32 0.0, %v1512
  %v1514 = vpop.f32.mrb[0].mxu0
  %v1515 = vadd.f32 0.0, %v1514
  %v1516 = vpop.f32.mrb[0].mxu0
  %v1517 = vadd.f32 0.0, %v1516
  %1518 = vdwg.mxu0
  %1519 = vmatprep.subr.bf16.mxu0 %v416
  %1520 = vmatpush1.bf16.msra.mxu0 %v415
  %1521 = vmatprep.subr.bf16.mxu0 %v418
  %1522 = vmatpush1.bf16.msra.mxu0 %v417
  %1523 = vmatprep.subr.bf16.mxu0 %v420
  %1524 = vmatpush1.bf16.msra.mxu0 %v419
  %1525 = vmatprep.subr.bf16.mxu0 %v422
  %1526 = vmatpush1.bf16.msra.mxu0 %v421
  %1527 = vmatprep.subr.bf16.mxu0 %v424
  %1528 = vmatpush1.bf16.msra.mxu0 %v423
  %1529 = vmatprep.subr.bf16.mxu0 %v426
  %1530 = vmatpush1.bf16.msra.mxu0 %v425
  %1531 = vmatprep.subr.bf16.mxu0 %v428
  %1532 = vmatpush1.bf16.msra.mxu0 %v427
  %1533 = vmatprep.subr.bf16.mxu0 %v430
  %1534 = vmatpush1.bf16.msra.mxu0 %v429
  %1535 = vmatprep.subr.bf16.mxu0 0
  %1536 = vmatpush1.bf16.msra.mxu0 0
  %1537 = vmatprep.subr.bf16.mxu0 0
  %1538 = vmatpush1.bf16.msra.mxu0 0
  %1539 = vmatprep.subr.bf16.mxu0 0
  %1540 = vmatpush1.bf16.msra.mxu0 0
  %1541 = vmatprep.subr.bf16.mxu0 0
  %1542 = vmatpush1.bf16.msra.mxu0 0
  %1543 = vmatprep.subr.bf16.mxu0 0
  %1544 = vmatpush1.bf16.msra.mxu0 0
  %1545 = vmatprep.subr.bf16.mxu0 0
  %1546 = vmatpush1.bf16.msra.mxu0 0
  %1547 = vmatprep.subr.bf16.mxu0 0
  %1548 = vmatpush1.bf16.msra.mxu0 0
  %1549 = vmatprep.subr.bf16.mxu0 0
  %1550 = vmatpush1.bf16.msra.mxu0 0
  %1551 = vmatprep.mubr.bf16.mxu0 0
  %1552 = vmatmul.mubr.bf16.gmra.mrb[0].mxu0 %v128
  %v1553 = vpop.f32.mrb[0].mxu0
  %v1554 = vadd.f32 %v1451, %v1553
  %v1555 = vpop.f32.mrb[0].mxu0
  %v1556 = vadd.f32 %v1453, %v1555
  %v1557 = vpop.f32.mrb[0].mxu0
  %v1558 = vadd.f32 %v1455, %v1557
  %v1559 = vpop.f32.mrb[0].mxu0
  %v1560 = vadd.f32 %v1457, %v1559
  %1561 = vmatprep.mubr.bf16.mxu0 0
  %1562 = vmatmul.mubr.bf16.gmra.mrb[0].mxu0 %v129
  %v1563 = vpop.f32.mrb[0].mxu0
  %v1564 = vadd.f32 %v1461, %v1563
  %v1565 = vpop.f32.mrb[0].mxu0
  %v1566 = vadd.f32 %v1463, %v1565
  %v1567 = vpop.f32.mrb[0].mxu0
  %v1568 = vadd.f32 %v1465, %v1567
  %v1569 = vpop.f32.mrb[0].mxu0
  %v1570 = vadd.f32 %v1467, %v1569
  %1571 = vmatprep.mubr.bf16.mxu0 0
  %1572 = vmatmul.mubr.bf16.gmra.mrb[0].mxu0 %v130
  %v1573 = vpop.f32.mrb[0].mxu0
  %v1574 = vadd.f32 %v1471, %v1573
  %v1575 = vpop.f32.mrb[0].mxu0
  %v1576 = vadd.f32 %v1473, %v1575
  %v1577 = vpop.f32.mrb[0].mxu0
  %v1578 = vadd.f32 %v1475, %v1577
  %v1579 = vpop.f32.mrb[0].mxu0
  %v1580 = vadd.f32 %v1477, %v1579
  %1581 = vmatprep.mubr.bf16.mxu0 0
  %1582 = vmatmul.mubr.bf16.gmra.mrb[0].mxu0 %v131
  %v1583 = vpop.f32.mrb[0].mxu0
  %v1584 = vadd.f32 %v1481, %v1583
  %v1585 = vpop.f32.mrb[0].mxu0
  %v1586 = vadd.f32 %v1483, %v1585
  %v1587 = vpop.f32.mrb[0].mxu0
  %v1588 = vadd.f32 %v1485, %v1587
  %v1589 = vpop.f32.mrb[0].mxu0
  %v1590 = vadd.f32 %v1487, %v1589
  %1591 = vmatprep.mubr.bf16.mxu0 0
  %1592 = vmatmul.mubr.bf16.gmra.mrb[0].mxu0 %v132
  %v1593 = vpop.f32.mrb[0].mxu0
  %v1594 = vadd.f32 %v1491, %v1593
  %v1595 = vpop.f32.mrb[0].mxu0
  %v1596 = vadd.f32 %v1493, %v1595
  %v1597 = vpop.f32.mrb[0].mxu0
  %v1598 = vadd.f32 %v1495, %v1597
  %v1599 = vpop.f32.mrb[0].mxu0
  %v1600 = vadd.f32 %v1497, %v1599
  %1601 = vmatprep.mubr.bf16.mxu0 0
  %1602 = vmatmul.mubr.bf16.gmra.mrb[0].mxu0 %v133
  %v1603 = vpop.f32.mrb[0].mxu0
  %v1604 = vadd.f32 %v1501, %v1603
  %v1605 = vpop.f32.mrb[0].mxu0
  %v1606 = vadd.f32 %v1503, %v1605
  %v1607 = vpop.f32.mrb[0].mxu0
  %v1608 = vadd.f32 %v1505, %v1607
  %v1609 = vpop.f32.mrb[0].mxu0
  %v1610 = vadd.f32 %v1507, %v1609
  %1611 = vmatprep.mubr.bf16.mxu0 0
  %1612 = vmatmul.mubr.bf16.gmra.mrb[0].mxu0 %v134
  %v1613 = vpop.f32.mrb[0].mxu0
  %v1614 = vadd.f32 %v1511, %v1613
  %v1615 = vpop.f32.mrb[0].mxu0
  %v1616 = vadd.f32 %v1513, %v1615
  %v1617 = vpop.f32.mrb[0].mxu0
  %v1618 = vadd.f32 %v1515, %v1617
  %v1619 = vpop.f32.mrb[0].mxu0
  %v1620 = vadd.f32 %v1517, %v1619
  %1621 = vdwg.mxu0
  %1622 = vmatprep.subr.bf16.mxu0 %v672
  %1623 = vmatpush1.bf16.msra.mxu0 %v671
  %1624 = vmatprep.subr.bf16.mxu0 %v674
  %1625 = vmatpush1.bf16.msra.mxu0 %v673
  %1626 = vmatprep.subr.bf16.mxu0 %v676
  %1627 = vmatpush1.bf16.msra.mxu0 %v675
  %1628 = vmatprep.subr.bf16.mxu0 %v678
  %1629 = vmatpush1.bf16.msra.mxu0 %v677
  %1630 = vmatprep.subr.bf16.mxu0 %v680
  %1631 = vmatpush1.bf16.msra.mxu0 %v679
  %1632 = vmatprep.subr.bf16.mxu0 %v682
  %1633 = vmatpush1.bf16.msra.mxu0 %v681
  %1634 = vmatprep.subr.bf16.mxu0 %v684
  %1635 = vmatpush1.bf16.msra.mxu0 %v683
  %1636 = vmatprep.subr.bf16.mxu0 %v686
  %1637 = vmatpush1.bf16.msra.mxu0 %v685
  %1638 = vmatprep.subr.bf16.mxu0 0
  %1639 = vmatpush1.bf16.msra.mxu0 0
  %1640 = vmatprep.subr.bf16.mxu0 0
  %1641 = vmatpush1.bf16.msra.mxu0 0
  %1642 = vmatprep.subr.bf16.mxu0 0
  %1643 = vmatpush1.bf16.msra.mxu0 0
  %1644 = vmatprep.subr.bf16.mxu0 0
  %1645 = vmatpush1.bf16.msra.mxu0 0
  %1646 = vmatprep.subr.bf16.mxu0 0
  %1647 = vmatpush1.bf16.msra.mxu0 0
  %1648 = vmatprep.subr.bf16.mxu0 0
  %1649 = vmatpush1.bf16.msra.mxu0 0
  %1650 = vmatprep.subr.bf16.mxu0 0
  %1651 = vmatpush1.bf16.msra.mxu0 0
  %1652 = vmatprep.subr.bf16.mxu0 0
  %1653 = vmatpush1.bf16.msra.mxu0 0
  %1654 = vmatprep.mubr.bf16.mxu0 0
  %1655 = vmatmul.mubr.bf16.gmra.mrb[0].mxu0 %v893
  %v1656 = vpop.f32.mrb[0].mxu0
  %v1657 = vadd.f32 0.0, %v1656
  %v1658 = vpop.f32.mrb[0].mxu0
  %v1659 = vadd.f32 0.0, %v1658
  %v1660 = vpop.f32.mrb[0].mxu0
  %v1661 = vadd.f32 0.0, %v1660
  %v1662 = vpop.f32.mrb[0].mxu0
  %v1663 = vadd.f32 0.0, %v1662
  %1664 = vmatprep.mubr.bf16.mxu0 0
  %1665 = vmatmul.mubr.bf16.gmra.mrb[0].mxu0 %v894
  %v1666 = vpop.f32.mrb[0].mxu0
  %v1667 = vadd.f32 0.0, %v1666
  %v1668 = vpop.f32.mrb[0].mxu0
  %v1669 = vadd.f32 0.0, %v1668
  %v1670 = vpop.f32.mrb[0].mxu0
  %v1671 = vadd.f32 0.0, %v1670
  %v1672 = vpop.f32.mrb[0].mxu0
  %v1673 = vadd.f32 0.0, %v1672
  %1674 = vmatprep.mubr.bf16.mxu0 0
  %1675 = vmatmul.mubr.bf16.gmra.mrb[0].mxu0 %v895
  %v1676 = vpop.f32.mrb[0].mxu0
  %v1677 = vadd.f32 0.0, %v1676
  %v1678 = vpop.f32.mrb[0].mxu0
  %v1679 = vadd.f32 0.0, %v1678
  %v1680 = vpop.f32.mrb[0].mxu0
  %v1681 = vadd.f32 0.0, %v1680
  %v1682 = vpop.f32.mrb[0].mxu0
  %v1683 = vadd.f32 0.0, %v1682
  %1684 = vmatprep.mubr.bf16.mxu0 0
  %1685 = vmatmul.mubr.bf16.gmra.mrb[0].mxu0 %v896
  %v1686 = vpop.f32.mrb[0].mxu0
  %v1687 = vadd.f32 0.0, %v1686
  %v1688 = vpop.f32.mrb[0].mxu0
  %v1689 = vadd.f32 0.0, %v1688
  %v1690 = vpop.f32.mrb[0].mxu0
  %v1691 = vadd.f32 0.0, %v1690
  %v1692 = vpop.f32.mrb[0].mxu0
  %v1693 = vadd.f32 0.0, %v1692
  %1694 = vmatprep.mubr.bf16.mxu0 0
  %1695 = vmatmul.mubr.bf16.gmra.mrb[0].mxu0 %v897
  %v1696 = vpop.f32.mrb[0].mxu0
  %v1697 = vadd.f32 0.0, %v1696
  %v1698 = vpop.f32.mrb[0].mxu0
  %v1699 = vadd.f32 0.0, %v1698
  %v1700 = vpop.f32.mrb[0].mxu0
  %v1701 = vadd.f32 0.0, %v1700
  %v1702 = vpop.f32.mrb[0].mxu0
  %v1703 = vadd.f32 0.0, %v1702
  %1704 = vmatprep.mubr.bf16.mxu0 0
  %1705 = vmatmul.mubr.bf16.gmra.mrb[0].mxu0 %v898
  %v1706 = vpop.f32.mrb[0].mxu0
  %v1707 = vadd.f32 0.0, %v1706
  %v1708 = vpop.f32.mrb[0].mxu0
  %v1709 = vadd.f32 0.0, %v1708
  %v1710 = vpop.f32.mrb[0].mxu0
  %v1711 = vadd.f32 0.0, %v1710
  %v1712 = vpop.f32.mrb[0].mxu0
  %v1713 = vadd.f32 0.0, %v1712
  %1714 = vmatprep.mubr.bf16.mxu0 0
  %1715 = vmatmul.mubr.bf16.gmra.mrb[0].mxu0 %v899
  %v1716 = vpop.f32.mrb[0].mxu0
  %v1717 = vadd.f32 0.0, %v1716
  %v1718 = vpop.f32.mrb[0].mxu0
  %v1719 = vadd.f32 0.0, %v1718
  %v1720 = vpop.f32.mrb[0].mxu0
  %v1721 = vadd.f32 0.0, %v1720
  %v1722 = vpop.f32.mrb[0].mxu0
  %v1723 = vadd.f32 0.0, %v1722
  %1724 = vdwg.mxu0
  %v1725 = vadd.f32 %v1554, %v1657
  %v1726 = vadd.f32 %v1556, %v1659
  %v1727 = vadd.f32 %v1558, %v1661
  %v1728 = vadd.f32 %v1560, %v1663
  %v1729 = vadd.f32 %v1564, %v1667
  %v1730 = vadd.f32 %v1566, %v1669
  %v1731 = vadd.f32 %v1568, %v1671
  %v1732 = vadd.f32 %v1570, %v1673
  %v1733 = vadd.f32 %v1574, %v1677
  %v1734 = vadd.f32 %v1576, %v1679
  %v1735 = vadd.f32 %v1578, %v1681
  %v1736 = vadd.f32 %v1580, %v1683
  %v1737 = vadd.f32 %v1584, %v1687
  %v1738 = vadd.f32 %v1586, %v1689
  %v1739 = vadd.f32 %v1588, %v1691
  %v1740 = vadd.f32 %v1590, %v1693
  %v1741 = vadd.f32 %v1594, %v1697
  %v1742 = vadd.f32 %v1596, %v1699
  %v1743 = vadd.f32 %v1598, %v1701
  %v1744 = vadd.f32 %v1600, %v1703
  %v1745 = vadd.f32 %v1604, %v1707
  %v1746 = vadd.f32 %v1606, %v1709
  %v1747 = vadd.f32 %v1608, %v1711
  %v1748 = vadd.f32 %v1610, %v1713
  %v1749 = vadd.f32 %v1614, %v1717
  %v1750 = vadd.f32 %v1616, %v1719
  %v1751 = vadd.f32 %v1618, %v1721
  %v1752 = vadd.f32 %v1620, %v1723
  %1753 = vmatprep.subr.bf16.mxu0 %v956
  %1754 = vmatpush1.bf16.msra.mxu0 %v955
  %1755 = vmatprep.subr.bf16.mxu0 %v958
  %1756 = vmatpush1.bf16.msra.mxu0 %v957
  %1757 = vmatprep.subr.bf16.mxu0 %v960
  %1758 = vmatpush1.bf16.msra.mxu0 %v959
  %1759 = vmatprep.subr.bf16.mxu0 %v962
  %1760 = vmatpush1.bf16.msra.mxu0 %v961
  %1761 = vmatprep.subr.bf16.mxu0 %v964
  %1762 = vmatpush1.bf16.msra.mxu0 %v963
  %1763 = vmatprep.subr.bf16.mxu0 %v966
  %1764 = vmatpush1.bf16.msra.mxu0 %v965
  %1765 = vmatprep.subr.bf16.mxu0 %v968
  %1766 = vmatpush1.bf16.msra.mxu0 %v967
  %1767 = vmatprep.subr.bf16.mxu0 %v970
  %1768 = vmatpush1.bf16.msra.mxu0 %v969
  %1769 = vmatprep.subr.bf16.mxu0 0
  %1770 = vmatpush1.bf16.msra.mxu0 0
  %1771 = vmatprep.subr.bf16.mxu0 0
  %1772 = vmatpush1.bf16.msra.mxu0 0
  %1773 = vmatprep.subr.bf16.mxu0 0
  %1774 = vmatpush1.bf16.msra.mxu0 0
  %1775 = vmatprep.subr.bf16.mxu0 0
  %1776 = vmatpush1.bf16.msra.mxu0 0
  %1777 = vmatprep.subr.bf16.mxu0 0
  %1778 = vmatpush1.bf16.msra.mxu0 0
  %1779 = vmatprep.subr.bf16.mxu0 0
  %1780 = vmatpush1.bf16.msra.mxu0 0
  %1781 = vmatprep.subr.bf16.mxu0 0
  %1782 = vmatpush1.bf16.msra.mxu0 0
  %1783 = vmatprep.subr.bf16.mxu0 0
  %1784 = vmatpush1.bf16.msra.mxu0 0
  %1785 = vmatprep.mubr.bf16.mxu0 0
  %1786 = vmatmul.mubr.bf16.gmra.mrb[0].mxu0 %v1177
  %v1787 = vpop.f32.mrb[0].mxu0
  %v1788 = vadd.f32 0.0, %v1787
  %v1789 = vpop.f32.mrb[0].mxu0
  %v1790 = vadd.f32 0.0, %v1789
  %v1791 = vpop.f32.mrb[0].mxu0
  %v1792 = vadd.f32 0.0, %v1791
  %v1793 = vpop.f32.mrb[0].mxu0
  %v1794 = vadd.f32 0.0, %v1793
  %1795 = vmatprep.mubr.bf16.mxu0 0
  %1796 = vmatmul.mubr.bf16.gmra.mrb[0].mxu0 %v1178
  %v1797 = vpop.f32.mrb[0].mxu0
  %v1798 = vadd.f32 0.0, %v1797
  %v1799 = vpop.f32.mrb[0].mxu0
  %v1800 = vadd.f32 0.0, %v1799
  %v1801 = vpop.f32.mrb[0].mxu0
  %v1802 = vadd.f32 0.0, %v1801
  %v1803 = vpop.f32.mrb[0].mxu0
  %v1804 = vadd.f32 0.0, %v1803
  %1805 = vmatprep.mubr.bf16.mxu0 0
  %1806 = vmatmul.mubr.bf16.gmra.mrb[0].mxu0 %v1179
  %v1807 = vpop.f32.mrb[0].mxu0
  %v1808 = vadd.f32 0.0, %v1807
  %v1809 = vpop.f32.mrb[0].mxu0
  %v1810 = vadd.f32 0.0, %v1809
  %v1811 = vpop.f32.mrb[0].mxu0
  %v1812 = vadd.f32 0.0, %v1811
  %v1813 = vpop.f32.mrb[0].mxu0
  %v1814 = vadd.f32 0.0, %v1813
  %1815 = vmatprep.mubr.bf16.mxu0 0
  %1816 = vmatmul.mubr.bf16.gmra.mrb[0].mxu0 %v1180
  %v1817 = vpop.f32.mrb[0].mxu0
  %v1818 = vadd.f32 0.0, %v1817
  %v1819 = vpop.f32.mrb[0].mxu0
  %v1820 = vadd.f32 0.0, %v1819
  %v1821 = vpop.f32.mrb[0].mxu0
  %v1822 = vadd.f32 0.0, %v1821
  %v1823 = vpop.f32.mrb[0].mxu0
  %v1824 = vadd.f32 0.0, %v1823
  %1825 = vmatprep.mubr.bf16.mxu0 0
  %1826 = vmatmul.mubr.bf16.gmra.mrb[0].mxu0 %v1181
  %v1827 = vpop.f32.mrb[0].mxu0
  %v1828 = vadd.f32 0.0, %v1827
  %v1829 = vpop.f32.mrb[0].mxu0
  %v1830 = vadd.f32 0.0, %v1829
  %v1831 = vpop.f32.mrb[0].mxu0
  %v1832 = vadd.f32 0.0, %v1831
  %v1833 = vpop.f32.mrb[0].mxu0
  %v1834 = vadd.f32 0.0, %v1833
  %1835 = vmatprep.mubr.bf16.mxu0 0
  %1836 = vmatmul.mubr.bf16.gmra.mrb[0].mxu0 %v1182
  %v1837 = vpop.f32.mrb[0].mxu0
  %v1838 = vadd.f32 0.0, %v1837
  %v1839 = vpop.f32.mrb[0].mxu0
  %v1840 = vadd.f32 0.0, %v1839
  %v1841 = vpop.f32.mrb[0].mxu0
  %v1842 = vadd.f32 0.0, %v1841
  %v1843 = vpop.f32.mrb[0].mxu0
  %v1844 = vadd.f32 0.0, %v1843
  %1845 = vmatprep.mubr.bf16.mxu0 0
  %1846 = vmatmul.mubr.bf16.gmra.mrb[0].mxu0 %v1183
  %v1847 = vpop.f32.mrb[0].mxu0
  %v1848 = vadd.f32 0.0, %v1847
  %v1849 = vpop.f32.mrb[0].mxu0
  %v1850 = vadd.f32 0.0, %v1849
  %v1851 = vpop.f32.mrb[0].mxu0
  %v1852 = vadd.f32 0.0, %v1851
  %v1853 = vpop.f32.mrb[0].mxu0
  %v1854 = vadd.f32 0.0, %v1853
  %1855 = vdwg.mxu0
  %v1856 = vadd.f32 %v1725, %v1788
  %v1857 = vadd.f32 %v1726, %v1790
  %v1858 = vadd.f32 %v1727, %v1792
  %v1859 = vadd.f32 %v1728, %v1794
  %v1860 = vadd.f32 %v1729, %v1798
  %v1861 = vadd.f32 %v1730, %v1800
  %v1862 = vadd.f32 %v1731, %v1802
  %v1863 = vadd.f32 %v1732, %v1804
  %v1864 = vadd.f32 %v1733, %v1808
  %v1865 = vadd.f32 %v1734, %v1810
  %v1866 = vadd.f32 %v1735, %v1812
  %v1867 = vadd.f32 %v1736, %v1814
  %v1868 = vadd.f32 %v1737, %v1818
  %v1869 = vadd.f32 %v1738, %v1820
  %v1870 = vadd.f32 %v1739, %v1822
  %v1871 = vadd.f32 %v1740, %v1824
  %v1872 = vadd.f32 %v1741, %v1828
  %v1873 = vadd.f32 %v1742, %v1830
  %v1874 = vadd.f32 %v1743, %v1832
  %v1875 = vadd.f32 %v1744, %v1834
  %v1876 = vadd.f32 %v1745, %v1838
  %v1877 = vadd.f32 %v1746, %v1840
  %v1878 = vadd.f32 %v1747, %v1842
  %v1879 = vadd.f32 %v1748, %v1844
  %v1880 = vadd.f32 %v1749, %v1848
  %v1881 = vadd.f32 %v1750, %v1850
  %v1882 = vadd.f32 %v1751, %v1852
  %v1883 = vadd.f32 %v1752, %v1854
  %v1884 = vld [vmem:[%s0 + $0x14] sm:$0xf]
  %v1885 = vld [vmem:[%s0 + $0x1c] sm:$0xf]
  %v1886 = vld [vmem:[%s0 + $0x24] sm:$0xf]
  %v1887 = vld [vmem:[%s0 + $0x2c] sm:$0xf]
  %v1888 = vld [vmem:[%s0 + $0x34] sm:$0xf]
  %v1889 = vld [vmem:[%s0 + $0x3c] sm:$0xf]
  %v1890 = vld [vmem:[%s0 + $0x44] sm:$0xf]
  %v1891 = vld [vmem:[%s0 + $0x4c] sm:$0xf]
  %v1892 = vld [vmem:[%s0 + $0x54] sm:$0xf]
  %v1893 = vld [vmem:[%s0 + $0x5c] sm:$0xf]
  %v1894 = vld [vmem:[%s0 + $0x64] sm:$0xf]
  %v1895 = vld [vmem:[%s0 + $0x6c] sm:$0xf]
  %v1896 = vld [vmem:[%s0 + $0x74] sm:$0xf]
  %v1897 = vld [vmem:[%s0 + $0x7c] sm:$0xf]
  %v1912 = vunpack.c.l.b16 %v1884
  %v1913 = vunpack.c.l.b16 %v1885
  %v1914 = vunpack.c.l.b16 %v1886
  %v1915 = vunpack.c.l.b16 %v1887
  %v1916 = vunpack.c.l.b16 %v1888
  %v1917 = vunpack.c.l.b16 %v1889
  %v1918 = vunpack.c.l.b16 %v1890
  %v1919 = vunpack.c.l.b16 %v1891
  %v1920 = vunpack.c.l.b16 %v1892
  %v1921 = vunpack.c.l.b16 %v1893
  %v1922 = vunpack.c.l.b16 %v1894
  %v1923 = vunpack.c.l.b16 %v1895
  %v1924 = vunpack.c.l.b16 %v1896
  %v1925 = vunpack.c.l.b16 %v1897
  %v1926 = vpack.c.b16 %v1913, %v1912
  %v1927 = vpack.c.b16 %v1915, %v1914
  %v1928 = vpack.c.b16 %v1917, %v1916
  %v1929 = vpack.c.b16 %v1919, %v1918
  %v1930 = vpack.c.b16 %v1921, %v1920
  %v1931 = vpack.c.b16 %v1923, %v1922
  %v1932 = vpack.c.b16 %v1925, %v1924
  %1940 = vmatprep.subr.bf16.mxu0 %v1240
  %1941 = vmatpush1.bf16.msra.mxu0 %v1239
  %1942 = vmatprep.subr.bf16.mxu0 %v1242
  %1943 = vmatpush1.bf16.msra.mxu0 %v1241
  %1944 = vmatprep.subr.bf16.mxu0 %v1244
  %1945 = vmatpush1.bf16.msra.mxu0 %v1243
  %1946 = vmatprep.subr.bf16.mxu0 %v1246
  %1947 = vmatpush1.bf16.msra.mxu0 %v1245
  %1948 = vmatprep.subr.bf16.mxu0 %v1248
  %1949 = vmatpush1.bf16.msra.mxu0 %v1247
  %1950 = vmatprep.subr.bf16.mxu0 %v1250
  %1951 = vmatpush1.bf16.msra.mxu0 %v1249
  %1952 = vmatprep.subr.bf16.mxu0 %v1252
  %1953 = vmatpush1.bf16.msra.mxu0 %v1251
  %1954 = vmatprep.subr.bf16.mxu0 %v1254
  %1955 = vmatpush1.bf16.msra.mxu0 %v1253
  %1956 = vmatprep.subr.bf16.mxu0 0
  %1957 = vmatpush1.bf16.msra.mxu0 0
  %1958 = vmatprep.subr.bf16.mxu0 0
  %1959 = vmatpush1.bf16.msra.mxu0 0
  %1960 = vmatprep.subr.bf16.mxu0 0
  %1961 = vmatpush1.bf16.msra.mxu0 0
  %1962 = vmatprep.subr.bf16.mxu0 0
  %1963 = vmatpush1.bf16.msra.mxu0 0
  %1964 = vmatprep.subr.bf16.mxu0 0
  %1965 = vmatpush1.bf16.msra.mxu0 0
  %1966 = vmatprep.subr.bf16.mxu0 0
  %1967 = vmatpush1.bf16.msra.mxu0 0
  %1968 = vmatprep.subr.bf16.mxu0 0
  %1969 = vmatpush1.bf16.msra.mxu0 0
  %1970 = vmatprep.subr.bf16.mxu0 0
  %1971 = vmatpush1.bf16.msra.mxu0 0
  %1972 = vmatprep.mubr.bf16.mxu0 0
  %1973 = vmatmul.mubr.bf16.gmra.mrb[0].mxu0 %v1926
  %v1974 = vpop.f32.mrb[0].mxu0
  %v1975 = vadd.f32 0.0, %v1974
  %v1976 = vpop.f32.mrb[0].mxu0
  %v1977 = vadd.f32 0.0, %v1976
  %v1978 = vpop.f32.mrb[0].mxu0
  %v1979 = vadd.f32 0.0, %v1978
  %v1980 = vpop.f32.mrb[0].mxu0
  %v1981 = vadd.f32 0.0, %v1980
  %1982 = vmatprep.mubr.bf16.mxu0 0
  %1983 = vmatmul.mubr.bf16.gmra.mrb[0].mxu0 %v1927
  %v1984 = vpop.f32.mrb[0].mxu0
  %v1985 = vadd.f32 0.0, %v1984
  %v1986 = vpop.f32.mrb[0].mxu0
  %v1987 = vadd.f32 0.0, %v1986
  %v1988 = vpop.f32.mrb[0].mxu0
  %v1989 = vadd.f32 0.0, %v1988
  %v1990 = vpop.f32.mrb[0].mxu0
  %v1991 = vadd.f32 0.0, %v1990
  %1992 = vmatprep.mubr.bf16.mxu0 0
  %1993 = vmatmul.mubr.bf16.gmra.mrb[0].mxu0 %v1928
  %v1994 = vpop.f32.mrb[0].mxu0
  %v1995 = vadd.f32 0.0, %v1994
  %v1996 = vpop.f32.mrb[0].mxu0
  %v1997 = vadd.f32 0.0, %v1996
  %v1998 = vpop.f32.mrb[0].mxu0
  %v1999 = vadd.f32 0.0, %v1998
  %v2000 = vpop.f32.mrb[0].mxu0
  %v2001 = vadd.f32 0.0, %v2000
  %2002 = vmatprep.mubr.bf16.mxu0 0
  %2003 = vmatmul.mubr.bf16.gmra.mrb[0].mxu0 %v1929
  %v2004 = vpop.f32.mrb[0].mxu0
  %v2005 = vadd.f32 0.0, %v2004
  %v2006 = vpop.f32.mrb[0].mxu0
  %v2007 = vadd.f32 0.0, %v2006
  %v2008 = vpop.f32.mrb[0].mxu0
  %v2009 = vadd.f32 0.0, %v2008
  %v2010 = vpop.f32.mrb[0].mxu0
  %v2011 = vadd.f32 0.0, %v2010
  %2012 = vmatprep.mubr.bf16.mxu0 0
  %2013 = vmatmul.mubr.bf16.gmra.mrb[0].mxu0 %v1930
  %v2014 = vpop.f32.mrb[0].mxu0
  %v2015 = vadd.f32 0.0, %v2014
  %v2016 = vpop.f32.mrb[0].mxu0
  %v2017 = vadd.f32 0.0, %v2016
  %v2018 = vpop.f32.mrb[0].mxu0
  %v2019 = vadd.f32 0.0, %v2018
  %v2020 = vpop.f32.mrb[0].mxu0
  %v2021 = vadd.f32 0.0, %v2020
  %2022 = vmatprep.mubr.bf16.mxu0 0
  %2023 = vmatmul.mubr.bf16.gmra.mrb[0].mxu0 %v1931
  %v2024 = vpop.f32.mrb[0].mxu0
  %v2025 = vadd.f32 0.0, %v2024
  %v2026 = vpop.f32.mrb[0].mxu0
  %v2027 = vadd.f32 0.0, %v2026
  %v2028 = vpop.f32.mrb[0].mxu0
  %v2029 = vadd.f32 0.0, %v2028
  %v2030 = vpop.f32.mrb[0].mxu0
  %v2031 = vadd.f32 0.0, %v2030
  %2032 = vmatprep.mubr.bf16.mxu0 0
  %2033 = vmatmul.mubr.bf16.gmra.mrb[0].mxu0 %v1932
  %v2034 = vpop.f32.mrb[0].mxu0
  %v2035 = vadd.f32 0.0, %v2034
  %v2036 = vpop.f32.mrb[0].mxu0
  %v2037 = vadd.f32 0.0, %v2036
  %v2038 = vpop.f32.mrb[0].mxu0
  %v2039 = vadd.f32 0.0, %v2038
  %v2040 = vpop.f32.mrb[0].mxu0
  %v2041 = vadd.f32 0.0, %v2040
  %2042 = vdwg.mxu0
  %v2043 = vadd.f32 %v1856, %v1975
  %v2044 = vadd.f32 %v1857, %v1977
  %v2045 = vadd.f32 %v1858, %v1979
  %v2046 = vadd.f32 %v1859, %v1981
  %v2047 = vadd.f32 %v1860, %v1985
  %v2048 = vadd.f32 %v1861, %v1987
  %v2049 = vadd.f32 %v1862, %v1989
  %v2050 = vadd.f32 %v1863, %v1991
  %v2051 = vadd.f32 %v1864, %v1995
  %v2052 = vadd.f32 %v1865, %v1997
  %v2053 = vadd.f32 %v1866, %v1999
  %v2054 = vadd.f32 %v1867, %v2001
  %v2055 = vadd.f32 %v1868, %v2005
  %v2056 = vadd.f32 %v1869, %v2007
  %v2057 = vadd.f32 %v1870, %v2009
  %v2058 = vadd.f32 %v1871, %v2011
  %v2059 = vadd.f32 %v1872, %v2015
  %v2060 = vadd.f32 %v1873, %v2017
  %v2061 = vadd.f32 %v1874, %v2019
  %v2062 = vadd.f32 %v1875, %v2021
  %v2063 = vadd.f32 %v1876, %v2025
  %v2064 = vadd.f32 %v1877, %v2027
  %v2065 = vadd.f32 %v1878, %v2029
  %v2066 = vadd.f32 %v1879, %v2031
  %v2067 = vadd.f32 %v1880, %v2035
  %v2068 = vadd.f32 %v1881, %v2037
  %v2069 = vadd.f32 %v1882, %v2039
  %v2070 = vadd.f32 %v1883, %v2041
  %v2071 = vmax.f32 %v2043, %v2044
  %v2072 = vmax.f32 %v2045, %v2046
  %v2073 = vmax.f32 %v2047, %v2048
  %v2074 = vmax.f32 %v2049, %v2050
  %v2075 = vmax.f32 %v2051, %v2052
  %v2076 = vmax.f32 %v2053, %v2054
  %v2077 = vmax.f32 %v2055, %v2056
  %v2078 = vmax.f32 %v2057, %v2058
  %v2079 = vmax.f32 %v2059, %v2060
  %v2080 = vmax.f32 %v2061, %v2062
  %v2081 = vmax.f32 %v2063, %v2064
  %v2082 = vmax.f32 %v2065, %v2066
  %v2083 = vmax.f32 %v2067, %v2068
  %v2084 = vmax.f32 %v2069, %v2070
  %v2085 = vmax.f32 %v1402, %v2071
  %v2086 = vmax.f32 %v1403, %v2072
  %v2087 = vmax.f32 %v1404, %v2073
  %v2088 = vmax.f32 %v1405, %v2074
  %v2089 = vmax.f32 %v1406, %v2075
  %v2090 = vmax.f32 %v1407, %v2076
  %v2091 = vmax.f32 %v1408, %v2077
  %v2092 = vmax.f32 %v1409, %v2078
  %v2093 = vmax.f32 %v1410, %v2079
  %v2094 = vmax.f32 %v1411, %v2080
  %v2095 = vmax.f32 %v1412, %v2081
  %v2096 = vmax.f32 %v1413, %v2082
  %v2097 = vmax.f32 %v1414, %v2083
  %v2098 = vmax.f32 %v1415, %v2084
  %v2099 = vld [vmem:[%s2] sm:$0x1]
  %v2101 = vlaneseq
  %v2102 = vshrl.u32 %v2101, 7
  %v2103 = vsub.s32 0, %v2102
  %v2104 = vrot.slane %v2099, %v2103
  %v2106 = vadd.f32 %v2085, %v2104
  %v2107 = vadd.f32 %v2086, %v2104
  %v2108 = vadd.f32 %v2087, %v2104
  %v2109 = vadd.f32 %v2088, %v2104
  %v2110 = vadd.f32 %v2089, %v2104
  %v2111 = vadd.f32 %v2090, %v2104
  %v2112 = vadd.f32 %v2091, %v2104
  %v2113 = vadd.f32 %v2092, %v2104
  %v2114 = vadd.f32 %v2093, %v2104
  %v2115 = vadd.f32 %v2094, %v2104
  %v2116 = vadd.f32 %v2095, %v2104
  %v2117 = vadd.f32 %v2096, %v2104
  %v2118 = vadd.f32 %v2097, %v2104
  %v2119 = vadd.f32 %v2098, %v2104
  %v2120 = vmax.f32 %v2106, 0.0
  %v2121 = vmax.f32 %v2107, 0.0
  %v2122 = vmax.f32 %v2108, 0.0
  %v2123 = vmax.f32 %v2109, 0.0
  %v2124 = vmax.f32 %v2110, 0.0
  %v2125 = vmax.f32 %v2111, 0.0
  %v2126 = vmax.f32 %v2112, 0.0
  %v2127 = vmax.f32 %v2113, 0.0
  %v2128 = vmax.f32 %v2114, 0.0
  %v2129 = vmax.f32 %v2115, 0.0
  %v2130 = vmax.f32 %v2116, 0.0
  %v2131 = vmax.f32 %v2117, 0.0
  %v2132 = vmax.f32 %v2118, 0.0
  %v2133 = vmax.f32 %v2119, 0.0
  %v2134 = vpack.c.bf16 %v2122, %v2120
  %v2135 = vpack.c.bf16 %v2126, %v2124
  %v2136 = vpack.c.bf16 %v2128, %v2128
  %v2137 = vld [vmem:[%s3] sm:$0xff]
  %v2138 = vld [vmem:[%s3 + $0x8] sm:$0xff]
  %v2139 = vld [vmem:[%s3 + $0x10] sm:$0xff]
  %v2140 = vld [vmem:[%s3 + $0x18] sm:$0xff]
  %v2141 = vld [vmem:[%s3 + $0x20] sm:$0xff]
  %v2142 = vld [vmem:[%s3 + $0x28] sm:$0xff]
  %v2143 = vld [vmem:[%s3 + $0x30] sm:$0xff]
  %v2144 = vld [vmem:[%s3 + $0x38] sm:$0xff]
  %v2145 = vld [vmem:[%s3 + $0x40] sm:$0xff]
  %v2146 = vld [vmem:[%s3 + $0x48] sm:$0xff]
  %v2147 = vld [vmem:[%s3 + $0x50] sm:$0xff]
  %v2148 = vld [vmem:[%s3 + $0x58] sm:$0xff]
  %v2149 = vld [vmem:[%s3 + $0x60] sm:$0xff]
  %v2150 = vld [vmem:[%s3 + $0x68] sm:$0xff]
  %v2151 = vld [vmem:[%s3 + $0x70] sm:$0xff]
  %v2152 = vld [vmem:[%s3 + $0x78] sm:$0xff]
  %v2153 = vpack.c.bf16 %v2123, %v2121
  %v2154 = vpack.c.bf16 %v2127, %v2125
  %v2155 = vpack.c.bf16 %v2129, %v2129
  %s2156 = scalar_lea.vmem %s3, 128
  %v2157 = vld [vmem:[%s2156] sm:$0xff]
  %v2158 = vld [vmem:[%s2156 + $0x8] sm:$0xff]
  %v2159 = vld [vmem:[%s2156 + $0x10] sm:$0xff]
  %v2160 = vld [vmem:[%s2156 + $0x18] sm:$0xff]
  %v2161 = vld [vmem:[%s2156 + $0x20] sm:$0xff]
  %v2162 = vld [vmem:[%s2156 + $0x28] sm:$0xff]
  %v2163 = vld [vmem:[%s2156 + $0x30] sm:$0xff]
  %v2164 = vld [vmem:[%s2156 + $0x38] sm:$0xff]
  %v2165 = vld [vmem:[%s2156 + $0x40] sm:$0xff]
  %v2166 = vld [vmem:[%s2156 + $0x48] sm:$0xff]
  %v2167 = vld [vmem:[%s2156 + $0x50] sm:$0xff]
  %v2168 = vld [vmem:[%s2156 + $0x58] sm:$0xff]
  %v2169 = vld [vmem:[%s2156 + $0x60] sm:$0xff]
  %v2170 = vld [vmem:[%s2156 + $0x68] sm:$0xff]
  %v2171 = vld [vmem:[%s2156 + $0x70] sm:$0xff]
  %v2172 = vld [vmem:[%s2156 + $0x78] sm:$0xff]
  %v2189 = vunpack.c.l.b16 %v2157
  %v2190 = vunpack.c.h.b16 %v2157
  %v2191 = vunpack.c.l.b16 %v2158
  %v2192 = vunpack.c.h.b16 %v2158
  %v2193 = vunpack.c.l.b16 %v2159
  %v2194 = vunpack.c.h.b16 %v2159
  %v2195 = vunpack.c.l.b16 %v2160
  %v2196 = vunpack.c.h.b16 %v2160
  %v2197 = vunpack.c.l.b16 %v2161
  %v2198 = vunpack.c.h.b16 %v2161
  %v2199 = vunpack.c.l.b16 %v2162
  %v2200 = vunpack.c.h.b16 %v2162
  %v2201 = vunpack.c.l.b16 %v2163
  %v2202 = vunpack.c.h.b16 %v2163
  %v2203 = vunpack.c.l.b16 %v2164
  %v2204 = vunpack.c.h.b16 %v2164
  %v2205 = vunpack.c.l.b16 %v2165
  %v2206 = vunpack.c.h.b16 %v2165
  %v2207 = vunpack.c.l.b16 %v2166
  %v2208 = vunpack.c.h.b16 %v2166
  %v2209 = vunpack.c.l.b16 %v2167
  %v2210 = vunpack.c.h.b16 %v2167
  %v2211 = vunpack.c.l.b16 %v2168
  %v2212 = vunpack.c.h.b16 %v2168
  %v2213 = vunpack.c.l.b16 %v2169
  %v2214 = vunpack.c.h.b16 %v2169
  %v2215 = vunpack.c.l.b16 %v2170
  %v2216 = vunpack.c.h.b16 %v2170
  %v2217 = vunpack.c.l.b16 %v2171
  %v2218 = vunpack.c.h.b16 %v2171
  %v2219 = vunpack.c.l.b16 %v2172
  %v2220 = vunpack.c.h.b16 %v2172
  %v2221 = vpack.c.b16 %v2191, %v2189
  %v2222 = vpack.c.b16 %v2192, %v2190
  %v2223 = vpack.c.b16 %v2195, %v2193
  %v2224 = vpack.c.b16 %v2196, %v2194
  %v2225 = vpack.c.b16 %v2199, %v2197
  %v2226 = vpack.c.b16 %v2200, %v2198
  %v2227 = vpack.c.b16 %v2203, %v2201
  %v2228 = vpack.c.b16 %v2204, %v2202
  %v2229 = vpack.c.b16 %v2207, %v2205
  %v2230 = vpack.c.b16 %v2208, %v2206
  %v2231 = vpack.c.b16 %v2211, %v2209
  %v2232 = vpack.c.b16 %v2212, %v2210
  %v2233 = vpack.c.b16 %v2215, %v2213
  %v2234 = vpack.c.b16 %v2216, %v2214
  %v2235 = vpack.c.b16 %v2219, %v2217
  %v2236 = vpack.c.b16 %v2220, %v2218
  %2253 = vmatprep.subr.bf16.mxu0 %v2222
  %2254 = vmatpush1.bf16.msra.mxu0 %v2221
  %2255 = vmatprep.subr.bf16.mxu0 %v2224
  %2256 = vmatpush1.bf16.msra.mxu0 %v2223
  %2257 = vmatprep.subr.bf16.mxu0 %v2226
  %2258 = vmatpush1.bf16.msra.mxu0 %v2225
  %2259 = vmatprep.subr.bf16.mxu0 %v2228
  %2260 = vmatpush1.bf16.msra.mxu0 %v2227
  %2261 = vmatprep.subr.bf16.mxu0 %v2230
  %2262 = vmatpush1.bf16.msra.mxu0 %v2229
  %2263 = vmatprep.subr.bf16.mxu0 %v2232
  %2264 = vmatpush1.bf16.msra.mxu0 %v2231
  %2265 = vmatprep.subr.bf16.mxu0 %v2234
  %2266 = vmatpush1.bf16.msra.mxu0 %v2233
  %2267 = vmatprep.subr.bf16.mxu0 %v2236
  %2268 = vmatpush1.bf16.msra.mxu0 %v2235
  %2269 = vmatprep.subr.bf16.mxu0 0
  %2270 = vmatpush1.bf16.msra.mxu0 0
  %2271 = vmatprep.subr.bf16.mxu0 0
  %2272 = vmatpush1.bf16.msra.mxu0 0
  %2273 = vmatprep.subr.bf16.mxu0 0
  %2274 = vmatpush1.bf16.msra.mxu0 0
  %2275 = vmatprep.subr.bf16.mxu0 0
  %2276 = vmatpush1.bf16.msra.mxu0 0
  %2277 = vmatprep.subr.bf16.mxu0 0
  %2278 = vmatpush1.bf16.msra.mxu0 0
  %2279 = vmatprep.subr.bf16.mxu0 0
  %2280 = vmatpush1.bf16.msra.mxu0 0
  %2281 = vmatprep.subr.bf16.mxu0 0
  %2282 = vmatpush1.bf16.msra.mxu0 0
  %2283 = vmatprep.subr.bf16.mxu0 0
  %2284 = vmatpush1.bf16.msra.mxu0 0
  %2285 = vmatprep.mubr.bf16.mxu0 0
  %2286 = vmatmul.mubr.bf16.gmra.mrb[0].mxu0 %v2153
  %v2287 = vpop.f32.mrb[0].mxu0
  %v2288 = vadd.f32 0.0, %v2287
  %v2289 = vpop.f32.mrb[0].mxu0
  %v2290 = vadd.f32 0.0, %v2289
  %v2291 = vpop.f32.mrb[0].mxu0
  %v2292 = vadd.f32 0.0, %v2291
  %v2293 = vpop.f32.mrb[0].mxu0
  %v2294 = vadd.f32 0.0, %v2293
  %2295 = vmatprep.mubr.bf16.mxu0 0
  %2296 = vmatmul.mubr.bf16.gmra.mrb[0].mxu0 %v2154
  %v2297 = vpop.f32.mrb[0].mxu0
  %v2298 = vadd.f32 0.0, %v2297
  %v2299 = vpop.f32.mrb[0].mxu0
  %v2300 = vadd.f32 0.0, %v2299
  %v2301 = vpop.f32.mrb[0].mxu0
  %v2302 = vadd.f32 0.0, %v2301
  %v2303 = vpop.f32.mrb[0].mxu0
  %v2304 = vadd.f32 0.0, %v2303
  %2305 = vmatprep.mubr.bf16.mxu0 0
  %2306 = vmatmul.mubr.bf16.gmra.mrb[0].mxu0 %v2155
  %v2307 = vpop.f32.mrb[0].mxu0
  %v2308 = vadd.f32 0.0, %v2307
  %v2309 = vpop.f32.mrb[0].mxu0
  %v2310 = vadd.f32 0.0, %v2309
  %v2311 = vpop.f32.mrb[0].mxu0
  %v2312 = vpop.f32.mrb[0].mxu0
  %2313 = vdwg.mxu0
  %v2330 = vunpack.c.l.b16 %v2137
  %v2331 = vunpack.c.h.b16 %v2137
  %v2332 = vunpack.c.l.b16 %v2138
  %v2333 = vunpack.c.h.b16 %v2138
  %v2334 = vunpack.c.l.b16 %v2139
  %v2335 = vunpack.c.h.b16 %v2139
  %v2336 = vunpack.c.l.b16 %v2140
  %v2337 = vunpack.c.h.b16 %v2140
  %v2338 = vunpack.c.l.b16 %v2141
  %v2339 = vunpack.c.h.b16 %v2141
  %v2340 = vunpack.c.l.b16 %v2142
  %v2341 = vunpack.c.h.b16 %v2142
  %v2342 = vunpack.c.l.b16 %v2143
  %v2343 = vunpack.c.h.b16 %v2143
  %v2344 = vunpack.c.l.b16 %v2144
  %v2345 = vunpack.c.h.b16 %v2144
  %v2346 = vunpack.c.l.b16 %v2145
  %v2347 = vunpack.c.h.b16 %v2145
  %v2348 = vunpack.c.l.b16 %v2146
  %v2349 = vunpack.c.h.b16 %v2146
  %v2350 = vunpack.c.l.b16 %v2147
  %v2351 = vunpack.c.h.b16 %v2147
  %v2352 = vunpack.c.l.b16 %v2148
  %v2353 = vunpack.c.h.b16 %v2148
  %v2354 = vunpack.c.l.b16 %v2149
  %v2355 = vunpack.c.h.b16 %v2149
  %v2356 = vunpack.c.l.b16 %v2150
  %v2357 = vunpack.c.h.b16 %v2150
  %v2358 = vunpack.c.l.b16 %v2151
  %v2359 = vunpack.c.h.b16 %v2151
  %v2360 = vunpack.c.l.b16 %v2152
  %v2361 = vunpack.c.h.b16 %v2152
  %v2362 = vpack.c.b16 %v2332, %v2330
  %v2363 = vpack.c.b16 %v2333, %v2331
  %v2364 = vpack.c.b16 %v2336, %v2334
  %v2365 = vpack.c.b16 %v2337, %v2335
  %v2366 = vpack.c.b16 %v2340, %v2338
  %v2367 = vpack.c.b16 %v2341, %v2339
  %v2368 = vpack.c.b16 %v2344, %v2342
  %v2369 = vpack.c.b16 %v2345, %v2343
  %v2370 = vpack.c.b16 %v2348, %v2346
  %v2371 = vpack.c.b16 %v2349, %v2347
  %v2372 = vpack.c.b16 %v2352, %v2350
  %v2373 = vpack.c.b16 %v2353, %v2351
  %v2374 = vpack.c.b16 %v2356, %v2354
  %v2375 = vpack.c.b16 %v2357, %v2355
  %v2376 = vpack.c.b16 %v2360, %v2358
  %v2377 = vpack.c.b16 %v2361, %v2359
  %2394 = vmatprep.subr.bf16.mxu0 %v2363
  %2395 = vmatpush1.bf16.msra.mxu0 %v2362
  %2396 = vmatprep.subr.bf16.mxu0 %v2365
  %2397 = vmatpush1.bf16.msra.mxu0 %v2364
  %2398 = vmatprep.subr.bf16.mxu0 %v2367
  %2399 = vmatpush1.bf16.msra.mxu0 %v2366
  %2400 = vmatprep.subr.bf16.mxu0 %v2369
  %2401 = vmatpush1.bf16.msra.mxu0 %v2368
  %2402 = vmatprep.subr.bf16.mxu0 %v2371
  %2403 = vmatpush1.bf16.msra.mxu0 %v2370
  %2404 = vmatprep.subr.bf16.mxu0 %v2373
  %2405 = vmatpush1.bf16.msra.mxu0 %v2372
  %2406 = vmatprep.subr.bf16.mxu0 %v2375
  %2407 = vmatpush1.bf16.msra.mxu0 %v2374
  %2408 = vmatprep.subr.bf16.mxu0 %v2377
  %2409 = vmatpush1.bf16.msra.mxu0 %v2376
  %2410 = vmatprep.subr.bf16.mxu0 0
  %2411 = vmatpush1.bf16.msra.mxu0 0
  %2412 = vmatprep.subr.bf16.mxu0 0
  %2413 = vmatpush1.bf16.msra.mxu0 0
  %2414 = vmatprep.subr.bf16.mxu0 0
  %2415 = vmatpush1.bf16.msra.mxu0 0
  %2416 = vmatprep.subr.bf16.mxu0 0
  %2417 = vmatpush1.bf16.msra.mxu0 0
  %2418 = vmatprep.subr.bf16.mxu0 0
  %2419 = vmatpush1.bf16.msra.mxu0 0
  %2420 = vmatprep.subr.bf16.mxu0 0
  %2421 = vmatpush1.bf16.msra.mxu0 0
  %2422 = vmatprep.subr.bf16.mxu0 0
  %2423 = vmatpush1.bf16.msra.mxu0 0
  %2424 = vmatprep.subr.bf16.mxu0 0
  %2425 = vmatpush1.bf16.msra.mxu0 0
  %2426 = vmatprep.mubr.bf16.mxu0 0
  %2427 = vmatmul.mubr.bf16.gmra.mrb[0].mxu0 %v2134
  %v2428 = vpop.f32.mrb[0].mxu0
  %v2429 = vadd.f32 %v2288, %v2428
  %v2430 = vpop.f32.mrb[0].mxu0
  %v2431 = vadd.f32 %v2290, %v2430
  %v2432 = vpop.f32.mrb[0].mxu0
  %v2433 = vadd.f32 %v2292, %v2432
  %v2434 = vpop.f32.mrb[0].mxu0
  %v2435 = vadd.f32 %v2294, %v2434
  %2436 = vmatprep.mubr.bf16.mxu0 0
  %2437 = vmatmul.mubr.bf16.gmra.mrb[0].mxu0 %v2135
  %v2438 = vpop.f32.mrb[0].mxu0
  %v2439 = vadd.f32 %v2298, %v2438
  %v2440 = vpop.f32.mrb[0].mxu0
  %v2441 = vadd.f32 %v2300, %v2440
  %v2442 = vpop.f32.mrb[0].mxu0
  %v2443 = vadd.f32 %v2302, %v2442
  %v2444 = vpop.f32.mrb[0].mxu0
  %v2445 = vadd.f32 %v2304, %v2444
  %2446 = vmatprep.mubr.bf16.mxu0 0
  %2447 = vmatmul.mubr.bf16.gmra.mrb[0].mxu0 %v2136
  %v2448 = vpop.f32.mrb[0].mxu0
  %v2449 = vadd.f32 %v2308, %v2448
  %v2450 = vpop.f32.mrb[0].mxu0
  %v2451 = vadd.f32 %v2310, %v2450
  %v2452 = vpop.f32.mrb[0].mxu0
  %v2453 = vpop.f32.mrb[0].mxu0
  %2454 = vdwg.mxu0
  %v2455 = vpack.c.bf16 %v2124, %v2122
  %v2456 = vpack.c.bf16 %v2128, %v2126
  %v2457 = vpack.c.bf16 %v2130, %v2130
  %s2458 = scalar_lea.vmem %s3, 256
  %v2459 = vld [vmem:[%s2458] sm:$0xff]
  %v2460 = vld [vmem:[%s2458 + $0x8] sm:$0xff]
  %v2461 = vld [vmem:[%s2458 + $0x10] sm:$0xff]
  %v2462 = vld [vmem:[%s2458 + $0x18] sm:$0xff]
  %v2463 = vld [vmem:[%s2458 + $0x20] sm:$0xff]
  %v2464 = vld [vmem:[%s2458 + $0x28] sm:$0xff]
  %v2465 = vld [vmem:[%s2458 + $0x30] sm:$0xff]
  %v2466 = vld [vmem:[%s2458 + $0x38] sm:$0xff]
  %v2467 = vld [vmem:[%s2458 + $0x40] sm:$0xff]
  %v2468 = vld [vmem:[%s2458 + $0x48] sm:$0xff]
  %v2469 = vld [vmem:[%s2458 + $0x50] sm:$0xff]
  %v2470 = vld [vmem:[%s2458 + $0x58] sm:$0xff]
  %v2471 = vld [vmem:[%s2458 + $0x60] sm:$0xff]
  %v2472 = vld [vmem:[%s2458 + $0x68] sm:$0xff]
  %v2473 = vld [vmem:[%s2458 + $0x70] sm:$0xff]
  %v2474 = vld [vmem:[%s2458 + $0x78] sm:$0xff]
  %v2491 = vunpack.c.l.b16 %v2459
  %v2492 = vunpack.c.h.b16 %v2459
  %v2493 = vunpack.c.l.b16 %v2460
  %v2494 = vunpack.c.h.b16 %v2460
  %v2495 = vunpack.c.l.b16 %v2461
  %v2496 = vunpack.c.h.b16 %v2461
  %v2497 = vunpack.c.l.b16 %v2462
  %v2498 = vunpack.c.h.b16 %v2462
  %v2499 = vunpack.c.l.b16 %v2463
  %v2500 = vunpack.c.h.b16 %v2463
  %v2501 = vunpack.c.l.b16 %v2464
  %v2502 = vunpack.c.h.b16 %v2464
  %v2503 = vunpack.c.l.b16 %v2465
  %v2504 = vunpack.c.h.b16 %v2465
  %v2505 = vunpack.c.l.b16 %v2466
  %v2506 = vunpack.c.h.b16 %v2466
  %v2507 = vunpack.c.l.b16 %v2467
  %v2508 = vunpack.c.h.b16 %v2467
  %v2509 = vunpack.c.l.b16 %v2468
  %v2510 = vunpack.c.h.b16 %v2468
  %v2511 = vunpack.c.l.b16 %v2469
  %v2512 = vunpack.c.h.b16 %v2469
  %v2513 = vunpack.c.l.b16 %v2470
  %v2514 = vunpack.c.h.b16 %v2470
  %v2515 = vunpack.c.l.b16 %v2471
  %v2516 = vunpack.c.h.b16 %v2471
  %v2517 = vunpack.c.l.b16 %v2472
  %v2518 = vunpack.c.h.b16 %v2472
  %v2519 = vunpack.c.l.b16 %v2473
  %v2520 = vunpack.c.h.b16 %v2473
  %v2521 = vunpack.c.l.b16 %v2474
  %v2522 = vunpack.c.h.b16 %v2474
  %v2523 = vpack.c.b16 %v2493, %v2491
  %v2524 = vpack.c.b16 %v2494, %v2492
  %v2525 = vpack.c.b16 %v2497, %v2495
  %v2526 = vpack.c.b16 %v2498, %v2496
  %v2527 = vpack.c.b16 %v2501, %v2499
  %v2528 = vpack.c.b16 %v2502, %v2500
  %v2529 = vpack.c.b16 %v2505, %v2503
  %v2530 = vpack.c.b16 %v2506, %v2504
  %v2531 = vpack.c.b16 %v2509, %v2507
  %v2532 = vpack.c.b16 %v2510, %v2508
  %v2533 = vpack.c.b16 %v2513, %v2511
  %v2534 = vpack.c.b16 %v2514, %v2512
  %v2535 = vpack.c.b16 %v2517, %v2515
  %v2536 = vpack.c.b16 %v2518, %v2516
  %v2537 = vpack.c.b16 %v2521, %v2519
  %v2538 = vpack.c.b16 %v2522, %v2520
  %2555 = vmatprep.subr.bf16.mxu0 %v2524
  %2556 = vmatpush1.bf16.msra.mxu0 %v2523
  %2557 = vmatprep.subr.bf16.mxu0 %v2526
  %2558 = vmatpush1.bf16.msra.mxu0 %v2525
  %2559 = vmatprep.subr.bf16.mxu0 %v2528
  %2560 = vmatpush1.bf16.msra.mxu0 %v2527
  %2561 = vmatprep.subr.bf16.mxu0 %v2530
  %2562 = vmatpush1.bf16.msra.mxu0 %v2529
  %2563 = vmatprep.subr.bf16.mxu0 %v2532
  %2564 = vmatpush1.bf16.msra.mxu0 %v2531
  %2565 = vmatprep.subr.bf16.mxu0 %v2534
  %2566 = vmatpush1.bf16.msra.mxu0 %v2533
  %2567 = vmatprep.subr.bf16.mxu0 %v2536
  %2568 = vmatpush1.bf16.msra.mxu0 %v2535
  %2569 = vmatprep.subr.bf16.mxu0 %v2538
  %2570 = vmatpush1.bf16.msra.mxu0 %v2537
  %2571 = vmatprep.subr.bf16.mxu0 0
  %2572 = vmatpush1.bf16.msra.mxu0 0
  %2573 = vmatprep.subr.bf16.mxu0 0
  %2574 = vmatpush1.bf16.msra.mxu0 0
  %2575 = vmatprep.subr.bf16.mxu0 0
  %2576 = vmatpush1.bf16.msra.mxu0 0
  %2577 = vmatprep.subr.bf16.mxu0 0
  %2578 = vmatpush1.bf16.msra.mxu0 0
  %2579 = vmatprep.subr.bf16.mxu0 0
  %2580 = vmatpush1.bf16.msra.mxu0 0
  %2581 = vmatprep.subr.bf16.mxu0 0
  %2582 = vmatpush1.bf16.msra.mxu0 0
  %2583 = vmatprep.subr.bf16.mxu0 0
  %2584 = vmatpush1.bf16.msra.mxu0 0
  %2585 = vmatprep.subr.bf16.mxu0 0
  %2586 = vmatpush1.bf16.msra.mxu0 0
  %2587 = vmatprep.mubr.bf16.mxu0 0
  %2588 = vmatmul.mubr.bf16.gmra.mrb[0].mxu0 %v2455
  %v2589 = vpop.f32.mrb[0].mxu0
  %v2590 = vadd.f32 0.0, %v2589
  %v2591 = vpop.f32.mrb[0].mxu0
  %v2592 = vadd.f32 0.0, %v2591
  %v2593 = vpop.f32.mrb[0].mxu0
  %v2594 = vadd.f32 0.0, %v2593
  %v2595 = vpop.f32.mrb[0].mxu0
  %v2596 = vadd.f32 0.0, %v2595
  %2597 = vmatprep.mubr.bf16.mxu0 0
  %2598 = vmatmul.mubr.bf16.gmra.mrb[0].mxu0 %v2456
  %v2599 = vpop.f32.mrb[0].mxu0
  %v2600 = vadd.f32 0.0, %v2599
  %v2601 = vpop.f32.mrb[0].mxu0
  %v2602 = vadd.f32 0.0, %v2601
  %v2603 = vpop.f32.mrb[0].mxu0
  %v2604 = vadd.f32 0.0, %v2603
  %v2605 = vpop.f32.mrb[0].mxu0
  %v2606 = vadd.f32 0.0, %v2605
  %2607 = vmatprep.mubr.bf16.mxu0 0
  %2608 = vmatmul.mubr.bf16.gmra.mrb[0].mxu0 %v2457
  %v2609 = vpop.f32.mrb[0].mxu0
  %v2610 = vadd.f32 0.0, %v2609
  %v2611 = vpop.f32.mrb[0].mxu0
  %v2612 = vadd.f32 0.0, %v2611
  %v2613 = vpop.f32.mrb[0].mxu0
  %v2614 = vpop.f32.mrb[0].mxu0
  %2615 = vdwg.mxu0
  %v2616 = vadd.f32 %v2429, %v2590
  %v2617 = vadd.f32 %v2431, %v2592
  %v2618 = vadd.f32 %v2433, %v2594
  %v2619 = vadd.f32 %v2435, %v2596
  %v2620 = vadd.f32 %v2439, %v2600
  %v2621 = vadd.f32 %v2441, %v2602
  %v2622 = vadd.f32 %v2443, %v2604
  %v2623 = vadd.f32 %v2445, %v2606
  %v2624 = vadd.f32 %v2449, %v2610
  %v2625 = vadd.f32 %v2451, %v2612
  %v2626 = vpack.c.bf16 %v2125, %v2123
  %v2627 = vpack.c.bf16 %v2129, %v2127
  %v2628 = vpack.c.bf16 %v2131, %v2131
  %s2629 = scalar_lea.vmem %s3, 384
  %v2630 = vld [vmem:[%s2629] sm:$0xff]
  %v2631 = vld [vmem:[%s2629 + $0x8] sm:$0xff]
  %v2632 = vld [vmem:[%s2629 + $0x10] sm:$0xff]
  %v2633 = vld [vmem:[%s2629 + $0x18] sm:$0xff]
  %v2634 = vld [vmem:[%s2629 + $0x20] sm:$0xff]
  %v2635 = vld [vmem:[%s2629 + $0x28] sm:$0xff]
  %v2636 = vld [vmem:[%s2629 + $0x30] sm:$0xff]
  %v2637 = vld [vmem:[%s2629 + $0x38] sm:$0xff]
  %v2638 = vld [vmem:[%s2629 + $0x40] sm:$0xff]
  %v2639 = vld [vmem:[%s2629 + $0x48] sm:$0xff]
  %v2640 = vld [vmem:[%s2629 + $0x50] sm:$0xff]
  %v2641 = vld [vmem:[%s2629 + $0x58] sm:$0xff]
  %v2642 = vld [vmem:[%s2629 + $0x60] sm:$0xff]
  %v2643 = vld [vmem:[%s2629 + $0x68] sm:$0xff]
  %v2644 = vld [vmem:[%s2629 + $0x70] sm:$0xff]
  %v2645 = vld [vmem:[%s2629 + $0x78] sm:$0xff]
  %v2662 = vunpack.c.l.b16 %v2630
  %v2663 = vunpack.c.h.b16 %v2630
  %v2664 = vunpack.c.l.b16 %v2631
  %v2665 = vunpack.c.h.b16 %v2631
  %v2666 = vunpack.c.l.b16 %v2632
  %v2667 = vunpack.c.h.b16 %v2632
  %v2668 = vunpack.c.l.b16 %v2633
  %v2669 = vunpack.c.h.b16 %v2633
  %v2670 = vunpack.c.l.b16 %v2634
  %v2671 = vunpack.c.h.b16 %v2634
  %v2672 = vunpack.c.l.b16 %v2635
  %v2673 = vunpack.c.h.b16 %v2635
  %v2674 = vunpack.c.l.b16 %v2636
  %v2675 = vunpack.c.h.b16 %v2636
  %v2676 = vunpack.c.l.b16 %v2637
  %v2677 = vunpack.c.h.b16 %v2637
  %v2678 = vunpack.c.l.b16 %v2638
  %v2679 = vunpack.c.h.b16 %v2638
  %v2680 = vunpack.c.l.b16 %v2639
  %v2681 = vunpack.c.h.b16 %v2639
  %v2682 = vunpack.c.l.b16 %v2640
  %v2683 = vunpack.c.h.b16 %v2640
  %v2684 = vunpack.c.l.b16 %v2641
  %v2685 = vunpack.c.h.b16 %v2641
  %v2686 = vunpack.c.l.b16 %v2642
  %v2687 = vunpack.c.h.b16 %v2642
  %v2688 = vunpack.c.l.b16 %v2643
  %v2689 = vunpack.c.h.b16 %v2643
  %v2690 = vunpack.c.l.b16 %v2644
  %v2691 = vunpack.c.h.b16 %v2644
  %v2692 = vunpack.c.l.b16 %v2645
  %v2693 = vunpack.c.h.b16 %v2645
  %v2694 = vpack.c.b16 %v2664, %v2662
  %v2695 = vpack.c.b16 %v2665, %v2663
  %v2696 = vpack.c.b16 %v2668, %v2666
  %v2697 = vpack.c.b16 %v2669, %v2667
  %v2698 = vpack.c.b16 %v2672, %v2670
  %v2699 = vpack.c.b16 %v2673, %v2671
  %v2700 = vpack.c.b16 %v2676, %v2674
  %v2701 = vpack.c.b16 %v2677, %v2675
  %v2702 = vpack.c.b16 %v2680, %v2678
  %v2703 = vpack.c.b16 %v2681, %v2679
  %v2704 = vpack.c.b16 %v2684, %v2682
  %v2705 = vpack.c.b16 %v2685, %v2683
  %v2706 = vpack.c.b16 %v2688, %v2686
  %v2707 = vpack.c.b16 %v2689, %v2687
  %v2708 = vpack.c.b16 %v2692, %v2690
  %v2709 = vpack.c.b16 %v2693, %v2691
  %2726 = vmatprep.subr.bf16.mxu0 %v2695
  %2727 = vmatpush1.bf16.msra.mxu0 %v2694
  %2728 = vmatprep.subr.bf16.mxu0 %v2697
  %2729 = vmatpush1.bf16.msra.mxu0 %v2696
  %2730 = vmatprep.subr.bf16.mxu0 %v2699
  %2731 = vmatpush1.bf16.msra.mxu0 %v2698
  %2732 = vmatprep.subr.bf16.mxu0 %v2701
  %2733 = vmatpush1.bf16.msra.mxu0 %v2700
  %2734 = vmatprep.subr.bf16.mxu0 %v2703
  %2735 = vmatpush1.bf16.msra.mxu0 %v2702
  %2736 = vmatprep.subr.bf16.mxu0 %v2705
  %2737 = vmatpush1.bf16.msra.mxu0 %v2704
  %2738 = vmatprep.subr.bf16.mxu0 %v2707
  %2739 = vmatpush1.bf16.msra.mxu0 %v2706
  %2740 = vmatprep.subr.bf16.mxu0 %v2709
  %2741 = vmatpush1.bf16.msra.mxu0 %v2708
  %2742 = vmatprep.subr.bf16.mxu0 0
  %2743 = vmatpush1.bf16.msra.mxu0 0
  %2744 = vmatprep.subr.bf16.mxu0 0
  %2745 = vmatpush1.bf16.msra.mxu0 0
  %2746 = vmatprep.subr.bf16.mxu0 0
  %2747 = vmatpush1.bf16.msra.mxu0 0
  %2748 = vmatprep.subr.bf16.mxu0 0
  %2749 = vmatpush1.bf16.msra.mxu0 0
  %2750 = vmatprep.subr.bf16.mxu0 0
  %2751 = vmatpush1.bf16.msra.mxu0 0
  %2752 = vmatprep.subr.bf16.mxu0 0
  %2753 = vmatpush1.bf16.msra.mxu0 0
  %2754 = vmatprep.subr.bf16.mxu0 0
  %2755 = vmatpush1.bf16.msra.mxu0 0
  %2756 = vmatprep.subr.bf16.mxu0 0
  %2757 = vmatpush1.bf16.msra.mxu0 0
  %2758 = vmatprep.mubr.bf16.mxu0 0
  %2759 = vmatmul.mubr.bf16.gmra.mrb[0].mxu0 %v2626
  %v2760 = vpop.f32.mrb[0].mxu0
  %v2761 = vadd.f32 0.0, %v2760
  %v2762 = vpop.f32.mrb[0].mxu0
  %v2763 = vadd.f32 0.0, %v2762
  %v2764 = vpop.f32.mrb[0].mxu0
  %v2765 = vadd.f32 0.0, %v2764
  %v2766 = vpop.f32.mrb[0].mxu0
  %v2767 = vadd.f32 0.0, %v2766
  %2768 = vmatprep.mubr.bf16.mxu0 0
  %2769 = vmatmul.mubr.bf16.gmra.mrb[0].mxu0 %v2627
  %v2770 = vpop.f32.mrb[0].mxu0
  %v2771 = vadd.f32 0.0, %v2770
  %v2772 = vpop.f32.mrb[0].mxu0
  %v2773 = vadd.f32 0.0, %v2772
  %v2774 = vpop.f32.mrb[0].mxu0
  %v2775 = vadd.f32 0.0, %v2774
  %v2776 = vpop.f32.mrb[0].mxu0
  %v2777 = vadd.f32 0.0, %v2776
  %2778 = vmatprep.mubr.bf16.mxu0 0
  %2779 = vmatmul.mubr.bf16.gmra.mrb[0].mxu0 %v2628
  %v2780 = vpop.f32.mrb[0].mxu0
  %v2781 = vadd.f32 0.0, %v2780
  %v2782 = vpop.f32.mrb[0].mxu0
  %v2783 = vadd.f32 0.0, %v2782
  %v2784 = vpop.f32.mrb[0].mxu0
  %v2785 = vpop.f32.mrb[0].mxu0
  %2786 = vdwg.mxu0
  %v2787 = vadd.f32 %v2616, %v2761
  %v2788 = vadd.f32 %v2617, %v2763
  %v2789 = vadd.f32 %v2618, %v2765
  %v2790 = vadd.f32 %v2619, %v2767
  %v2791 = vadd.f32 %v2620, %v2771
  %v2792 = vadd.f32 %v2621, %v2773
  %v2793 = vadd.f32 %v2622, %v2775
  %v2794 = vadd.f32 %v2623, %v2777
  %v2795 = vadd.f32 %v2624, %v2781
  %v2796 = vadd.f32 %v2625, %v2783
  %v2797 = vpack.c.bf16 %v2130, %v2128
  %v2798 = vpack.c.bf16 %v2132, %v2132
  %s2799 = scalar_lea.vmem %s3, 512
  %v2800 = vld [vmem:[%s2799] sm:$0xff]
  %v2801 = vld [vmem:[%s2799 + $0x8] sm:$0xff]
  %v2802 = vld [vmem:[%s2799 + $0x10] sm:$0xff]
  %v2803 = vld [vmem:[%s2799 + $0x18] sm:$0xff]
  %v2804 = vld [vmem:[%s2799 + $0x20] sm:$0xff]
  %v2805 = vld [vmem:[%s2799 + $0x28] sm:$0xff]
  %v2806 = vld [vmem:[%s2799 + $0x30] sm:$0xff]
  %v2807 = vld [vmem:[%s2799 + $0x38] sm:$0xff]
  %v2808 = vld [vmem:[%s2799 + $0x40] sm:$0xff]
  %v2809 = vld [vmem:[%s2799 + $0x48] sm:$0xff]
  %v2810 = vld [vmem:[%s2799 + $0x50] sm:$0xff]
  %v2811 = vld [vmem:[%s2799 + $0x58] sm:$0xff]
  %v2812 = vld [vmem:[%s2799 + $0x60] sm:$0xff]
  %v2813 = vld [vmem:[%s2799 + $0x68] sm:$0xff]
  %v2814 = vld [vmem:[%s2799 + $0x70] sm:$0xff]
  %v2815 = vld [vmem:[%s2799 + $0x78] sm:$0xff]
  %v2832 = vunpack.c.l.b16 %v2800
  %v2833 = vunpack.c.h.b16 %v2800
  %v2834 = vunpack.c.l.b16 %v2801
  %v2835 = vunpack.c.h.b16 %v2801
  %v2836 = vunpack.c.l.b16 %v2802
  %v2837 = vunpack.c.h.b16 %v2802
  %v2838 = vunpack.c.l.b16 %v2803
  %v2839 = vunpack.c.h.b16 %v2803
  %v2840 = vunpack.c.l.b16 %v2804
  %v2841 = vunpack.c.h.b16 %v2804
  %v2842 = vunpack.c.l.b16 %v2805
  %v2843 = vunpack.c.h.b16 %v2805
  %v2844 = vunpack.c.l.b16 %v2806
  %v2845 = vunpack.c.h.b16 %v2806
  %v2846 = vunpack.c.l.b16 %v2807
  %v2847 = vunpack.c.h.b16 %v2807
  %v2848 = vunpack.c.l.b16 %v2808
  %v2849 = vunpack.c.h.b16 %v2808
  %v2850 = vunpack.c.l.b16 %v2809
  %v2851 = vunpack.c.h.b16 %v2809
  %v2852 = vunpack.c.l.b16 %v2810
  %v2853 = vunpack.c.h.b16 %v2810
  %v2854 = vunpack.c.l.b16 %v2811
  %v2855 = vunpack.c.h.b16 %v2811
  %v2856 = vunpack.c.l.b16 %v2812
  %v2857 = vunpack.c.h.b16 %v2812
  %v2858 = vunpack.c.l.b16 %v2813
  %v2859 = vunpack.c.h.b16 %v2813
  %v2860 = vunpack.c.l.b16 %v2814
  %v2861 = vunpack.c.h.b16 %v2814
  %v2862 = vunpack.c.l.b16 %v2815
  %v2863 = vunpack.c.h.b16 %v2815
  %v2864 = vpack.c.b16 %v2834, %v2832
  %v2865 = vpack.c.b16 %v2835, %v2833
  %v2866 = vpack.c.b16 %v2838, %v2836
  %v2867 = vpack.c.b16 %v2839, %v2837
  %v2868 = vpack.c.b16 %v2842, %v2840
  %v2869 = vpack.c.b16 %v2843, %v2841
  %v2870 = vpack.c.b16 %v2846, %v2844
  %v2871 = vpack.c.b16 %v2847, %v2845
  %v2872 = vpack.c.b16 %v2850, %v2848
  %v2873 = vpack.c.b16 %v2851, %v2849
  %v2874 = vpack.c.b16 %v2854, %v2852
  %v2875 = vpack.c.b16 %v2855, %v2853
  %v2876 = vpack.c.b16 %v2858, %v2856
  %v2877 = vpack.c.b16 %v2859, %v2857
  %v2878 = vpack.c.b16 %v2862, %v2860
  %v2879 = vpack.c.b16 %v2863, %v2861
  %2896 = vmatprep.subr.bf16.mxu0 %v2865
  %2897 = vmatpush1.bf16.msra.mxu0 %v2864
  %2898 = vmatprep.subr.bf16.mxu0 %v2867
  %2899 = vmatpush1.bf16.msra.mxu0 %v2866
  %2900 = vmatprep.subr.bf16.mxu0 %v2869
  %2901 = vmatpush1.bf16.msra.mxu0 %v2868
  %2902 = vmatprep.subr.bf16.mxu0 %v2871
  %2903 = vmatpush1.bf16.msra.mxu0 %v2870
  %2904 = vmatprep.subr.bf16.mxu0 %v2873
  %2905 = vmatpush1.bf16.msra.mxu0 %v2872
  %2906 = vmatprep.subr.bf16.mxu0 %v2875
  %2907 = vmatpush1.bf16.msra.mxu0 %v2874
  %2908 = vmatprep.subr.bf16.mxu0 %v2877
  %2909 = vmatpush1.bf16.msra.mxu0 %v2876
  %2910 = vmatprep.subr.bf16.mxu0 %v2879
  %2911 = vmatpush1.bf16.msra.mxu0 %v2878
  %2912 = vmatprep.subr.bf16.mxu0 0
  %2913 = vmatpush1.bf16.msra.mxu0 0
  %2914 = vmatprep.subr.bf16.mxu0 0
  %2915 = vmatpush1.bf16.msra.mxu0 0
  %2916 = vmatprep.subr.bf16.mxu0 0
  %2917 = vmatpush1.bf16.msra.mxu0 0
  %2918 = vmatprep.subr.bf16.mxu0 0
  %2919 = vmatpush1.bf16.msra.mxu0 0
  %2920 = vmatprep.subr.bf16.mxu0 0
  %2921 = vmatpush1.bf16.msra.mxu0 0
  %2922 = vmatprep.subr.bf16.mxu0 0
  %2923 = vmatpush1.bf16.msra.mxu0 0
  %2924 = vmatprep.subr.bf16.mxu0 0
  %2925 = vmatpush1.bf16.msra.mxu0 0
  %2926 = vmatprep.subr.bf16.mxu0 0
  %2927 = vmatpush1.bf16.msra.mxu0 0
  %2928 = vmatprep.mubr.bf16.mxu0 0
  %2929 = vmatmul.mubr.bf16.gmra.mrb[0].mxu0 %v2135
  %v2930 = vpop.f32.mrb[0].mxu0
  %v2931 = vadd.f32 0.0, %v2930
  %v2932 = vpop.f32.mrb[0].mxu0
  %v2933 = vadd.f32 0.0, %v2932
  %v2934 = vpop.f32.mrb[0].mxu0
  %v2935 = vadd.f32 0.0, %v2934
  %v2936 = vpop.f32.mrb[0].mxu0
  %v2937 = vadd.f32 0.0, %v2936
  %2938 = vmatprep.mubr.bf16.mxu0 0
  %2939 = vmatmul.mubr.bf16.gmra.mrb[0].mxu0 %v2797
  %v2940 = vpop.f32.mrb[0].mxu0
  %v2941 = vadd.f32 0.0, %v2940
  %v2942 = vpop.f32.mrb[0].mxu0
  %v2943 = vadd.f32 0.0, %v2942
  %v2944 = vpop.f32.mrb[0].mxu0
  %v2945 = vadd.f32 0.0, %v2944
  %v2946 = vpop.f32.mrb[0].mxu0
  %v2947 = vadd.f32 0.0, %v2946
  %2948 = vmatprep.mubr.bf16.mxu0 0
  %2949 = vmatmul.mubr.bf16.gmra.mrb[0].mxu0 %v2798
  %v2950 = vpop.f32.mrb[0].mxu0
  %v2951 = vadd.f32 0.0, %v2950
  %v2952 = vpop.f32.mrb[0].mxu0
  %v2953 = vadd.f32 0.0, %v2952
  %v2954 = vpop.f32.mrb[0].mxu0
  %v2955 = vpop.f32.mrb[0].mxu0
  %2956 = vdwg.mxu0
  %v2957 = vadd.f32 %v2787, %v2931
  %v2958 = vadd.f32 %v2788, %v2933
  %v2959 = vadd.f32 %v2789, %v2935
  %v2960 = vadd.f32 %v2790, %v2937
  %v2961 = vadd.f32 %v2791, %v2941
  %v2962 = vadd.f32 %v2792, %v2943
  %v2963 = vadd.f32 %v2793, %v2945
  %v2964 = vadd.f32 %v2794, %v2947
  %v2965 = vadd.f32 %v2795, %v2951
  %v2966 = vadd.f32 %v2796, %v2953
  %v2967 = vmax.f32 %v2957, %v2958
  %v2968 = vmax.f32 %v2959, %v2960
  %v2969 = vmax.f32 %v2961, %v2962
  %v2970 = vmax.f32 %v2963, %v2964
  %v2971 = vmax.f32 %v2965, %v2966
  %2972 = vmatprep.subr.bf16.mxu0 %v2222
  %2973 = vmatpush1.bf16.msra.mxu0 %v2221
  %2974 = vmatprep.subr.bf16.mxu0 %v2224
  %2975 = vmatpush1.bf16.msra.mxu0 %v2223
  %2976 = vmatprep.subr.bf16.mxu0 %v2226
  %2977 = vmatpush1.bf16.msra.mxu0 %v2225
  %2978 = vmatprep.subr.bf16.mxu0 %v2228
  %2979 = vmatpush1.bf16.msra.mxu0 %v2227
  %2980 = vmatprep.subr.bf16.mxu0 %v2230
  %2981 = vmatpush1.bf16.msra.mxu0 %v2229
  %2982 = vmatprep.subr.bf16.mxu0 %v2232
  %2983 = vmatpush1.bf16.msra.mxu0 %v2231
  %2984 = vmatprep.subr.bf16.mxu0 %v2234
  %2985 = vmatpush1.bf16.msra.mxu0 %v2233
  %2986 = vmatprep.subr.bf16.mxu0 %v2236
  %2987 = vmatpush1.bf16.msra.mxu0 %v2235
  %2988 = vmatprep.subr.bf16.mxu0 0
  %2989 = vmatpush1.bf16.msra.mxu0 0
  %2990 = vmatprep.subr.bf16.mxu0 0
  %2991 = vmatpush1.bf16.msra.mxu0 0
  %2992 = vmatprep.subr.bf16.mxu0 0
  %2993 = vmatpush1.bf16.msra.mxu0 0
  %2994 = vmatprep.subr.bf16.mxu0 0
  %2995 = vmatpush1.bf16.msra.mxu0 0
  %2996 = vmatprep.subr.bf16.mxu0 0
  %2997 = vmatpush1.bf16.msra.mxu0 0
  %2998 = vmatprep.subr.bf16.mxu0 0
  %2999 = vmatpush1.bf16.msra.mxu0 0
  %3000 = vmatprep.subr.bf16.mxu0 0
  %3001 = vmatpush1.bf16.msra.mxu0 0
  %3002 = vmatprep.subr.bf16.mxu0 0
  %3003 = vmatpush1.bf16.msra.mxu0 0
  %3004 = vmatprep.mubr.bf16.mxu0 0
  %3005 = vmatmul.mubr.bf16.gmra.mrb[0].mxu0 %v2455
  %v3006 = vpop.f32.mrb[0].mxu0
  %v3007 = vadd.f32 0.0, %v3006
  %v3008 = vpop.f32.mrb[0].mxu0
  %v3009 = vadd.f32 0.0, %v3008
  %v3010 = vpop.f32.mrb[0].mxu0
  %v3011 = vadd.f32 0.0, %v3010
  %v3012 = vpop.f32.mrb[0].mxu0
  %v3013 = vadd.f32 0.0, %v3012
  %3014 = vmatprep.mubr.bf16.mxu0 0
  %3015 = vmatmul.mubr.bf16.gmra.mrb[0].mxu0 %v2456
  %v3016 = vpop.f32.mrb[0].mxu0
  %v3017 = vadd.f32 0.0, %v3016
  %v3018 = vpop.f32.mrb[0].mxu0
  %v3019 = vadd.f32 0.0, %v3018
  %v3020 = vpop.f32.mrb[0].mxu0
  %v3021 = vadd.f32 0.0, %v3020
  %v3022 = vpop.f32.mrb[0].mxu0
  %v3023 = vadd.f32 0.0, %v3022
  %3024 = vmatprep.mubr.bf16.mxu0 0
  %3025 = vmatmul.mubr.bf16.gmra.mrb[0].mxu0 %v2457
  %v3026 = vpop.f32.mrb[0].mxu0
  %v3027 = vadd.f32 0.0, %v3026
  %v3028 = vpop.f32.mrb[0].mxu0
  %v3029 = vadd.f32 0.0, %v3028
  %v3030 = vpop.f32.mrb[0].mxu0
  %v3031 = vpop.f32.mrb[0].mxu0
  %3032 = vdwg.mxu0
  %3033 = vmatprep.subr.bf16.mxu0 %v2363
  %3034 = vmatpush1.bf16.msra.mxu0 %v2362
  %3035 = vmatprep.subr.bf16.mxu0 %v2365
  %3036 = vmatpush1.bf16.msra.mxu0 %v2364
  %3037 = vmatprep.subr.bf16.mxu0 %v2367
  %3038 = vmatpush1.bf16.msra.mxu0 %v2366
  %3039 = vmatprep.subr.bf16.mxu0 %v2369
  %3040 = vmatpush1.bf16.msra.mxu0 %v2368
  %3041 = vmatprep.subr.bf16.mxu0 %v2371
  %3042 = vmatpush1.bf16.msra.mxu0 %v2370
  %3043 = vmatprep.subr.bf16.mxu0 %v2373
  %3044 = vmatpush1.bf16.msra.mxu0 %v2372
  %3045 = vmatprep.subr.bf16.mxu0 %v2375
  %3046 = vmatpush1.bf16.msra.mxu0 %v2374
  %3047 = vmatprep.subr.bf16.mxu0 %v2377
  %3048 = vmatpush1.bf16.msra.mxu0 %v2376
  %3049 = vmatprep.subr.bf16.mxu0 0
  %3050 = vmatpush1.bf16.msra.mxu0 0
  %3051 = vmatprep.subr.bf16.mxu0 0
  %3052 = vmatpush1.bf16.msra.mxu0 0
  %3053 = vmatprep.subr.bf16.mxu0 0
  %3054 = vmatpush1.bf16.msra.mxu0 0
  %3055 = vmatprep.subr.bf16.mxu0 0
  %3056 = vmatpush1.bf16.msra.mxu0 0
  %3057 = vmatprep.subr.bf16.mxu0 0
  %3058 = vmatpush1.bf16.msra.mxu0 0
  %3059 = vmatprep.subr.bf16.mxu0 0
  %3060 = vmatpush1.bf16.msra.mxu0 0
  %3061 = vmatprep.subr.bf16.mxu0 0
  %3062 = vmatpush1.bf16.msra.mxu0 0
  %3063 = vmatprep.subr.bf16.mxu0 0
  %3064 = vmatpush1.bf16.msra.mxu0 0
  %3065 = vmatprep.mubr.bf16.mxu0 0
  %3066 = vmatmul.mubr.bf16.gmra.mrb[0].mxu0 %v2153
  %v3067 = vpop.f32.mrb[0].mxu0
  %v3068 = vadd.f32 %v3007, %v3067
  %v3069 = vpop.f32.mrb[0].mxu0
  %v3070 = vadd.f32 %v3009, %v3069
  %v3071 = vpop.f32.mrb[0].mxu0
  %v3072 = vadd.f32 %v3011, %v3071
  %v3073 = vpop.f32.mrb[0].mxu0
  %v3074 = vadd.f32 %v3013, %v3073
  %3075 = vmatprep.mubr.bf16.mxu0 0
  %3076 = vmatmul.mubr.bf16.gmra.mrb[0].mxu0 %v2154
  %v3077 = vpop.f32.mrb[0].mxu0
  %v3078 = vadd.f32 %v3017, %v3077
  %v3079 = vpop.f32.mrb[0].mxu0
  %v3080 = vadd.f32 %v3019, %v3079
  %v3081 = vpop.f32.mrb[0].mxu0
  %v3082 = vadd.f32 %v3021, %v3081
  %v3083 = vpop.f32.mrb[0].mxu0
  %v3084 = vadd.f32 %v3023, %v3083
  %3085 = vmatprep.mubr.bf16.mxu0 0
  %3086 = vmatmul.mubr.bf16.gmra.mrb[0].mxu0 %v2155
  %v3087 = vpop.f32.mrb[0].mxu0
  %v3088 = vadd.f32 %v3027, %v3087
  %v3089 = vpop.f32.mrb[0].mxu0
  %v3090 = vadd.f32 %v3029, %v3089
  %v3091 = vpop.f32.mrb[0].mxu0
  %v3092 = vpop.f32.mrb[0].mxu0
  %3093 = vdwg.mxu0
  %3094 = vmatprep.subr.bf16.mxu0 %v2524
  %3095 = vmatpush1.bf16.msra.mxu0 %v2523
  %3096 = vmatprep.subr.bf16.mxu0 %v2526
  %3097 = vmatpush1.bf16.msra.mxu0 %v2525
  %3098 = vmatprep.subr.bf16.mxu0 %v2528
  %3099 = vmatpush1.bf16.msra.mxu0 %v2527
  %3100 = vmatprep.subr.bf16.mxu0 %v2530
  %3101 = vmatpush1.bf16.msra.mxu0 %v2529
  %3102 = vmatprep.subr.bf16.mxu0 %v2532
  %3103 = vmatpush1.bf16.msra.mxu0 %v2531
  %3104 = vmatprep.subr.bf16.mxu0 %v2534
  %3105 = vmatpush1.bf16.msra.mxu0 %v2533
  %3106 = vmatprep.subr.bf16.mxu0 %v2536
  %3107 = vmatpush1.bf16.msra.mxu0 %v2535
  %3108 = vmatprep.subr.bf16.mxu0 %v2538
  %3109 = vmatpush1.bf16.msra.mxu0 %v2537
  %3110 = vmatprep.subr.bf16.mxu0 0
  %3111 = vmatpush1.bf16.msra.mxu0 0
  %3112 = vmatprep.subr.bf16.mxu0 0
  %3113 = vmatpush1.bf16.msra.mxu0 0
  %3114 = vmatprep.subr.bf16.mxu0 0
  %3115 = vmatpush1.bf16.msra.mxu0 0
  %3116 = vmatprep.subr.bf16.mxu0 0
  %3117 = vmatpush1.bf16.msra.mxu0 0
  %3118 = vmatprep.subr.bf16.mxu0 0
  %3119 = vmatpush1.bf16.msra.mxu0 0
  %3120 = vmatprep.subr.bf16.mxu0 0
  %3121 = vmatpush1.bf16.msra.mxu0 0
  %3122 = vmatprep.subr.bf16.mxu0 0
  %3123 = vmatpush1.bf16.msra.mxu0 0
  %3124 = vmatprep.subr.bf16.mxu0 0
  %3125 = vmatpush1.bf16.msra.mxu0 0
  %3126 = vmatprep.mubr.bf16.mxu0 0
  %3127 = vmatmul.mubr.bf16.gmra.mrb[0].mxu0 %v2626
  %v3128 = vpop.f32.mrb[0].mxu0
  %v3129 = vadd.f32 0.0, %v3128
  %v3130 = vpop.f32.mrb[0].mxu0
  %v3131 = vadd.f32 0.0, %v3130
  %v3132 = vpop.f32.mrb[0].mxu0
  %v3133 = vadd.f32 0.0, %v3132
  %v3134 = vpop.f32.mrb[0].mxu0
  %v3135 = vadd.f32 0.0, %v3134
  %3136 = vmatprep.mubr.bf16.mxu0 0
  %3137 = vmatmul.mubr.bf16.gmra.mrb[0].mxu0 %v2627
  %v3138 = vpop.f32.mrb[0].mxu0
  %v3139 = vadd.f32 0.0, %v3138
  %v3140 = vpop.f32.mrb[0].mxu0
  %v3141 = vadd.f32 0.0, %v3140
  %v3142 = vpop.f32.mrb[0].mxu0
  %v3143 = vadd.f32 0.0, %v3142
  %v3144 = vpop.f32.mrb[0].mxu0
  %v3145 = vadd.f32 0.0, %v3144
  %3146 = vmatprep.mubr.bf16.mxu0 0
  %3147 = vmatmul.mubr.bf16.gmra.mrb[0].mxu0 %v2628
  %v3148 = vpop.f32.mrb[0].mxu0
  %v3149 = vadd.f32 0.0, %v3148
  %v3150 = vpop.f32.mrb[0].mxu0
  %v3151 = vadd.f32 0.0, %v3150
  %v3152 = vpop.f32.mrb[0].mxu0
  %v3153 = vpop.f32.mrb[0].mxu0
  %3154 = vdwg.mxu0
  %v3155 = vadd.f32 %v3068, %v3129
  %v3156 = vadd.f32 %v3070, %v3131
  %v3157 = vadd.f32 %v3072, %v3133
  %v3158 = vadd.f32 %v3074, %v3135
  %v3159 = vadd.f32 %v3078, %v3139
  %v3160 = vadd.f32 %v3080, %v3141
  %v3161 = vadd.f32 %v3082, %v3143
  %v3162 = vadd.f32 %v3084, %v3145
  %v3163 = vadd.f32 %v3088, %v3149
  %v3164 = vadd.f32 %v3090, %v3151
  %3165 = vmatprep.subr.bf16.mxu0 %v2695
  %3166 = vmatpush1.bf16.msra.mxu0 %v2694
  %3167 = vmatprep.subr.bf16.mxu0 %v2697
  %3168 = vmatpush1.bf16.msra.mxu0 %v2696
  %3169 = vmatprep.subr.bf16.mxu0 %v2699
  %3170 = vmatpush1.bf16.msra.mxu0 %v2698
  %3171 = vmatprep.subr.bf16.mxu0 %v2701
  %3172 = vmatpush1.bf16.msra.mxu0 %v2700
  %3173 = vmatprep.subr.bf16.mxu0 %v2703
  %3174 = vmatpush1.bf16.msra.mxu0 %v2702
  %3175 = vmatprep.subr.bf16.mxu0 %v2705
  %3176 = vmatpush1.bf16.msra.mxu0 %v2704
  %3177 = vmatprep.subr.bf16.mxu0 %v2707
  %3178 = vmatpush1.bf16.msra.mxu0 %v2706
  %3179 = vmatprep.subr.bf16.mxu0 %v2709
  %3180 = vmatpush1.bf16.msra.mxu0 %v2708
  %3181 = vmatprep.subr.bf16.mxu0 0
  %3182 = vmatpush1.bf16.msra.mxu0 0
  %3183 = vmatprep.subr.bf16.mxu0 0
  %3184 = vmatpush1.bf16.msra.mxu0 0
  %3185 = vmatprep.subr.bf16.mxu0 0
  %3186 = vmatpush1.bf16.msra.mxu0 0
  %3187 = vmatprep.subr.bf16.mxu0 0
  %3188 = vmatpush1.bf16.msra.mxu0 0
  %3189 = vmatprep.subr.bf16.mxu0 0
  %3190 = vmatpush1.bf16.msra.mxu0 0
  %3191 = vmatprep.subr.bf16.mxu0 0
  %3192 = vmatpush1.bf16.msra.mxu0 0
  %3193 = vmatprep.subr.bf16.mxu0 0
  %3194 = vmatpush1.bf16.msra.mxu0 0
  %3195 = vmatprep.subr.bf16.mxu0 0
  %3196 = vmatpush1.bf16.msra.mxu0 0
  %3197 = vmatprep.mubr.bf16.mxu0 0
  %3198 = vmatmul.mubr.bf16.gmra.mrb[0].mxu0 %v2135
  %v3199 = vpop.f32.mrb[0].mxu0
  %v3200 = vadd.f32 0.0, %v3199
  %v3201 = vpop.f32.mrb[0].mxu0
  %v3202 = vadd.f32 0.0, %v3201
  %v3203 = vpop.f32.mrb[0].mxu0
  %v3204 = vadd.f32 0.0, %v3203
  %v3205 = vpop.f32.mrb[0].mxu0
  %v3206 = vadd.f32 0.0, %v3205
  %3207 = vmatprep.mubr.bf16.mxu0 0
  %3208 = vmatmul.mubr.bf16.gmra.mrb[0].mxu0 %v2797
  %v3209 = vpop.f32.mrb[0].mxu0
  %v3210 = vadd.f32 0.0, %v3209
  %v3211 = vpop.f32.mrb[0].mxu0
  %v3212 = vadd.f32 0.0, %v3211
  %v3213 = vpop.f32.mrb[0].mxu0
  %v3214 = vadd.f32 0.0, %v3213
  %v3215 = vpop.f32.mrb[0].mxu0
  %v3216 = vadd.f32 0.0, %v3215
  %3217 = vmatprep.mubr.bf16.mxu0 0
  %3218 = vmatmul.mubr.bf16.gmra.mrb[0].mxu0 %v2798
  %v3219 = vpop.f32.mrb[0].mxu0
  %v3220 = vadd.f32 0.0, %v3219
  %v3221 = vpop.f32.mrb[0].mxu0
  %v3222 = vadd.f32 0.0, %v3221
  %v3223 = vpop.f32.mrb[0].mxu0
  %v3224 = vpop.f32.mrb[0].mxu0
  %3225 = vdwg.mxu0
  %v3226 = vadd.f32 %v3155, %v3200
  %v3227 = vadd.f32 %v3156, %v3202
  %v3228 = vadd.f32 %v3157, %v3204
  %v3229 = vadd.f32 %v3158, %v3206
  %v3230 = vadd.f32 %v3159, %v3210
  %v3231 = vadd.f32 %v3160, %v3212
  %v3232 = vadd.f32 %v3161, %v3214
  %v3233 = vadd.f32 %v3162, %v3216
  %v3234 = vadd.f32 %v3163, %v3220
  %v3235 = vadd.f32 %v3164, %v3222
  %v3236 = vpack.c.bf16 %v2131, %v2129
  %v3237 = vpack.c.bf16 %v2133, %v2133
  %3238 = vmatprep.subr.bf16.mxu0 %v2865
  %3239 = vmatpush1.bf16.msra.mxu0 %v2864
  %3240 = vmatprep.subr.bf16.mxu0 %v2867
  %3241 = vmatpush1.bf16.msra.mxu0 %v2866
  %3242 = vmatprep.subr.bf16.mxu0 %v2869
  %3243 = vmatpush1.bf16.msra.mxu0 %v2868
  %3244 = vmatprep.subr.bf16.mxu0 %v2871
  %3245 = vmatpush1.bf16.msra.mxu0 %v2870
  %3246 = vmatprep.subr.bf16.mxu0 %v2873
  %3247 = vmatpush1.bf16.msra.mxu0 %v2872
  %3248 = vmatprep.subr.bf16.mxu0 %v2875
  %3249 = vmatpush1.bf16.msra.mxu0 %v2874
  %3250 = vmatprep.subr.bf16.mxu0 %v2877
  %3251 = vmatpush1.bf16.msra.mxu0 %v2876
  %3252 = vmatprep.subr.bf16.mxu0 %v2879
  %3253 = vmatpush1.bf16.msra.mxu0 %v2878
  %3254 = vmatprep.subr.bf16.mxu0 0
  %3255 = vmatpush1.bf16.msra.mxu0 0
  %3256 = vmatprep.subr.bf16.mxu0 0
  %3257 = vmatpush1.bf16.msra.mxu0 0
  %3258 = vmatprep.subr.bf16.mxu0 0
  %3259 = vmatpush1.bf16.msra.mxu0 0
  %3260 = vmatprep.subr.bf16.mxu0 0
  %3261 = vmatpush1.bf16.msra.mxu0 0
  %3262 = vmatprep.subr.bf16.mxu0 0
  %3263 = vmatpush1.bf16.msra.mxu0 0
  %3264 = vmatprep.subr.bf16.mxu0 0
  %3265 = vmatpush1.bf16.msra.mxu0 0
  %3266 = vmatprep.subr.bf16.mxu0 0
  %3267 = vmatpush1.bf16.msra.mxu0 0
  %3268 = vmatprep.subr.bf16.mxu0 0
  %3269 = vmatpush1.bf16.msra.mxu0 0
  %3270 = vmatprep.mubr.bf16.mxu0 0
  %3271 = vmatmul.mubr.bf16.gmra.mrb[0].mxu0 %v2154
  %v3272 = vpop.f32.mrb[0].mxu0
  %v3273 = vadd.f32 0.0, %v3272
  %v3274 = vpop.f32.mrb[0].mxu0
  %v3275 = vadd.f32 0.0, %v3274
  %v3276 = vpop.f32.mrb[0].mxu0
  %v3277 = vadd.f32 0.0, %v3276
  %v3278 = vpop.f32.mrb[0].mxu0
  %v3279 = vadd.f32 0.0, %v3278
  %3280 = vmatprep.mubr.bf16.mxu0 0
  %3281 = vmatmul.mubr.bf16.gmra.mrb[0].mxu0 %v3236
  %v3282 = vpop.f32.mrb[0].mxu0
  %v3283 = vadd.f32 0.0, %v3282
  %v3284 = vpop.f32.mrb[0].mxu0
  %v3285 = vadd.f32 0.0, %v3284
  %v3286 = vpop.f32.mrb[0].mxu0
  %v3287 = vadd.f32 0.0, %v3286
  %v3288 = vpop.f32.mrb[0].mxu0
  %v3289 = vadd.f32 0.0, %v3288
  %3290 = vmatprep.mubr.bf16.mxu0 0
  %3291 = vmatmul.mubr.bf16.gmra.mrb[0].mxu0 %v3237
  %v3292 = vpop.f32.mrb[0].mxu0
  %v3293 = vadd.f32 0.0, %v3292
  %v3294 = vpop.f32.mrb[0].mxu0
  %v3295 = vadd.f32 0.0, %v3294
  %v3296 = vpop.f32.mrb[0].mxu0
  %v3297 = vpop.f32.mrb[0].mxu0
  %3298 = vdwg.mxu0
  %v3299 = vadd.f32 %v3226, %v3273
  %v3300 = vadd.f32 %v3227, %v3275
  %v3301 = vadd.f32 %v3228, %v3277
  %v3302 = vadd.f32 %v3229, %v3279
  %v3303 = vadd.f32 %v3230, %v3283
  %v3304 = vadd.f32 %v3231, %v3285
  %v3305 = vadd.f32 %v3232, %v3287
  %v3306 = vadd.f32 %v3233, %v3289
  %v3307 = vadd.f32 %v3234, %v3293
  %v3308 = vadd.f32 %v3235, %v3295
  %v3309 = vmax.f32 %v3299, %v3300
  %v3310 = vmax.f32 %v3301, %v3302
  %v3311 = vmax.f32 %v3303, %v3304
  %v3312 = vmax.f32 %v3305, %v3306
  %v3313 = vmax.f32 %v3307, %v3308
  %v3314 = vmax.f32 %v2967, %v3309
  %v3315 = vmax.f32 %v2968, %v3310
  %v3316 = vmax.f32 %v2969, %v3311
  %v3317 = vmax.f32 %v2970, %v3312
  %v3318 = vmax.f32 %v2971, %v3313
  %v3319 = vld [vmem:[%s4] sm:$0x1]
  %v3321 = vlaneseq
  %v3322 = vshrl.u32 %v3321, 7
  %v3323 = vsub.s32 0, %v3322
  %v3324 = vrot.slane %v3319, %v3323
  %v3326 = vadd.f32 %v3314, %v3324
  %v3327 = vadd.f32 %v3315, %v3324
  %v3328 = vadd.f32 %v3316, %v3324
  %v3329 = vadd.f32 %v3317, %v3324
  %v3330 = vadd.f32 %v3318, %v3324
  %v3331 = vmax.f32 %v3326, 0.0
  %v3332 = vmax.f32 %v3327, 0.0
  %v3333 = vmax.f32 %v3328, 0.0
  %v3334 = vmax.f32 %v3329, 0.0
  %v3335 = vmax.f32 %v3330, 0.0
  %v3336 = vpack.c.bf16 %v3331, %v3331
  %v3337 = vld [vmem:[%s5] sm:$0xf]
  %v3338 = vld [vmem:[%s5 + $0x4] sm:$0xf]
  %v3339 = vld [vmem:[%s5 + $0x8] sm:$0xf]
  %v3340 = vld [vmem:[%s5 + $0xc] sm:$0xf]
  %v3341 = vld [vmem:[%s5 + $0x10] sm:$0xf]
  %v3342 = vld [vmem:[%s5 + $0x14] sm:$0xf]
  %v3343 = vld [vmem:[%s5 + $0x18] sm:$0xf]
  %v3344 = vld [vmem:[%s5 + $0x1c] sm:$0xf]
  %v3345 = vld [vmem:[%s5 + $0x20] sm:$0xf]
  %v3346 = vld [vmem:[%s5 + $0x24] sm:$0xf]
  %v3347 = vld [vmem:[%s5 + $0x28] sm:$0xf]
  %v3348 = vld [vmem:[%s5 + $0x2c] sm:$0xf]
  %v3349 = vld [vmem:[%s5 + $0x30] sm:$0xf]
  %v3350 = vld [vmem:[%s5 + $0x34] sm:$0xf]
  %v3351 = vld [vmem:[%s5 + $0x38] sm:$0xf]
  %v3352 = vld [vmem:[%s5 + $0x3c] sm:$0xf]
  %v3353 = vpack.c.bf16 %v3332, %v3332
  %s3354 = scalar_lea.vmem %s5, 64
  %v3355 = vld [vmem:[%s3354] sm:$0xf]
  %v3356 = vld [vmem:[%s3354 + $0x4] sm:$0xf]
  %v3357 = vld [vmem:[%s3354 + $0x8] sm:$0xf]
  %v3358 = vld [vmem:[%s3354 + $0xc] sm:$0xf]
  %v3359 = vld [vmem:[%s3354 + $0x10] sm:$0xf]
  %v3360 = vld [vmem:[%s3354 + $0x14] sm:$0xf]
  %v3361 = vld [vmem:[%s3354 + $0x18] sm:$0xf]
  %v3362 = vld [vmem:[%s3354 + $0x1c] sm:$0xf]
  %v3363 = vld [vmem:[%s3354 + $0x20] sm:$0xf]
  %v3364 = vld [vmem:[%s3354 + $0x24] sm:$0xf]
  %v3365 = vld [vmem:[%s3354 + $0x28] sm:$0xf]
  %v3366 = vld [vmem:[%s3354 + $0x2c] sm:$0xf]
  %v3367 = vld [vmem:[%s3354 + $0x30] sm:$0xf]
  %v3368 = vld [vmem:[%s3354 + $0x34] sm:$0xf]
  %v3369 = vld [vmem:[%s3354 + $0x38] sm:$0xf]
  %v3370 = vld [vmem:[%s3354 + $0x3c] sm:$0xf]
  %v3387 = vunpack.c.l.b16 %v3355
  %v3388 = vunpack.c.l.b16 %v3356
  %v3389 = vunpack.c.l.b16 %v3357
  %v3390 = vunpack.c.l.b16 %v3358
  %v3391 = vunpack.c.l.b16 %v3359
  %v3392 = vunpack.c.l.b16 %v3360
  %v3393 = vunpack.c.l.b16 %v3361
  %v3394 = vunpack.c.l.b16 %v3362
  %v3395 = vunpack.c.l.b16 %v3363
  %v3396 = vunpack.c.l.b16 %v3364
  %v3397 = vunpack.c.l.b16 %v3365
  %v3398 = vunpack.c.l.b16 %v3366
  %v3399 = vunpack.c.l.b16 %v3367
  %v3400 = vunpack.c.l.b16 %v3368
  %v3401 = vunpack.c.l.b16 %v3369
  %v3402 = vunpack.c.l.b16 %v3370
  %v3403 = vpack.c.b16 %v3388, %v3387
  %v3404 = vpack.c.b16 %v3390, %v3389
  %v3405 = vpack.c.b16 %v3392, %v3391
  %v3406 = vpack.c.b16 %v3394, %v3393
  %v3407 = vpack.c.b16 %v3396, %v3395
  %v3408 = vpack.c.b16 %v3398, %v3397
  %v3409 = vpack.c.b16 %v3400, %v3399
  %v3410 = vpack.c.b16 %v3402, %v3401
  %3419 = vmatprep.subr.bf16.mxu0 0
  %3420 = vmatpush1.bf16.msra.mxu0 %v3403
  %3421 = vmatprep.subr.bf16.mxu0 0
  %3422 = vmatpush1.bf16.msra.mxu0 %v3404
  %3423 = vmatprep.subr.bf16.mxu0 0
  %3424 = vmatpush1.bf16.msra.mxu0 %v3405
  %3425 = vmatprep.subr.bf16.mxu0 0
  %3426 = vmatpush1.bf16.msra.mxu0 %v3406
  %3427 = vmatprep.subr.bf16.mxu0 0
  %3428 = vmatpush1.bf16.msra.mxu0 %v3407
  %3429 = vmatprep.subr.bf16.mxu0 0
  %3430 = vmatpush1.bf16.msra.mxu0 %v3408
  %3431 = vmatprep.subr.bf16.mxu0 0
  %3432 = vmatpush1.bf16.msra.mxu0 %v3409
  %3433 = vmatprep.subr.bf16.mxu0 0
  %3434 = vmatpush1.bf16.msra.mxu0 %v3410
  %3435 = vmatprep.subr.bf16.mxu0 0
  %3436 = vmatpush1.bf16.msra.mxu0 0
  %3437 = vmatprep.subr.bf16.mxu0 0
  %3438 = vmatpush1.bf16.msra.mxu0 0
  %3439 = vmatprep.subr.bf16.mxu0 0
  %3440 = vmatpush1.bf16.msra.mxu0 0
  %3441 = vmatprep.subr.bf16.mxu0 0
  %3442 = vmatpush1.bf16.msra.mxu0 0
  %3443 = vmatprep.subr.bf16.mxu0 0
  %3444 = vmatpush1.bf16.msra.mxu0 0
  %3445 = vmatprep.subr.bf16.mxu0 0
  %3446 = vmatpush1.bf16.msra.mxu0 0
  %3447 = vmatprep.subr.bf16.mxu0 0
  %3448 = vmatpush1.bf16.msra.mxu0 0
  %3449 = vmatprep.subr.bf16.mxu0 0
  %3450 = vmatpush1.bf16.msra.mxu0 0
  %3451 = vmatprep.mubr.bf16.mxu0 0
  %3452 = vmatmul.mubr.bf16.gmra.mrb[0].mxu0 %v3353
  %v3453 = vpop.f32.mrb[0].mxu0
  %v3454 = vadd.f32 0.0, %v3453
  %v3455 = vpop.f32.mrb[0].mxu0
  %v3456 = vpop.f32.mrb[0].mxu0
  %v3457 = vpop.f32.mrb[0].mxu0
  %3458 = vdwg.mxu0
  %v3475 = vunpack.c.l.b16 %v3337
  %v3476 = vunpack.c.l.b16 %v3338
  %v3477 = vunpack.c.l.b16 %v3339
  %v3478 = vunpack.c.l.b16 %v3340
  %v3479 = vunpack.c.l.b16 %v3341
  %v3480 = vunpack.c.l.b16 %v3342
  %v3481 = vunpack.c.l.b16 %v3343
  %v3482 = vunpack.c.l.b16 %v3344
  %v3483 = vunpack.c.l.b16 %v3345
  %v3484 = vunpack.c.l.b16 %v3346
  %v3485 = vunpack.c.l.b16 %v3347
  %v3486 = vunpack.c.l.b16 %v3348
  %v3487 = vunpack.c.l.b16 %v3349
  %v3488 = vunpack.c.l.b16 %v3350
  %v3489 = vunpack.c.l.b16 %v3351
  %v3490 = vunpack.c.l.b16 %v3352
  %v3491 = vpack.c.b16 %v3476, %v3475
  %v3492 = vpack.c.b16 %v3478, %v3477
  %v3493 = vpack.c.b16 %v3480, %v3479
  %v3494 = vpack.c.b16 %v3482, %v3481
  %v3495 = vpack.c.b16 %v3484, %v3483
  %v3496 = vpack.c.b16 %v3486, %v3485
  %v3497 = vpack.c.b16 %v3488, %v3487
  %v3498 = vpack.c.b16 %v3490, %v3489
  %3507 = vmatprep.subr.bf16.mxu0 0
  %3508 = vmatpush1.bf16.msra.mxu0 %v3491
  %3509 = vmatprep.subr.bf16.mxu0 0
  %3510 = vmatpush1.bf16.msra.mxu0 %v3492
  %3511 = vmatprep.subr.bf16.mxu0 0
  %3512 = vmatpush1.bf16.msra.mxu0 %v3493
  %3513 = vmatprep.subr.bf16.mxu0 0
  %3514 = vmatpush1.bf16.msra.mxu0 %v3494
  %3515 = vmatprep.subr.bf16.mxu0 0
  %3516 = vmatpush1.bf16.msra.mxu0 %v3495
  %3517 = vmatprep.subr.bf16.mxu0 0
  %3518 = vmatpush1.bf16.msra.mxu0 %v3496
  %3519 = vmatprep.subr.bf16.mxu0 0
  %3520 = vmatpush1.bf16.msra.mxu0 %v3497
  %3521 = vmatprep.subr.bf16.mxu0 0
  %3522 = vmatpush1.bf16.msra.mxu0 %v3498
  %3523 = vmatprep.subr.bf16.mxu0 0
  %3524 = vmatpush1.bf16.msra.mxu0 0
  %3525 = vmatprep.subr.bf16.mxu0 0
  %3526 = vmatpush1.bf16.msra.mxu0 0
  %3527 = vmatprep.subr.bf16.mxu0 0
  %3528 = vmatpush1.bf16.msra.mxu0 0
  %3529 = vmatprep.subr.bf16.mxu0 0
  %3530 = vmatpush1.bf16.msra.mxu0 0
  %3531 = vmatprep.subr.bf16.mxu0 0
  %3532 = vmatpush1.bf16.msra.mxu0 0
  %3533 = vmatprep.subr.bf16.mxu0 0
  %3534 = vmatpush1.bf16.msra.mxu0 0
  %3535 = vmatprep.subr.bf16.mxu0 0
  %3536 = vmatpush1.bf16.msra.mxu0 0
  %3537 = vmatprep.subr.bf16.mxu0 0
  %3538 = vmatpush1.bf16.msra.mxu0 0
  %3539 = vmatprep.mubr.bf16.mxu0 0
  %3540 = vmatmul.mubr.bf16.gmra.mrb[0].mxu0 %v3336
  %v3541 = vpop.f32.mrb[0].mxu0
  %v3542 = vadd.f32 %v3454, %v3541
  %v3543 = vpop.f32.mrb[0].mxu0
  %v3544 = vpop.f32.mrb[0].mxu0
  %v3545 = vpop.f32.mrb[0].mxu0
  %3546 = vdwg.mxu0
  %v3547 = vpack.c.bf16 %v3333, %v3333
  %s3548 = scalar_lea.vmem %s5, 128
  %v3549 = vld [vmem:[%s3548] sm:$0xf]
  %v3550 = vld [vmem:[%s3548 + $0x4] sm:$0xf]
  %v3551 = vld [vmem:[%s3548 + $0x8] sm:$0xf]
  %v3552 = vld [vmem:[%s3548 + $0xc] sm:$0xf]
  %v3553 = vld [vmem:[%s3548 + $0x10] sm:$0xf]
  %v3554 = vld [vmem:[%s3548 + $0x14] sm:$0xf]
  %v3555 = vld [vmem:[%s3548 + $0x18] sm:$0xf]
  %v3556 = vld [vmem:[%s3548 + $0x1c] sm:$0xf]
  %v3557 = vld [vmem:[%s3548 + $0x20] sm:$0xf]
  %v3558 = vld [vmem:[%s3548 + $0x24] sm:$0xf]
  %v3559 = vld [vmem:[%s3548 + $0x28] sm:$0xf]
  %v3560 = vld [vmem:[%s3548 + $0x2c] sm:$0xf]
  %v3561 = vld [vmem:[%s3548 + $0x30] sm:$0xf]
  %v3562 = vld [vmem:[%s3548 + $0x34] sm:$0xf]
  %v3563 = vld [vmem:[%s3548 + $0x38] sm:$0xf]
  %v3564 = vld [vmem:[%s3548 + $0x3c] sm:$0xf]
  %v3581 = vunpack.c.l.b16 %v3549
  %v3582 = vunpack.c.l.b16 %v3550
  %v3583 = vunpack.c.l.b16 %v3551
  %v3584 = vunpack.c.l.b16 %v3552
  %v3585 = vunpack.c.l.b16 %v3553
  %v3586 = vunpack.c.l.b16 %v3554
  %v3587 = vunpack.c.l.b16 %v3555
  %v3588 = vunpack.c.l.b16 %v3556
  %v3589 = vunpack.c.l.b16 %v3557
  %v3590 = vunpack.c.l.b16 %v3558
  %v3591 = vunpack.c.l.b16 %v3559
  %v3592 = vunpack.c.l.b16 %v3560
  %v3593 = vunpack.c.l.b16 %v3561
  %v3594 = vunpack.c.l.b16 %v3562
  %v3595 = vunpack.c.l.b16 %v3563
  %v3596 = vunpack.c.l.b16 %v3564
  %v3597 = vpack.c.b16 %v3582, %v3581
  %v3598 = vpack.c.b16 %v3584, %v3583
  %v3599 = vpack.c.b16 %v3586, %v3585
  %v3600 = vpack.c.b16 %v3588, %v3587
  %v3601 = vpack.c.b16 %v3590, %v3589
  %v3602 = vpack.c.b16 %v3592, %v3591
  %v3603 = vpack.c.b16 %v3594, %v3593
  %v3604 = vpack.c.b16 %v3596, %v3595
  %3613 = vmatprep.subr.bf16.mxu0 0
  %3614 = vmatpush1.bf16.msra.mxu0 %v3597
  %3615 = vmatprep.subr.bf16.mxu0 0
  %3616 = vmatpush1.bf16.msra.mxu0 %v3598
  %3617 = vmatprep.subr.bf16.mxu0 0
  %3618 = vmatpush1.bf16.msra.mxu0 %v3599
  %3619 = vmatprep.subr.bf16.mxu0 0
  %3620 = vmatpush1.bf16.msra.mxu0 %v3600
  %3621 = vmatprep.subr.bf16.mxu0 0
  %3622 = vmatpush1.bf16.msra.mxu0 %v3601
  %3623 = vmatprep.subr.bf16.mxu0 0
  %3624 = vmatpush1.bf16.msra.mxu0 %v3602
  %3625 = vmatprep.subr.bf16.mxu0 0
  %3626 = vmatpush1.bf16.msra.mxu0 %v3603
  %3627 = vmatprep.subr.bf16.mxu0 0
  %3628 = vmatpush1.bf16.msra.mxu0 %v3604
  %3629 = vmatprep.subr.bf16.mxu0 0
  %3630 = vmatpush1.bf16.msra.mxu0 0
  %3631 = vmatprep.subr.bf16.mxu0 0
  %3632 = vmatpush1.bf16.msra.mxu0 0
  %3633 = vmatprep.subr.bf16.mxu0 0
  %3634 = vmatpush1.bf16.msra.mxu0 0
  %3635 = vmatprep.subr.bf16.mxu0 0
  %3636 = vmatpush1.bf16.msra.mxu0 0
  %3637 = vmatprep.subr.bf16.mxu0 0
  %3638 = vmatpush1.bf16.msra.mxu0 0
  %3639 = vmatprep.subr.bf16.mxu0 0
  %3640 = vmatpush1.bf16.msra.mxu0 0
  %3641 = vmatprep.subr.bf16.mxu0 0
  %3642 = vmatpush1.bf16.msra.mxu0 0
  %3643 = vmatprep.subr.bf16.mxu0 0
  %3644 = vmatpush1.bf16.msra.mxu0 0
  %3645 = vmatprep.mubr.bf16.mxu0 0
  %3646 = vmatmul.mubr.bf16.gmra.mrb[0].mxu0 %v3547
  %v3647 = vpop.f32.mrb[0].mxu0
  %v3648 = vadd.f32 0.0, %v3647
  %v3649 = vpop.f32.mrb[0].mxu0
  %v3650 = vpop.f32.mrb[0].mxu0
  %v3651 = vpop.f32.mrb[0].mxu0
  %3652 = vdwg.mxu0
  %v3653 = vadd.f32 %v3542, %v3648
  %v3654 = vpack.c.bf16 %v3334, %v3334
  %s3655 = scalar_lea.vmem %s5, 192
  %v3656 = vld [vmem:[%s3655] sm:$0xf]
  %v3657 = vld [vmem:[%s3655 + $0x4] sm:$0xf]
  %v3658 = vld [vmem:[%s3655 + $0x8] sm:$0xf]
  %v3659 = vld [vmem:[%s3655 + $0xc] sm:$0xf]
  %v3660 = vld [vmem:[%s3655 + $0x10] sm:$0xf]
  %v3661 = vld [vmem:[%s3655 + $0x14] sm:$0xf]
  %v3662 = vld [vmem:[%s3655 + $0x18] sm:$0xf]
  %v3663 = vld [vmem:[%s3655 + $0x1c] sm:$0xf]
  %v3664 = vld [vmem:[%s3655 + $0x20] sm:$0xf]
  %v3665 = vld [vmem:[%s3655 + $0x24] sm:$0xf]
  %v3666 = vld [vmem:[%s3655 + $0x28] sm:$0xf]
  %v3667 = vld [vmem:[%s3655 + $0x2c] sm:$0xf]
  %v3668 = vld [vmem:[%s3655 + $0x30] sm:$0xf]
  %v3669 = vld [vmem:[%s3655 + $0x34] sm:$0xf]
  %v3670 = vld [vmem:[%s3655 + $0x38] sm:$0xf]
  %v3671 = vld [vmem:[%s3655 + $0x3c] sm:$0xf]
  %v3688 = vunpack.c.l.b16 %v3656
  %v3689 = vunpack.c.l.b16 %v3657
  %v3690 = vunpack.c.l.b16 %v3658
  %v3691 = vunpack.c.l.b16 %v3659
  %v3692 = vunpack.c.l.b16 %v3660
  %v3693 = vunpack.c.l.b16 %v3661
  %v3694 = vunpack.c.l.b16 %v3662
  %v3695 = vunpack.c.l.b16 %v3663
  %v3696 = vunpack.c.l.b16 %v3664
  %v3697 = vunpack.c.l.b16 %v3665
  %v3698 = vunpack.c.l.b16 %v3666
  %v3699 = vunpack.c.l.b16 %v3667
  %v3700 = vunpack.c.l.b16 %v3668
  %v3701 = vunpack.c.l.b16 %v3669
  %v3702 = vunpack.c.l.b16 %v3670
  %v3703 = vunpack.c.l.b16 %v3671
  %v3704 = vpack.c.b16 %v3689, %v3688
  %v3705 = vpack.c.b16 %v3691, %v3690
  %v3706 = vpack.c.b16 %v3693, %v3692
  %v3707 = vpack.c.b16 %v3695, %v3694
  %v3708 = vpack.c.b16 %v3697, %v3696
  %v3709 = vpack.c.b16 %v3699, %v3698
  %v3710 = vpack.c.b16 %v3701, %v3700
  %v3711 = vpack.c.b16 %v3703, %v3702
  %3720 = vmatprep.subr.bf16.mxu0 0
  %3721 = vmatpush1.bf16.msra.mxu0 %v3704
  %3722 = vmatprep.subr.bf16.mxu0 0
  %3723 = vmatpush1.bf16.msra.mxu0 %v3705
  %3724 = vmatprep.subr.bf16.mxu0 0
  %3725 = vmatpush1.bf16.msra.mxu0 %v3706
  %3726 = vmatprep.subr.bf16.mxu0 0
  %3727 = vmatpush1.bf16.msra.mxu0 %v3707
  %3728 = vmatprep.subr.bf16.mxu0 0
  %3729 = vmatpush1.bf16.msra.mxu0 %v3708
  %3730 = vmatprep.subr.bf16.mxu0 0
  %3731 = vmatpush1.bf16.msra.mxu0 %v3709
  %3732 = vmatprep.subr.bf16.mxu0 0
  %3733 = vmatpush1.bf16.msra.mxu0 %v3710
  %3734 = vmatprep.subr.bf16.mxu0 0
  %3735 = vmatpush1.bf16.msra.mxu0 %v3711
  %3736 = vmatprep.subr.bf16.mxu0 0
  %3737 = vmatpush1.bf16.msra.mxu0 0
  %3738 = vmatprep.subr.bf16.mxu0 0
  %3739 = vmatpush1.bf16.msra.mxu0 0
  %3740 = vmatprep.subr.bf16.mxu0 0
  %3741 = vmatpush1.bf16.msra.mxu0 0
  %3742 = vmatprep.subr.bf16.mxu0 0
  %3743 = vmatpush1.bf16.msra.mxu0 0
  %3744 = vmatprep.subr.bf16.mxu0 0
  %3745 = vmatpush1.bf16.msra.mxu0 0
  %3746 = vmatprep.subr.bf16.mxu0 0
  %3747 = vmatpush1.bf16.msra.mxu0 0
  %3748 = vmatprep.subr.bf16.mxu0 0
  %3749 = vmatpush1.bf16.msra.mxu0 0
  %3750 = vmatprep.subr.bf16.mxu0 0
  %3751 = vmatpush1.bf16.msra.mxu0 0
  %3752 = vmatprep.mubr.bf16.mxu0 0
  %3753 = vmatmul.mubr.bf16.gmra.mrb[0].mxu0 %v3654
  %v3754 = vpop.f32.mrb[0].mxu0
  %v3755 = vadd.f32 0.0, %v3754
  %v3756 = vpop.f32.mrb[0].mxu0
  %v3757 = vpop.f32.mrb[0].mxu0
  %v3758 = vpop.f32.mrb[0].mxu0
  %3759 = vdwg.mxu0
  %v3760 = vadd.f32 %v3653, %v3755
  %v3761 = vpack.c.bf16 %v3335, %v3335
  %s3762 = scalar_lea.vmem %s5, 256
  %v3763 = vld [vmem:[%s3762] sm:$0xf]
  %v3764 = vld [vmem:[%s3762 + $0x4] sm:$0xf]
  %v3765 = vld [vmem:[%s3762 + $0x8] sm:$0xf]
  %v3766 = vld [vmem:[%s3762 + $0xc] sm:$0xf]
  %v3767 = vld [vmem:[%s3762 + $0x10] sm:$0xf]
  %v3768 = vld [vmem:[%s3762 + $0x14] sm:$0xf]
  %v3769 = vld [vmem:[%s3762 + $0x18] sm:$0xf]
  %v3770 = vld [vmem:[%s3762 + $0x1c] sm:$0xf]
  %v3771 = vld [vmem:[%s3762 + $0x20] sm:$0xf]
  %v3772 = vld [vmem:[%s3762 + $0x24] sm:$0xf]
  %v3773 = vld [vmem:[%s3762 + $0x28] sm:$0xf]
  %v3774 = vld [vmem:[%s3762 + $0x2c] sm:$0xf]
  %v3775 = vld [vmem:[%s3762 + $0x30] sm:$0xf]
  %v3776 = vld [vmem:[%s3762 + $0x34] sm:$0xf]
  %v3777 = vld [vmem:[%s3762 + $0x38] sm:$0xf]
  %v3778 = vld [vmem:[%s3762 + $0x3c] sm:$0xf]
  %v3795 = vunpack.c.l.b16 %v3763
  %v3796 = vunpack.c.l.b16 %v3764
  %v3797 = vunpack.c.l.b16 %v3765
  %v3798 = vunpack.c.l.b16 %v3766
  %v3799 = vunpack.c.l.b16 %v3767
  %v3800 = vunpack.c.l.b16 %v3768
  %v3801 = vunpack.c.l.b16 %v3769
  %v3802 = vunpack.c.l.b16 %v3770
  %v3803 = vunpack.c.l.b16 %v3771
  %v3804 = vunpack.c.l.b16 %v3772
  %v3805 = vunpack.c.l.b16 %v3773
  %v3806 = vunpack.c.l.b16 %v3774
  %v3807 = vunpack.c.l.b16 %v3775
  %v3808 = vunpack.c.l.b16 %v3776
  %v3809 = vunpack.c.l.b16 %v3777
  %v3810 = vunpack.c.l.b16 %v3778
  %v3811 = vpack.c.b16 %v3796, %v3795
  %v3812 = vpack.c.b16 %v3798, %v3797
  %v3813 = vpack.c.b16 %v3800, %v3799
  %v3814 = vpack.c.b16 %v3802, %v3801
  %v3815 = vpack.c.b16 %v3804, %v3803
  %v3816 = vpack.c.b16 %v3806, %v3805
  %v3817 = vpack.c.b16 %v3808, %v3807
  %v3818 = vpack.c.b16 %v3810, %v3809
  %3827 = vmatprep.subr.bf16.mxu0 0
  %3828 = vmatpush1.bf16.msra.mxu0 %v3811
  %3829 = vmatprep.subr.bf16.mxu0 0
  %3830 = vmatpush1.bf16.msra.mxu0 %v3812
  %3831 = vmatprep.subr.bf16.mxu0 0
  %3832 = vmatpush1.bf16.msra.mxu0 %v3813
  %3833 = vmatprep.subr.bf16.mxu0 0
  %3834 = vmatpush1.bf16.msra.mxu0 %v3814
  %3835 = vmatprep.subr.bf16.mxu0 0
  %3836 = vmatpush1.bf16.msra.mxu0 %v3815
  %3837 = vmatprep.subr.bf16.mxu0 0
  %3838 = vmatpush1.bf16.msra.mxu0 %v3816
  %3839 = vmatprep.subr.bf16.mxu0 0
  %3840 = vmatpush1.bf16.msra.mxu0 %v3817
  %3841 = vmatprep.subr.bf16.mxu0 0
  %3842 = vmatpush1.bf16.msra.mxu0 %v3818
  %3843 = vmatprep.subr.bf16.mxu0 0
  %3844 = vmatpush1.bf16.msra.mxu0 0
  %3845 = vmatprep.subr.bf16.mxu0 0
  %3846 = vmatpush1.bf16.msra.mxu0 0
  %3847 = vmatprep.subr.bf16.mxu0 0
  %3848 = vmatpush1.bf16.msra.mxu0 0
  %3849 = vmatprep.subr.bf16.mxu0 0
  %3850 = vmatpush1.bf16.msra.mxu0 0
  %3851 = vmatprep.subr.bf16.mxu0 0
  %3852 = vmatpush1.bf16.msra.mxu0 0
  %3853 = vmatprep.subr.bf16.mxu0 0
  %3854 = vmatpush1.bf16.msra.mxu0 0
  %3855 = vmatprep.subr.bf16.mxu0 0
  %3856 = vmatpush1.bf16.msra.mxu0 0
  %3857 = vmatprep.subr.bf16.mxu0 0
  %3858 = vmatpush1.bf16.msra.mxu0 0
  %3859 = vmatprep.mubr.bf16.mxu0 0
  %3860 = vmatmul.mubr.bf16.gmra.mrb[0].mxu0 %v3761
  %v3861 = vpop.f32.mrb[0].mxu0
  %v3862 = vadd.f32 0.0, %v3861
  %v3863 = vpop.f32.mrb[0].mxu0
  %v3864 = vpop.f32.mrb[0].mxu0
  %v3865 = vpop.f32.mrb[0].mxu0
  %3866 = vdwg.mxu0
  %v3867 = vadd.f32 %v3760, %v3862
  %v3868 = vld [vmem:[%s6] sm:$0x1]
  %v3870 = vlaneseq
  %v3871 = vshrl.u32 %v3870, 7
  %v3872 = vsub.s32 0, %v3871
  %v3873 = vrot.slane %v3868, %v3872
  %v3875 = vadd.f32 %v3867, %v3873
  %v3876 = vmax.f32 %v3875, 0.0
  %v3877 = vpack.c.bf16 %v3876, %v3876
  %v3878 = vld [vmem:[%s7] sm:$0xf]
  %v3879 = vld [vmem:[%s7 + $0x4] sm:$0xf]
  %v3880 = vld [vmem:[%s7 + $0x8] sm:$0xf]
  %v3881 = vld [vmem:[%s7 + $0xc] sm:$0xf]
  %v3882 = vld [vmem:[%s7 + $0x10] sm:$0xf]
  %v3883 = vld [vmem:[%s7 + $0x14] sm:$0xf]
  %v3884 = vld [vmem:[%s7 + $0x18] sm:$0xf]
  %v3885 = vld [vmem:[%s7 + $0x1c] sm:$0xf]
  %v3886 = vld [vmem:[%s7 + $0x20] sm:$0xf]
  %v3887 = vld [vmem:[%s7 + $0x24] sm:$0xf]
  %v3888 = vld [vmem:[%s7 + $0x28] sm:$0xf]
  %v3889 = vld [vmem:[%s7 + $0x2c] sm:$0xf]
  %v3890 = vld [vmem:[%s7 + $0x30] sm:$0xf]
  %v3891 = vld [vmem:[%s7 + $0x34] sm:$0xf]
  %v3892 = vld [vmem:[%s7 + $0x38] sm:$0xf]
  %v3893 = vld [vmem:[%s7 + $0x3c] sm:$0xf]
  %v3894 = vld [vmem:[%s8] sm:$0x1]
  %v3896 = vlaneseq
  %v3897 = vshrl.u32 %v3896, 7
  %v3898 = vsub.s32 0, %v3897
  %v3899 = vrot.slane %v3894, %v3898
  %v3917 = vunpack.c.l.b16 %v3878
  %v3918 = vunpack.c.l.b16 %v3879
  %v3919 = vunpack.c.l.b16 %v3880
  %v3920 = vunpack.c.l.b16 %v3881
  %v3921 = vunpack.c.l.b16 %v3882
  %v3922 = vunpack.c.l.b16 %v3883
  %v3923 = vunpack.c.l.b16 %v3884
  %v3924 = vunpack.c.l.b16 %v3885
  %v3925 = vunpack.c.l.b16 %v3886
  %v3926 = vunpack.c.l.b16 %v3887
  %v3927 = vunpack.c.l.b16 %v3888
  %v3928 = vunpack.c.l.b16 %v3889
  %v3929 = vunpack.c.l.b16 %v3890
  %v3930 = vunpack.c.l.b16 %v3891
  %v3931 = vunpack.c.l.b16 %v3892
  %v3932 = vunpack.c.l.b16 %v3893
  %v3933 = vpack.c.b16 %v3918, %v3917
  %v3934 = vpack.c.b16 %v3920, %v3919
  %v3935 = vpack.c.b16 %v3922, %v3921
  %v3936 = vpack.c.b16 %v3924, %v3923
  %v3937 = vpack.c.b16 %v3926, %v3925
  %v3938 = vpack.c.b16 %v3928, %v3927
  %v3939 = vpack.c.b16 %v3930, %v3929
  %v3940 = vpack.c.b16 %v3932, %v3931
  %3949 = vmatprep.subr.bf16.mxu0 0
  %3950 = vmatpush1.bf16.msra.mxu0 %v3933
  %3951 = vmatprep.subr.bf16.mxu0 0
  %3952 = vmatpush1.bf16.msra.mxu0 %v3934
  %3953 = vmatprep.subr.bf16.mxu0 0
  %3954 = vmatpush1.bf16.msra.mxu0 %v3935
  %3955 = vmatprep.subr.bf16.mxu0 0
  %3956 = vmatpush1.bf16.msra.mxu0 %v3936
  %3957 = vmatprep.subr.bf16.mxu0 0
  %3958 = vmatpush1.bf16.msra.mxu0 %v3937
  %3959 = vmatprep.subr.bf16.mxu0 0
  %3960 = vmatpush1.bf16.msra.mxu0 %v3938
  %3961 = vmatprep.subr.bf16.mxu0 0
  %3962 = vmatpush1.bf16.msra.mxu0 %v3939
  %3963 = vmatprep.subr.bf16.mxu0 0
  %3964 = vmatpush1.bf16.msra.mxu0 %v3940
  %3965 = vmatprep.subr.bf16.mxu0 0
  %3966 = vmatpush1.bf16.msra.mxu0 0
  %3967 = vmatprep.subr.bf16.mxu0 0
  %3968 = vmatpush1.bf16.msra.mxu0 0
  %3969 = vmatprep.subr.bf16.mxu0 0
  %3970 = vmatpush1.bf16.msra.mxu0 0
  %3971 = vmatprep.subr.bf16.mxu0 0
  %3972 = vmatpush1.bf16.msra.mxu0 0
  %3973 = vmatprep.subr.bf16.mxu0 0
  %3974 = vmatpush1.bf16.msra.mxu0 0
  %3975 = vmatprep.subr.bf16.mxu0 0
  %3976 = vmatpush1.bf16.msra.mxu0 0
  %3977 = vmatprep.subr.bf16.mxu0 0
  %3978 = vmatpush1.bf16.msra.mxu0 0
  %3979 = vmatprep.subr.bf16.mxu0 0
  %3980 = vmatpush1.bf16.msra.mxu0 0
  %3981 = vmatprep.mubr.bf16.mxu0 0
  %3982 = vmatmul.mubr.bf16.gmra.mrb[0].mxu0 %v3877
  %v3983 = vpop.f32.mrb[0].mxu0
  %v3984 = vadd.f32 %v3899, %v3983
  %v3985 = vpop.f32.mrb[0].mxu0
  %v3986 = vpop.f32.mrb[0].mxu0
  %v3987 = vpop.f32.mrb[0].mxu0
  %3988 = vdwg.mxu0
  %v3989 = vmax.f32 %v3984, 0.0
  %v3990 = vpack.c.bf16 %v3989, %v3989
  %v3991 = vld [vmem:[%s9] sm:$0xf]
  %v3992 = vld [vmem:[%s9 + $0x4] sm:$0xf]
  %v3993 = vld [vmem:[%s9 + $0x8] sm:$0xf]
  %v3994 = vld [vmem:[%s9 + $0xc] sm:$0xf]
  %v3995 = vld [vmem:[%s9 + $0x10] sm:$0xf]
  %v3996 = vld [vmem:[%s9 + $0x14] sm:$0xf]
  %v3997 = vld [vmem:[%s9 + $0x18] sm:$0xf]
  %v3998 = vld [vmem:[%s9 + $0x1c] sm:$0xf]
  %v3999 = vld [vmem:[%s9 + $0x20] sm:$0xf]
  %v4000 = vld [vmem:[%s9 + $0x24] sm:$0xf]
  %v4001 = vld [vmem:[%s9 + $0x28] sm:$0xf]
  %v4002 = vld [vmem:[%s9 + $0x2c] sm:$0xf]
  %v4003 = vld [vmem:[%s9 + $0x30] sm:$0xf]
  %v4004 = vld [vmem:[%s9 + $0x34] sm:$0xf]
  %v4005 = vld [vmem:[%s9 + $0x38] sm:$0xf]
  %v4006 = vld [vmem:[%s9 + $0x3c] sm:$0xf]
  %v4007 = vld [vmem:[%s10] sm:$0x1]
  %v4009 = vlaneseq
  %v4010 = vshrl.u32 %v4009, 7
  %v4011 = vsub.s32 0, %v4010
  %v4012 = vrot.slane %v4007, %v4011
  %v4030 = vunpack.c.l.b16 %v3991
  %v4031 = vunpack.c.l.b16 %v3992
  %v4032 = vunpack.c.l.b16 %v3993
  %v4033 = vunpack.c.l.b16 %v3994
  %v4034 = vunpack.c.l.b16 %v3995
  %v4035 = vunpack.c.l.b16 %v3996
  %v4036 = vunpack.c.l.b16 %v3997
  %v4037 = vunpack.c.l.b16 %v3998
  %v4038 = vunpack.c.l.b16 %v3999
  %v4039 = vunpack.c.l.b16 %v4000
  %v4040 = vunpack.c.l.b16 %v4001
  %v4041 = vunpack.c.l.b16 %v4002
  %v4042 = vunpack.c.l.b16 %v4003
  %v4043 = vunpack.c.l.b16 %v4004
  %v4044 = vunpack.c.l.b16 %v4005
  %v4045 = vunpack.c.l.b16 %v4006
  %v4046 = vpack.c.b16 %v4031, %v4030
  %v4047 = vpack.c.b16 %v4033, %v4032
  %v4048 = vpack.c.b16 %v4035, %v4034
  %v4049 = vpack.c.b16 %v4037, %v4036
  %v4050 = vpack.c.b16 %v4039, %v4038
  %v4051 = vpack.c.b16 %v4041, %v4040
  %v4052 = vpack.c.b16 %v4043, %v4042
  %v4053 = vpack.c.b16 %v4045, %v4044
  %4062 = vmatprep.subr.bf16.mxu0 0
  %4063 = vmatpush1.bf16.msra.mxu0 %v4046
  %4064 = vmatprep.subr.bf16.mxu0 0
  %4065 = vmatpush1.bf16.msra.mxu0 %v4047
  %4066 = vmatprep.subr.bf16.mxu0 0
  %4067 = vmatpush1.bf16.msra.mxu0 %v4048
  %4068 = vmatprep.subr.bf16.mxu0 0
  %4069 = vmatpush1.bf16.msra.mxu0 %v4049
  %4070 = vmatprep.subr.bf16.mxu0 0
  %4071 = vmatpush1.bf16.msra.mxu0 %v4050
  %4072 = vmatprep.subr.bf16.mxu0 0
  %4073 = vmatpush1.bf16.msra.mxu0 %v4051
  %4074 = vmatprep.subr.bf16.mxu0 0
  %4075 = vmatpush1.bf16.msra.mxu0 %v4052
  %4076 = vmatprep.subr.bf16.mxu0 0
  %4077 = vmatpush1.bf16.msra.mxu0 %v4053
  %4078 = vmatprep.subr.bf16.mxu0 0
  %4079 = vmatpush1.bf16.msra.mxu0 0
  %4080 = vmatprep.subr.bf16.mxu0 0
  %4081 = vmatpush1.bf16.msra.mxu0 0
  %4082 = vmatprep.subr.bf16.mxu0 0
  %4083 = vmatpush1.bf16.msra.mxu0 0
  %4084 = vmatprep.subr.bf16.mxu0 0
  %4085 = vmatpush1.bf16.msra.mxu0 0
  %4086 = vmatprep.subr.bf16.mxu0 0
  %4087 = vmatpush1.bf16.msra.mxu0 0
  %4088 = vmatprep.subr.bf16.mxu0 0
  %4089 = vmatpush1.bf16.msra.mxu0 0
  %4090 = vmatprep.subr.bf16.mxu0 0
  %4091 = vmatpush1.bf16.msra.mxu0 0
  %4092 = vmatprep.subr.bf16.mxu0 0
  %4093 = vmatpush1.bf16.msra.mxu0 0
  %4094 = vmatprep.mubr.bf16.mxu0 0
  %4095 = vmatmul.mubr.bf16.gmra.mrb[0].mxu0 %v3990
  %v4096 = vpop.f32.mrb[0].mxu0
  %v4097 = vadd.f32 %v4012, %v4096
  %v4098 = vpop.f32.mrb[0].mxu0
  %v4099 = vpop.f32.mrb[0].mxu0
  %v4100 = vpop.f32.mrb[0].mxu0
  %4101 = vdwg.mxu0
  %4102 = vst [vmem:[%s11] sm:$0xff] %v4097
  // Predicated region
  $region46: #{net_forward.1} parent=0 // pred_check
    _
  $region47: #{net_forward.1} parent=0 // pred_check_branch
    %4104 = sbr.rel (0) target = $region49
  $region48: #{net_forward.1} parent=0 // pred_region
    _
  $region49: #{net_forward.1} parent=0 // pred_fallthru
    _
  // Predicated region
  $region50: #{net_forward.1} parent=0 // pred_check
    _
  $region51: #{net_forward.1} parent=0 // pred_check_branch
    %4106 = sbr.rel (0) target = $region53
  $region52: #{net_forward.1} parent=0 // pred_region
    _
  $region53: #{net_forward.1} parent=0 // pred_fallthru
    _

</llo_original>
